<compile_context>
chip_gen: v5e
topology: v5e:2x2
jax: 0.10.0
libtpu: 0.0.40
codegen_flags: <defaults>
</compile_context>

<pallas_src>
import functools

import jax
import jax.numpy as jnp
from jax import lax
from jax.experimental import pallas as pl
from jax.experimental.pallas import tpu as pltpu

BN_EPS = 1e-5
LANE = 128                      # pad all channel dims to a multiple of this


def _pad_to_lane(c):
    return ((c + LANE - 1) // LANE) * LANE


def _choose_row_tile(rows, width, mult=1, target_elems=2048):
    """Largest row tile dividing `rows`, multiple of `mult`, ~target_elems
    output rows*cols per tile (big matmul M dim, few grid steps).  Widths that
    are multiples of 8 keep the in-kernel reshapes copy-free."""
    assert rows % mult == 0
    target = max(mult, target_elems // max(width, 1))
    best = mult
    for tr in range(mult, rows + 1, mult):
        if rows % tr == 0 and tr <= target:
            best = tr
    return best


@functools.lru_cache(maxsize=None)
def _vmem_limit_bytes():
    """Generation-aware scoped-VMEM budget (96 MiB on 128-MiB parts, 48 MiB on
    v7x's 64 MiB)."""
    try:
        cap = int(pltpu.get_tpu_info().vmem_capacity_bytes)
    except Exception:
        cap = 64 * 1024 * 1024
    return min(int(cap * 3 // 4), 100 * 1024 * 1024)


def _compiler_params():
    return pltpu.CompilerParams(
        dimension_semantics=("parallel", "parallel"),
        vmem_limit_bytes=_vmem_limit_bytes())


@functools.lru_cache(maxsize=None)
def _buffered_one_ok():
    """Probe whether pipeline_mode=pl.Buffered(1) is supported AND correct for
    an input block that is resident across the inner grid axis."""
    if not hasattr(pl, "Buffered"):
        return False

    def _k(x_ref, o_ref):
        j = pl.program_id(1)
        o_ref[...] = x_ref[:, pl.ds(j * 128, 128)] * 2.0

    try:
        x = jnp.arange(16 * 256, dtype=jnp.float32).reshape(16, 256)
        y = pl.pallas_call(
            _k,
            out_shape=jax.ShapeDtypeStruct((16, 256), jnp.float32),
            grid=(2, 2),
            in_specs=[pl.BlockSpec((8, 256), lambda i, j: (i, 0),
                                   pipeline_mode=pl.Buffered(1))],
            out_specs=pl.BlockSpec((8, 128), lambda i, j: (i, j)),
        )(x)
        return bool(jnp.all(y == 2.0 * x))
    except Exception:
        return False


def _resident_spec(block_shape):
    """BlockSpec for the whole-(padded)-image input: its block index only
    changes with the batch axis, so single-buffer it when supported."""
    index_map = lambda b, r: (b, 0, 0, 0)
    if _buffered_one_ok():
        return pl.BlockSpec(block_shape, index_map, pipeline_mode=pl.Buffered(1))
    return pl.BlockSpec(block_shape, index_map)


# ---------------------------------------------------------------------------
# Pallas kernels
# ---------------------------------------------------------------------------
def _conv_kernel(x_ref, w_ref, b_ref, o_ref, *, ksize, relu):
    """Fused KxK stride-1 conv + folded-BN bias (+ ReLU).
    Column taps are concatenated along the contraction dim -> ksize matmuls.

    x_ref : (1, Hx, Wx, Cx) bf16 whole (padded) image, resident across r tiles
    w_ref : (ksize, ksize*Cx, Co) bf16, BN scale folded, column taps packed
    b_ref : (1, Co) f32
    o_ref : (1, TR, Wo, Co) bf16
    """
    _, TR, Wo, Co = o_ref.shape
    Cx = x_ref.shape[-1]
    r = pl.program_id(1)
    row0 = pl.multiple_of(r * TR, TR)

    acc = None
    for di in range(ksize):
        xs = x_ref[0, pl.ds(row0 + di, TR), :, :]                 # (TR, Wx, Cx)
        xcat = jnp.concatenate([xs[:, dj:dj + Wo, :] for dj in range(ksize)],
                               axis=-1)                           # (TR, Wo, K*Cx)
        part = jnp.dot(xcat.reshape(TR * Wo, ksize * Cx), w_ref[di],
                       preferred_element_type=jnp.float32)
        acc = part if acc is None else acc + part

    y = acc + b_ref[...]
    if relu:
        y = jnp.maximum(y, 0.0)
    o_ref[0] = y.reshape(TR, Wo, Co).astype(o_ref.dtype)


def _basic_block_kernel(x_ref, w1_ref, b1_ref, w2_ref, b2_ref, o_ref, h_ref, *, H):
    """Whole BasicBlock fused: conv3x3+BN+ReLU -> conv3x3+BN (+x) -> ReLU.
    The intermediate activation lives only in the VMEM scratch h_ref.

    x_ref : (1, H+4, W+2, C) bf16 image with 2-row / 1-col zero halo
    w*_ref: (3, 3*C, C) bf16 column-tap-concatenated, BN folded
    b*_ref: (1, C) f32
    o_ref : (1, TR, W, C) bf16
    h_ref : VMEM scratch (TR+2, W+2, C) bf16 (conv1 output + conv2 halo/pad)
    """
    _, TR, W, C = o_ref.shape
    r = pl.program_id(1)
    row0 = pl.multiple_of(r * TR, TR)

    # ---- conv1 + BN + ReLU over TR+2 rows (one halo row each side)
    acc = None
    for di in range(3):
        xs = x_ref[0, pl.ds(row0 + di, TR + 2), :, :]             # (TR+2, W+2, C)
        xcat = jnp.concatenate([xs[:, dj:dj + W, :] for dj in range(3)], axis=-1)
        part = jnp.dot(xcat.reshape((TR + 2) * W, 3 * C), w1_ref[di],
                       preferred_element_type=jnp.float32)
        acc = part if acc is None else acc + part
    h = jnp.maximum(acc + b1_ref[...], 0.0).reshape(TR + 2, W, C)

    # Stash h in VMEM with conv2's zero column padding (never touches HBM).
    zcol = jnp.zeros((TR + 2, 1, C), jnp.float32)
    h_ref[...] = jnp.concatenate([zcol, h, zcol], axis=1).astype(jnp.bfloat16)

    # Halo rows that fall outside the image are conv2's zero padding, not h.
    @pl.when(row0 == 0)
    def _():
        h_ref[pl.ds(0, 1), :, :] = jnp.zeros((1, W + 2, C), jnp.bfloat16)

    @pl.when(row0 + TR == H)
    def _():
        h_ref[pl.ds(TR + 1, 1), :, :] = jnp.zeros((1, W + 2, C), jnp.bfloat16)

    # ---- conv2 + BN + residual + ReLU on the output row tile
    acc2 = None
    for di in range(3):
        hs = h_ref[pl.ds(di, TR), :, :]                           # (TR, W+2, C)
        hcat = jnp.concatenate([hs[:, dj:dj + W, :] for dj in range(3)], axis=-1)
        part = jnp.dot(hcat.reshape(TR * W, 3 * C), w2_ref[di],
                       preferred_element_type=jnp.float32)
        acc2 = part if acc2 is None else acc2 + part

    res = x_ref[0, pl.ds(row0 + 2, TR), pl.ds(1, W), :].astype(jnp.float32)
    y = acc2 + b2_ref[...] + res.reshape(TR * W, C)
    o_ref[0] = jnp.maximum(y, 0.0).reshape(TR, W, C).astype(o_ref.dtype)


def _fuse_kernel(*refs, kinds):
    """relu(sum of branch terms).  'id' terms arrive at full resolution (bf16);
    'up' terms arrive at low resolution and get their 1x1 conv (BN folded) and
    full 2-D nearest upsample applied in-register (f32, no HBM intermediate)."""
    o_ref = refs[-1]
    _, TR, Wo, Co = o_ref.shape
    acc = None
    idx = 0
    for kind, f in kinds:
        if kind == "id":
            t = refs[idx][0].astype(jnp.float32)
            idx += 1
        else:  # "up"
            x_ref, w_ref, b_ref = refs[idx], refs[idx + 1], refs[idx + 2]
            idx += 3
            trf, wf = TR // f, Wo // f
            xl = x_ref[0].reshape(trf * wf, x_ref.shape[-1])
            z = jnp.dot(xl, w_ref[...], preferred_element_type=jnp.float32)
            z = (z + b_ref[...]).reshape(trf, wf, Co)
            # TODO(synk): replace with a broadcast-add into a (trf,f,wf,f,Co)
            # accumulator view to avoid materializing the repeated tile.
            z = jnp.repeat(z, f, axis=1)        # nearest upsample, width
            t = jnp.repeat(z, f, axis=0)        # nearest upsample, rows
        acc = t if acc is None else acc + t
    o_ref[0] = jnp.maximum(acc, 0.0).astype(o_ref.dtype)


# ---------------------------------------------------------------------------
# Kernel wrappers
# ---------------------------------------------------------------------------
def conv_bn_act(x, p, relu):
    """Standalone fused Conv+BN(+ReLU) for the stride-2 fuse paths.
    x: (N,H,W,Cp) bf16 with lane-padded channels."""
    assert p["ksize"] in (2, 3), "1x1 convs are folded into the fuse kernel"
    N, H, W, _ = x.shape
    if p["s2d"]:
        assert H % 2 == 0 and W % 2 == 0
        # 3x3 stride-2 conv == 2x2 stride-1 conv over space-to-depth(pad(x)).
        xp = jnp.pad(x, ((0, 0), (1, 1), (1, 1), (0, 0)))
        Hh, Wh = (H + 2) // 2, (W + 2) // 2
        xp = xp.reshape(N, Hh, 2, Wh, 2, -1).transpose(0, 1, 3, 2, 4, 5)
        xp = xp.reshape(N, Hh, Wh, -1)
        Ho, Wo, ks = H // 2, W // 2, 2
    else:
        xp = jnp.pad(x, ((0, 0), (1, 1), (1, 1), (0, 0)))
        Ho, Wo, ks = H, W, 3

    Co = p["bias"].shape[-1]
    TR = _choose_row_tile(Ho, Wo)
    grid = (N, Ho // TR)
    kern = functools.partial(_conv_kernel, ksize=ks, relu=relu)
    return pl.pallas_call(
        kern,
        out_shape=jax.ShapeDtypeStruct((N, Ho, Wo, Co), jnp.bfloat16),
        grid=grid,
        in_specs=[
            _resident_spec((1,) + xp.shape[1:]),
            pl.BlockSpec(p["w"].shape, lambda b, r: (0, 0, 0)),
            pl.BlockSpec(p["bias"].shape, lambda b, r: (0, 0)),
        ],
        out_specs=pl.BlockSpec((1, TR, Wo, Co), lambda b, r: (b, r, 0, 0)),
        compiler_params=_compiler_params(),
    )(xp, p["w"], p["bias"])


def basic_block(x, blk):
    """Fused BasicBlock as one pallas_call (intermediate stays in VMEM)."""
    N, H, W, C = x.shape
    xp = jnp.pad(x, ((0, 0), (2, 2), (1, 1), (0, 0)))   # bf16, 2-row halo
    TR = _choose_row_tile(H, W)
    grid = (N, H // TR)
    kern = functools.partial(_basic_block_kernel, H=H)
    return pl.pallas_call(
        kern,
        out_shape=jax.ShapeDtypeStruct((N, H, W, C), jnp.bfloat16),
        grid=grid,
        in_specs=[
            _resident_spec((1, H + 4, W + 2, C)),
            pl.BlockSpec(blk["w1"].shape, lambda b, r: (0, 0, 0)),
            pl.BlockSpec(blk["b1"].shape, lambda b, r: (0, 0)),
            pl.BlockSpec(blk["w2"].shape, lambda b, r: (0, 0, 0)),
            pl.BlockSpec(blk["b2"].shape, lambda b, r: (0, 0)),
        ],
        out_specs=pl.BlockSpec((1, TR, W, C), lambda b, r: (b, r, 0, 0)),
        scratch_shapes=[pltpu.VMEM((TR + 2, W + 2, C), jnp.bfloat16)],
        compiler_params=_compiler_params(),
    )(xp, blk["w1"], blk["b1"], blk["w2"], blk["b2"])


def fuse_sum_relu(terms):
    """terms: list of ("id", x_full) or ("up", x_low, w, bias, f).
    One kernel per output branch: relu(sum), with the 1x1 conv + nearest 2-D
    upsample of the low-res terms folded in."""
    full = [t[1] for t in terms if t[0] == "id"]
    N, Ho, Wo, Cp = full[0].shape
    fmax = max([t[4] for t in terms if t[0] == "up"] + [1])
    TR = _choose_row_tile(Ho, Wo, mult=fmax)
    grid = (N, Ho // TR)

    args, in_specs, kinds = [], [], []
    for t in terms:
        if t[0] == "id":
            args.append(t[1])
            in_specs.append(pl.BlockSpec((1, TR, Wo, Cp), lambda b, r: (b, r, 0, 0)))
            kinds.append(("id", 1))
        else:
            _, x, w, bias, f = t
            args += [x, w, bias]
            in_specs += [
                pl.BlockSpec((1, TR // f, Wo // f, x.shape[-1]),
                             lambda b, r: (b, r, 0, 0)),
                pl.BlockSpec(w.shape, lambda b, r: (0, 0)),
                pl.BlockSpec(bias.shape, lambda b, r: (0, 0)),
            ]
            kinds.append(("up", f))

    kern = functools.partial(_fuse_kernel, kinds=tuple(kinds))
    return pl.pallas_call(
        kern,
        out_shape=jax.ShapeDtypeStruct((N, Ho, Wo, Cp), jnp.bfloat16),
        grid=grid,
        in_specs=in_specs,
        out_specs=pl.BlockSpec((1, TR, Wo, Cp), lambda b, r: (b, r, 0, 0)),
        compiler_params=_compiler_params(),
    )(*args)


# ---------------------------------------------------------------------------
# Parameters (deterministic synthetic init, BN folded, channels lane-padded)
# ---------------------------------------------------------------------------
def init_conv_bn(key, cin, cout, k, stride=1):
    cin_p, cout_p = _pad_to_lane(cin), _pad_to_lane(cout)
    kw, kg, kb, km, kv = jax.random.split(key, 5)
    w = jax.random.normal(kw, (k, k, cin, cout), jnp.float32) / float(k * k * cin) ** 0.5
    gamma = 1.0 + 0.1 * jax.random.normal(kg, (cout,), jnp.float32)
    beta = 0.1 * jax.random.normal(kb, (cout,), jnp.float32)
    mean = 0.1 * jax.random.normal(km, (cout,), jnp.float32)
    var = 1.0 + 0.1 * jax.random.uniform(kv, (cout,), jnp.float32)
    scale = gamma / jnp.sqrt(var + BN_EPS)
    bias = beta - mean * scale

    wf = w * scale                                   # fold BN scale into weights
    wp = jnp.zeros((k, k, cin_p, cout_p), jnp.float32)
    wp = wp.at[:, :, :cin, :cout].set(wf).astype(jnp.bfloat16)
    bp = jnp.zeros((1, cout_p), jnp.float32).at[0, :cout].set(bias)
    ref_w = wp.astype(jnp.float32)                   # bf16-exact, for the reference

    if stride == 2 and k == 3:
        # Remap 3x3/s2 taps into a 2x2 kernel over space-to-depth phases,
        # then concatenate the 2 column taps along the contraction dim.
        w2 = jnp.zeros((2, 2, 4 * cin_p, cout_p), jnp.bfloat16)
        for di in range(3):
            for dj in range(3):
                a, b = di // 2, dj // 2
                ph = (di % 2) * 2 + (dj % 2)
                w2 = w2.at[a, b, ph * cin_p:(ph + 1) * cin_p, :].set(wp[di, dj])
        w_cat = jnp.concatenate([w2[:, 0], w2[:, 1]], axis=1)   # (2, 8*cin_p, cout_p)
        return {"w": w_cat, "bias": bp, "ksize": 2, "s2d": True,
                "ref_w": ref_w, "ref_stride": 2}
    if k == 1:
        return {"w": wp[0, 0], "bias": bp, "ksize": 1, "s2d": False,
                "ref_w": ref_w, "ref_stride": 1}
    w_cat = jnp.concatenate([wp[:, dj] for dj in range(k)], axis=1)  # (k, k*cin_p, cout_p)
    return {"w": w_cat, "bias": bp, "ksize": k, "s2d": False,
            "ref_w": ref_w, "ref_stride": 1}


def init_basic_block(key, cin, cout):
    k1, k2 = jax.random.split(key)
    c1 = init_conv_bn(k1, cin, cout, 3)
    c2 = init_conv_bn(k2, cout, cout, 3)
    return {"w1": c1["w"], "b1": c1["bias"], "w2": c2["w"], "b2": c2["bias"],
            "ref1": c1, "ref2": c2}


def init_hr_module_params(key, num_branches, num_blocks, num_inchannels,
                          num_channels, multi_scale_output=True):
    # BasicBlock branches (expansion = 1); the PyTorch module only inserts a
    # 1x1 downsample when in != out*expansion, which this config never hits.
    for i in range(num_branches):
        assert num_inchannels[i] == num_channels[i]
    keys = iter(jax.random.split(key, 256))
    params = {"branches": [], "fuse": None, "channels": list(num_inchannels)}
    for i in range(num_branches):
        blocks = []
        for _ in range(num_blocks[i]):
            blocks.append(init_basic_block(next(keys), num_inchannels[i],
                                           num_channels[i]))
        params["branches"].append(blocks)
    if num_branches > 1:
        fuse = []
        for i in range(num_branches if multi_scale_output else 1):
            row = []
            for j in range(num_branches):
                if j > i:
                    row.append(init_conv_bn(next(keys), num_inchannels[j],
                                            num_inchannels[i], 1))
                elif j == i:
                    row.append(None)
                else:
                    chain = []
                    for k in range(i - j):
                        cout = num_inchannels[i] if k == i - j - 1 else num_inchannels[j]
                        chain.append(init_conv_bn(next(keys), num_inchannels[j],
                                                  cout, 3, stride=2))
                    row.append(chain)
            fuse.append(row)
        params["fuse"] = fuse
    return params


# ---------------------------------------------------------------------------
# Forward pass (mirrors HighResolutionModule.forward)
# ---------------------------------------------------------------------------
def hr_module_forward(xs, params, multi_scale_output=True):
    """xs: list of NHWC f32 tensors with the module's true channel counts."""
    nb = len(xs)
    chans = params["channels"]
    # Lane-pad channels once and move activations to bf16; accumulation inside
    # every kernel stays f32.
    xs = [jnp.pad(x, ((0, 0), (0, 0), (0, 0), (0, _pad_to_lane(c) - c)))
          .astype(jnp.bfloat16) for x, c in zip(xs, chans)]
    for i in range(nb):
        for blk in params["branches"][i]:
            xs[i] = basic_block(xs[i], blk)
    if nb == 1:
        return [xs[0][..., :chans[0]].astype(jnp.float32)]

    outs = []
    for i in range(nb if multi_scale_output else 1):
        terms = []
        for j in range(nb):
            if j == i:
                terms.append(("id", xs[j]))
            elif j > i:
                p = params["fuse"][i][j]
                terms.append(("up", xs[j], p["w"], p["bias"], 2 ** (j - i)))
            else:
                t = xs[j]
                chain = params["fuse"][i][j]
                for k, pc in enumerate(chain):
                    t = conv_bn_act(t, pc, relu=(k != len(chain) - 1))
                terms.append(("id", t))
        outs.append(fuse_sum_relu(terms))
    return [o[..., :chans[i]].astype(jnp.float32) for i, o in enumerate(outs)]


# ---------------------------------------------------------------------------
# Pure-JAX reference (same folded weights, same bf16 activation rounding)
# ---------------------------------------------------------------------------
def _round_bf16(x):
    return x.astype(jnp.bfloat16).astype(jnp.float32)


def _conv_ref(x, p, relu, residual=None):
    s, w = p["ref_stride"], p["ref_w"]
    pad = 1 if w.shape[0] == 3 else 0
    y = lax.conv_general_dilated(
        x, w, window_strides=(s, s), padding=((pad, pad), (pad, pad)),
        dimension_numbers=("NHWC", "HWIO", "NHWC"),
        precision=lax.Precision.HIGHEST)
    y = y + p["bias"][0]
    if residual is not None:
        y = y + residual
    return jnp.maximum(y, 0.0) if relu else y


def _basic_block_ref(x, blk):
    h = _round_bf16(_conv_ref(x, blk["ref1"], relu=True))   # h kept bf16 in VMEM
    y = _conv_ref(h, blk["ref2"], relu=True, residual=x)
    return _round_bf16(y)                                    # block output stored bf16


def hr_module_forward_ref(xs, params, multi_scale_output=True):
    nb = len(xs)
    chans = params["channels"]
    xs = [_round_bf16(jnp.pad(x, ((0, 0), (0, 0), (0, 0),
                                  (0, _pad_to_lane(c) - c))))
          for x, c in zip(xs, chans)]
    for i in range(nb):
        for blk in params["branches"][i]:
            xs[i] = _basic_block_ref(xs[i], blk)
    if nb == 1:
        return [xs[0][..., :chans[0]]]
    outs = []
    for i in range(nb if multi_scale_output else 1):
        y = None
        for j in range(nb):
            if j == i:
                t = xs[j]
            elif j > i:
                f = 2 ** (j - i)
                t = _conv_ref(xs[j], params["fuse"][i][j], relu=False)  # stays f32
                t = jnp.repeat(jnp.repeat(t, f, axis=1), f, axis=2)
            else:
                chain = params["fuse"][i][j]
                t = xs[j]
                for k, pc in enumerate(chain):
                    t = _round_bf16(_conv_ref(t, pc, relu=(k != len(chain) - 1)))
            y = t if y is None else y + t
        outs.append(_round_bf16(jnp.maximum(y, 0.0)))
    return [o[..., :chans[i]] for i, o in enumerate(outs)]


# ---------------------------------------------------------------------------
if __name__ == "__main__":
    key = jax.random.PRNGKey(0)
    kx0, kx1, kp = jax.random.split(key, 3)

    # Small config: 2 branches, 1 BasicBlock each, SUM fuse, multi_scale_output.
    N = 2
    num_inchannels = [16, 32]
    num_channels = [16, 32]
    num_blocks = [1, 1]
    H0, W0 = 16, 16

    # NHWC inputs; PyTorch NCHW equivalents: x0=(2,16,16,16), x1=(2,32,8,8).
    x0 = jax.random.normal(kx0, (N, H0, W0, num_inchannels[0]), jnp.float32)
    x1 = jax.random.normal(kx1, (N, H0 // 2, W0 // 2, num_inchannels[1]), jnp.float32)

    params = init_hr_module_params(
        kp, num_branches=2, num_blocks=num_blocks,
        num_inchannels=num_inchannels, num_channels=num_channels,
        multi_scale_output=True)

    outs = jax.block_until_ready(hr_module_forward([x0, x1], params))
    refs = jax.block_until_ready(hr_module_forward_ref([x0, x1], params))

    assert outs[0].shape == (N, H0, W0, num_inchannels[0])
    assert outs[1].shape == (N, H0 // 2, W0 // 2, num_inchannels[1])
    for o, r in zip(outs, refs):
        assert bool(jnp.all(jnp.isfinite(o)))
        err = float(jnp.max(jnp.abs(o - r)))
        # Reference applies the same bf16 activation rounding as the kernels;
        # the residual error is f32 accumulation-order noise plus the odd
        # bf16 rounding-boundary flip (<= 1 ulp at the element magnitude).
        tol = 2e-2 + 1e-2 * float(jnp.max(jnp.abs(r)))
        assert err < tol, f"mismatch vs reference: max abs err {err} (tol {tol})"
    print("KERNEL_OK")
</pallas_src>

<mosaic_0001>
module attributes {stable_mosaic.version = 11 : i64} {
  func.func @_k(%arg0: i32, %arg1: i32, %arg2: memref<8x256xf32, #tpu.memory_space<vmem>>, %arg3: memref<8x128xf32, #tpu.memory_space<vmem>>) attributes {dimension_semantics = [#tpu.dimension_semantics<arbitrary>, #tpu.dimension_semantics<arbitrary>], iteration_bounds = array<i64: 2, 2>, scalar_prefetch = 0 : i64, scratch_operands = 0 : i64, tpu.core_type = #tpu.core_type<tc>, window_params = [{pipeline_mode = #tpu.pipeline_mode<synchronous>, transform_indices = @transform_0, window_bounds = array<i64: 8, 256>}, {transform_indices = @transform_1, window_bounds = array<i64: 8, 128>}]} {
    %c128_i32 = arith.constant 128 : i32
    %0 = arith.muli %arg1, %c128_i32 : i32
    %c0 = arith.constant 0 : index
    %1 = arith.index_cast %0 : i32 to index
    %2 = vector.load %arg2[%c0, %1] : memref<8x256xf32, #tpu.memory_space<vmem>>, vector<8x128xf32>
    %cst = arith.constant 2.000000e+00 : f32
    %3 = vector.broadcast %cst : f32 to vector<8x128xf32>
    %4 = arith.mulf %2, %3 : vector<8x128xf32>
    %c0_0 = arith.constant 0 : index
    %c0_1 = arith.constant 0 : index
    %5 = vector.load %arg3[%c0_0, %c0_1] : memref<8x128xf32, #tpu.memory_space<vmem>>, vector<8x128xf32>
    tpu.vector_store %arg3[%c0_0, %c0_1], %4 {strides = array<i32>} : memref<8x128xf32, #tpu.memory_space<vmem>>, vector<8x128xf32>,
    return
  }
  func.func @transform_0(%arg0: i32, %arg1: i32) -> (i32, i32) {
    %c0_i32 = arith.constant 0 : i32
    %c0_i32_0 = arith.constant 0 : i32
    return %arg0, %c0_i32 : i32, i32
  }
  func.func @transform_1(%arg0: i32, %arg1: i32) -> (i32, i32) {
    %c0_i32 = arith.constant 0 : i32
    return %arg0, %arg1 : i32, i32
  }
}

module attributes {stable_mosaic.version = 11 : i64} {
  func.func @_basic_block_kernel(%arg0: i32, %arg1: i32, %arg2: memref<1x20x18x128xbf16, #tpu.memory_space<vmem>>, %arg3: memref<3x384x128xbf16, #tpu.memory_space<vmem>>, %arg4: memref<1x128xf32, #tpu.memory_space<vmem>>, %arg5: memref<3x384x128xbf16, #tpu.memory_space<vmem>>, %arg6: memref<1x128xf32, #tpu.memory_space<vmem>>, %arg7: memref<1x16x16x128xbf16, #tpu.memory_space<vmem>>, %arg8: memref<18x18x128xbf16, #tpu.memory_space<vmem>>) attributes {dimension_semantics = [#tpu.dimension_semantics<parallel>, #tpu.dimension_semantics<parallel>], iteration_bounds = array<i64: 2, 1>, scalar_prefetch = 0 : i64, scratch_operands = 1 : i64, tpu.core_type = #tpu.core_type<tc>, window_params = [{transform_indices = @transform_0, window_bounds = array<i64: 1, 20, 18, 128>}, {pipeline_mode = #tpu.pipeline_mode<synchronous>, transform_indices = @transform_1, window_bounds = array<i64: 3, 384, 128>}, {pipeline_mode = #tpu.pipeline_mode<synchronous>, transform_indices = @transform_2, window_bounds = array<i64: 1, 128>}, {pipeline_mode = #tpu.pipeline_mode<synchronous>, transform_indices = @transform_3, window_bounds = array<i64: 3, 384, 128>}, {pipeline_mode = #tpu.pipeline_mode<synchronous>, transform_indices = @transform_4, window_bounds = array<i64: 1, 128>}, {transform_indices = @transform_5, window_bounds = array<i64: 1, 16, 16, 128>}]} {
    %c16_i32 = arith.constant 16 : i32
    %0 = arith.muli %arg1, %c16_i32 : i32
    %1 = tpu.assume_multiple %0, 16 : i32
    %c0_i32 = arith.constant 0 : i32
    %2 = arith.addi %1, %c0_i32 : i32
    %c0 = arith.constant 0 : index
    %3 = arith.index_cast %2 : i32 to index
    %c0_0 = arith.constant 0 : index
    %c0_1 = arith.constant 0 : index
    %4 = vector.load %arg2[%c0, %3, %c0_0, %c0_1] : memref<1x20x18x128xbf16, #tpu.memory_space<vmem>>, vector<1x18x18x128xbf16>
    %5 = vector.shape_cast %4 : vector<1x18x18x128xbf16> to vector<18x18x128xbf16>
    %6 = vector.extract_strided_slice %5 {offsets = [0, 0, 0], sizes = [18, 16, 128], strides = [1, 1, 1]} : vector<18x18x128xbf16> to vector<18x16x128xbf16>
    %7 = vector.extract_strided_slice %5 {offsets = [0, 1, 0], sizes = [18, 16, 128], strides = [1, 1, 1]} : vector<18x18x128xbf16> to vector<18x16x128xbf16>
    %8 = vector.extract_strided_slice %5 {offsets = [0, 2, 0], sizes = [18, 16, 128], strides = [1, 1, 1]} : vector<18x18x128xbf16> to vector<18x16x128xbf16>
    %9 = tpu.concatenate %6, %7, %8 in 2 : vector<18x16x128xbf16>, vector<18x16x128xbf16>, vector<18x16x128xbf16> -> vector<18x16x384xbf16>
    %10 = vector.shape_cast %9 : vector<18x16x384xbf16> to vector<288x384xbf16>
    %c0_2 = arith.constant 0 : index
    %c0_3 = arith.constant 0 : index
    %c0_4 = arith.constant 0 : index
    %11 = vector.load %arg3[%c0_2, %c0_3, %c0_4] : memref<3x384x128xbf16, #tpu.memory_space<vmem>>, vector<1x384x128xbf16>
    %12 = vector.shape_cast %11 : vector<1x384x128xbf16> to vector<384x128xbf16>
    %cst = arith.constant dense<0.000000e+00> : vector<288x128xf32>
    %13 = tpu.matmul %10, %12, %cst {dimension_numbers = #tpu.dot_dimension_numbers<[1], [0], [0], [1], [0, 0, 1, 1], [], []>} : vector<288x384xbf16>, vector<384x128xbf16>, vector<288x128xf32> -> vector<288x128xf32>
    %c1_i32 = arith.constant 1 : i32
    %14 = arith.addi %1, %c1_i32 : i32
    %c0_5 = arith.constant 0 : index
    %15 = arith.index_cast %14 : i32 to index
    %c0_6 = arith.constant 0 : index
    %c0_7 = arith.constant 0 : index
    %16 = vector.load %arg2[%c0_5, %15, %c0_6, %c0_7] : memref<1x20x18x128xbf16, #tpu.memory_space<vmem>>, vector<1x18x18x128xbf16>
    %17 = vector.shape_cast %16 : vector<1x18x18x128xbf16> to vector<18x18x128xbf16>
    %18 = vector.extract_strided_slice %17 {offsets = [0, 0, 0], sizes = [18, 16, 128], strides = [1, 1, 1]} : vector<18x18x128xbf16> to vector<18x16x128xbf16>
    %19 = vector.extract_strided_slice %17 {offsets = [0, 1, 0], sizes = [18, 16, 128], strides = [1, 1, 1]} : vector<18x18x128xbf16> to vector<18x16x128xbf16>
    %20 = vector.extract_strided_slice %17 {offsets = [0, 2, 0], sizes = [18, 16, 128], strides = [1, 1, 1]} : vector<18x18x128xbf16> to vector<18x16x128xbf16>
    %21 = tpu.concatenate %18, %19, %20 in 2 : vector<18x16x128xbf16>, vector<18x16x128xbf16>, vector<18x16x128xbf16> -> vector<18x16x384xbf16>
    %22 = vector.shape_cast %21 : vector<18x16x384xbf16> to vector<288x384xbf16>
    %c1 = arith.constant 1 : index
    %c0_8 = arith.constant 0 : index
    %c0_9 = arith.constant 0 : index
    %23 = vector.load %arg3[%c1, %c0_8, %c0_9] : memref<3x384x128xbf16, #tpu.memory_space<vmem>>, vector<1x384x128xbf16>
    %24 = vector.shape_cast %23 : vector<1x384x128xbf16> to vector<384x128xbf16>
    %cst_10 = arith.constant dense<0.000000e+00> : vector<288x128xf32>
    %25 = tpu.matmul %22, %24, %cst_10 {dimension_numbers = #tpu.dot_dimension_numbers<[1], [0], [0], [1], [0, 0, 1, 1], [], []>} : vector<288x384xbf16>, vector<384x128xbf16>, vector<288x128xf32> -> vector<288x128xf32>
    %26 = arith.addf %13, %25 : vector<288x128xf32>
    %c2_i32 = arith.constant 2 : i32
    %27 = arith.addi %1, %c2_i32 : i32
    %c0_11 = arith.constant 0 : index
    %28 = arith.index_cast %27 : i32 to index
    %c0_12 = arith.constant 0 : index
    %c0_13 = arith.constant 0 : index
    %29 = vector.load %arg2[%c0_11, %28, %c0_12, %c0_13] : memref<1x20x18x128xbf16, #tpu.memory_space<vmem>>, vector<1x18x18x128xbf16>
    %30 = vector.shape_cast %29 : vector<1x18x18x128xbf16> to vector<18x18x128xbf16>
    %31 = vector.extract_strided_slice %30 {offsets = [0, 0, 0], sizes = [18, 16, 128], strides = [1, 1, 1]} : vector<18x18x128xbf16> to vector<18x16x128xbf16>
    %32 = vector.extract_strided_slice %30 {offsets = [0, 1, 0], sizes = [18, 16, 128], strides = [1, 1, 1]} : vector<18x18x128xbf16> to vector<18x16x128xbf16>
    %33 = vector.extract_strided_slice %30 {offsets = [0, 2, 0], sizes = [18, 16, 128], strides = [1, 1, 1]} : vector<18x18x128xbf16> to vector<18x16x128xbf16>
    %34 = tpu.concatenate %31, %32, %33 in 2 : vector<18x16x128xbf16>, vector<18x16x128xbf16>, vector<18x16x128xbf16> -> vector<18x16x384xbf16>
    %35 = vector.shape_cast %34 : vector<18x16x384xbf16> to vector<288x384xbf16>
    %c2 = arith.constant 2 : index
    %c0_14 = arith.constant 0 : index
    %c0_15 = arith.constant 0 : index
    %36 = vector.load %arg3[%c2, %c0_14, %c0_15] : memref<3x384x128xbf16, #tpu.memory_space<vmem>>, vector<1x384x128xbf16>
    %37 = vector.shape_cast %36 : vector<1x384x128xbf16> to vector<384x128xbf16>
    %cst_16 = arith.constant dense<0.000000e+00> : vector<288x128xf32>
    %38 = tpu.matmul %35, %37, %cst_16 {dimension_numbers = #tpu.dot_dimension_numbers<[1], [0], [0], [1], [0, 0, 1, 1], [], []>} : vector<288x384xbf16>, vector<384x128xbf16>, vector<288x128xf32> -> vector<288x128xf32>
    %39 = arith.addf %26, %38 : vector<288x128xf32>
    %c0_17 = arith.constant 0 : index
    %c0_18 = arith.constant 0 : index
    %40 = vector.load %arg4[%c0_17, %c0_18] : memref<1x128xf32, #tpu.memory_space<vmem>>, vector<1x128xf32>
    %41 = vector.broadcast %40 : vector<1x128xf32> to vector<288x128xf32>
    %42 = arith.addf %39, %41 : vector<288x128xf32>
    %cst_19 = arith.constant 0.000000e+00 : f32
    %43 = vector.broadcast %cst_19 : f32 to vector<288x128xf32>
    %44 = arith.maximumf %42, %43 : vector<288x128xf32>
    %45 = vector.shape_cast %44 : vector<288x128xf32> to vector<18x16x128xf32>
    %cst_20 = arith.constant 0.000000e+00 : f32
    %46 = vector.broadcast %cst_20 : f32 to vector<18x1x128xf32>
    %47 = tpu.concatenate %46, %45, %46 in 1 : vector<18x1x128xf32>, vector<18x16x128xf32>, vector<18x1x128xf32> -> vector<18x18x128xf32>
    %48 = arith.truncf %47 : vector<18x18x128xf32> to vector<18x18x128xbf16>
    %c0_21 = arith.constant 0 : index
    %c0_22 = arith.constant 0 : index
    %c0_23 = arith.constant 0 : index
    %49 = vector.load %arg8[%c0_21, %c0_22, %c0_23] : memref<18x18x128xbf16, #tpu.memory_space<vmem>>, vector<18x18x128xbf16>
    tpu.vector_store %arg8[%c0_21, %c0_22, %c0_23], %48 {strides = array<i32>} : memref<18x18x128xbf16, #tpu.memory_space<vmem>>, vector<18x18x128xbf16>,
    %c0_i32_24 = arith.constant 0 : i32
    %50 = arith.cmpi eq, %1, %c0_i32_24 : i32
    %51 = arith.extui %50 : i1 to i32
    %c0_i32_25 = arith.constant 0 : i32
    %52 = arith.cmpi ne, %51, %c0_i32_25 : i32
    scf.if %52 {
      %cst_61 = arith.constant 0.000000e+00 : bf16
      %103 = vector.broadcast %cst_61 : bf16 to vector<1x18x128xbf16>
      %c0_62 = arith.constant 0 : index
      %c0_63 = arith.constant 0 : index
      %c0_64 = arith.constant 0 : index
      %104 = vector.load %arg8[%c0_62, %c0_63, %c0_64] : memref<18x18x128xbf16, #tpu.memory_space<vmem>>, vector<1x18x128xbf16>
      tpu.vector_store %arg8[%c0_62, %c0_63, %c0_64], %103 {strides = array<i32>} : memref<18x18x128xbf16, #tpu.memory_space<vmem>>, vector<1x18x128xbf16>,
    } else {
    }
    %c16_i32_26 = arith.constant 16 : i32
    %53 = arith.addi %1, %c16_i32_26 : i32
    %c16_i32_27 = arith.constant 16 : i32
    %54 = arith.cmpi eq, %53, %c16_i32_27 : i32
    %55 = arith.extui %54 : i1 to i32
    %c0_i32_28 = arith.constant 0 : i32
    %56 = arith.cmpi ne, %55, %c0_i32_28 : i32
    scf.if %56 {
      %cst_61 = arith.constant 0.000000e+00 : bf16
      %103 = vector.broadcast %cst_61 : bf16 to vector<1x18x128xbf16>
      %c17 = arith.constant 17 : index
      %c0_62 = arith.constant 0 : index
      %c0_63 = arith.constant 0 : index
      %104 = vector.load %arg8[%c17, %c0_62, %c0_63] : memref<18x18x128xbf16, #tpu.memory_space<vmem>>, vector<1x18x128xbf16>
      tpu.vector_store %arg8[%c17, %c0_62, %c0_63], %103 {strides = array<i32>} : memref<18x18x128xbf16, #tpu.memory_space<vmem>>, vector<1x18x128xbf16>,
    } else {
    }
    %c0_29 = arith.constant 0 : index
    %c0_30 = arith.constant 0 : index
    %c0_31 = arith.constant 0 : index
    %57 = vector.load %arg8[%c0_29, %c0_30, %c0_31] : memref<18x18x128xbf16, #tpu.memory_space<vmem>>, vector<16x18x128xbf16>
    %58 = vector.extract_strided_slice %57 {offsets = [0, 0, 0], sizes = [16, 16, 128], strides = [1, 1, 1]} : vector<16x18x128xbf16> to vector<16x16x128xbf16>
    %59 = vector.extract_strided_slice %57 {offsets = [0, 1, 0], sizes = [16, 16, 128], strides = [1, 1, 1]} : vector<16x18x128xbf16> to vector<16x16x128xbf16>
    %60 = vector.extract_strided_slice %57 {offsets = [0, 2, 0], sizes = [16, 16, 128], strides = [1, 1, 1]} : vector<16x18x128xbf16> to vector<16x16x128xbf16>
    %61 = tpu.concatenate %58, %59, %60 in 2 : vector<16x16x128xbf16>, vector<16x16x128xbf16>, vector<16x16x128xbf16> -> vector<16x16x384xbf16>
    %62 = vector.shape_cast %61 : vector<16x16x384xbf16> to vector<256x384xbf16>
    %c0_32 = arith.constant 0 : index
    %c0_33 = arith.constant 0 : index
    %c0_34 = arith.constant 0 : index
    %63 = vector.load %arg5[%c0_32, %c0_33, %c0_34] : memref<3x384x128xbf16, #tpu.memory_space<vmem>>, vector<1x384x128xbf16>
    %64 = vector.shape_cast %63 : vector<1x384x128xbf16> to vector<384x128xbf16>
    %cst_35 = arith.constant dense<0.000000e+00> : vector<256x128xf32>
    %65 = tpu.matmul %62, %64, %cst_35 {dimension_numbers = #tpu.dot_dimension_numbers<[1], [0], [0], [1], [0, 0, 1, 1], [], []>} : vector<256x384xbf16>, vector<384x128xbf16>, vector<256x128xf32> -> vector<256x128xf32>
    %c1_36 = arith.constant 1 : index
    %c0_37 = arith.constant 0 : index
    %c0_38 = arith.constant 0 : index
    %66 = vector.load %arg8[%c1_36, %c0_37, %c0_38] : memref<18x18x128xbf16, #tpu.memory_space<vmem>>, vector<16x18x128xbf16>
    %67 = vector.extract_strided_slice %66 {offsets = [0, 0, 0], sizes = [16, 16, 128], strides = [1, 1, 1]} : vector<16x18x128xbf16> to vector<16x16x128xbf16>
    %68 = vector.extract_strided_slice %66 {offsets = [0, 1, 0], sizes = [16, 16, 128], strides = [1, 1, 1]} : vector<16x18x128xbf16> to vector<16x16x128xbf16>
    %69 = vector.extract_strided_slice %66 {offsets = [0, 2, 0], sizes = [16, 16, 128], strides = [1, 1, 1]} : vector<16x18x128xbf16> to vector<16x16x128xbf16>
    %70 = tpu.concatenate %67, %68, %69 in 2 : vector<16x16x128xbf16>, vector<16x16x128xbf16>, vector<16x16x128xbf16> -> vector<16x16x384xbf16>
    %71 = vector.shape_cast %70 : vector<16x16x384xbf16> to vector<256x384xbf16>
    %c1_39 = arith.constant 1 : index
    %c0_40 = arith.constant 0 : index
    %c0_41 = arith.constant 0 : index
    %72 = vector.load %arg5[%c1_39, %c0_40, %c0_41] : memref<3x384x128xbf16, #tpu.memory_space<vmem>>, vector<1x384x128xbf16>
    %73 = vector.shape_cast %72 : vector<1x384x128xbf16> to vector<384x128xbf16>
    %cst_42 = arith.constant dense<0.000000e+00> : vector<256x128xf32>
    %74 = tpu.matmul %71, %73, %cst_42 {dimension_numbers = #tpu.dot_dimension_numbers<[1], [0], [0], [1], [0, 0, 1, 1], [], []>} : vector<256x384xbf16>, vector<384x128xbf16>, vector<256x128xf32> -> vector<256x128xf32>
    %75 = arith.addf %65, %74 : vector<256x128xf32>
    %c2_43 = arith.constant 2 : index
    %c0_44 = arith.constant 0 : index
    %c0_45 = arith.constant 0 : index
    %76 = vector.load %arg8[%c2_43, %c0_44, %c0_45] : memref<18x18x128xbf16, #tpu.memory_space<vmem>>, vector<16x18x128xbf16>
    %77 = vector.extract_strided_slice %76 {offsets = [0, 0, 0], sizes = [16, 16, 128], strides = [1, 1, 1]} : vector<16x18x128xbf16> to vector<16x16x128xbf16>
    %78 = vector.extract_strided_slice %76 {offsets = [0, 1, 0], sizes = [16, 16, 128], strides = [1, 1, 1]} : vector<16x18x128xbf16> to vector<16x16x128xbf16>
    %79 = vector.extract_strided_slice %76 {offsets = [0, 2, 0], sizes = [16, 16, 128], strides = [1, 1, 1]} : vector<16x18x128xbf16> to vector<16x16x128xbf16>
    %80 = tpu.concatenate %77, %78, %79 in 2 : vector<16x16x128xbf16>, vector<16x16x128xbf16>, vector<16x16x128xbf16> -> vector<16x16x384xbf16>
    %81 = vector.shape_cast %80 : vector<16x16x384xbf16> to vector<256x384xbf16>
    %c2_46 = arith.constant 2 : index
    %c0_47 = arith.constant 0 : index
    %c0_48 = arith.constant 0 : index
    %82 = vector.load %arg5[%c2_46, %c0_47, %c0_48] : memref<3x384x128xbf16, #tpu.memory_space<vmem>>, vector<1x384x128xbf16>
    %83 = vector.shape_cast %82 : vector<1x384x128xbf16> to vector<384x128xbf16>
    %cst_49 = arith.constant dense<0.000000e+00> : vector<256x128xf32>
    %84 = tpu.matmul %81, %83, %cst_49 {dimension_numbers = #tpu.dot_dimension_numbers<[1], [0], [0], [1], [0, 0, 1, 1], [], []>} : vector<256x384xbf16>, vector<384x128xbf16>, vector<256x128xf32> -> vector<256x128xf32>
    %85 = arith.addf %75, %84 : vector<256x128xf32>
    %c2_i32_50 = arith.constant 2 : i32
    %86 = arith.addi %1, %c2_i32_50 : i32
    %c0_51 = arith.constant 0 : index
    %87 = arith.index_cast %86 : i32 to index
    %c1_52 = arith.constant 1 : index
    %c0_53 = arith.constant 0 : index
    %88 = vector.load %arg2[%c0_51, %87, %c1_52, %c0_53] : memref<1x20x18x128xbf16, #tpu.memory_space<vmem>>, vector<1x16x16x128xbf16>
    %89 = vector.shape_cast %88 : vector<1x16x16x128xbf16> to vector<16x16x128xbf16>
    %90 = arith.extf %89 : vector<16x16x128xbf16> to vector<16x16x128xf32>
    %c0_54 = arith.constant 0 : index
    %c0_55 = arith.constant 0 : index
    %91 = vector.load %arg6[%c0_54, %c0_55] : memref<1x128xf32, #tpu.memory_space<vmem>>, vector<1x128xf32>
    %92 = vector.broadcast %91 : vector<1x128xf32> to vector<256x128xf32>
    %93 = arith.addf %85, %92 : vector<256x128xf32>
    %94 = vector.shape_cast %90 : vector<16x16x128xf32> to vector<256x128xf32>
    %95 = arith.addf %93, %94 : vector<256x128xf32>
    %cst_56 = arith.constant 0.000000e+00 : f32
    %96 = vector.broadcast %cst_56 : f32 to vector<256x128xf32>
    %97 = arith.maximumf %95, %96 : vector<256x128xf32>
    %98 = vector.shape_cast %97 : vector<256x128xf32> to vector<16x16x128xf32>
    %99 = arith.truncf %98 : vector<16x16x128xf32> to vector<16x16x128xbf16>
    %c0_57 = arith.constant 0 : index
    %c0_58 = arith.constant 0 : index
    %c0_59 = arith.constant 0 : index
    %c0_60 = arith.constant 0 : index
    %100 = vector.load %arg7[%c0_57, %c0_58, %c0_59, %c0_60] : memref<1x16x16x128xbf16, #tpu.memory_space<vmem>>, vector<1x16x16x128xbf16>
    %101 = vector.shape_cast %100 : vector<1x16x16x128xbf16> to vector<16x16x128xbf16>
    %102 = vector.shape_cast %99 : vector<16x16x128xbf16> to vector<1x16x16x128xbf16>
    tpu.vector_store %arg7[%c0_57, %c0_58, %c0_59, %c0_60], %102 {strides = array<i32>} : memref<1x16x16x128xbf16, #tpu.memory_space<vmem>>, vector<1x16x16x128xbf16>,
    return
  }
  func.func @transform_0(%arg0: i32, %arg1: i32) -> (i32, i32, i32, i32) {
    %c0_i32 = arith.constant 0 : i32
    %c0_i32_0 = arith.constant 0 : i32
    %c0_i32_1 = arith.constant 0 : i32
    %c0_i32_2 = arith.constant 0 : i32
    return %arg0, %c0_i32, %c0_i32_0, %c0_i32_1 : i32, i32, i32, i32
  }
  func.func @transform_1(%arg0: i32, %arg1: i32) -> (i32, i32, i32) {
    %c0_i32 = arith.constant 0 : i32
    %c0_i32_0 = arith.constant 0 : i32
    %c0_i32_1 = arith.constant 0 : i32
    %c0_i32_2 = arith.constant 0 : i32
    return %c0_i32, %c0_i32_0, %c0_i32_1 : i32, i32, i32
  }
  func.func @transform_2(%arg0: i32, %arg1: i32) -> (i32, i32) {
    %c0_i32 = arith.constant 0 : i32
    %c0_i32_0 = arith.constant 0 : i32
    %c0_i32_1 = arith.constant 0 : i32
    return %c0_i32, %c0_i32_0 : i32, i32
  }
  func.func @transform_3(%arg0: i32, %arg1: i32) -> (i32, i32, i32) {
    %c0_i32 = arith.constant 0 : i32
    %c0_i32_0 = arith.constant 0 : i32
    %c0_i32_1 = arith.constant 0 : i32
    %c0_i32_2 = arith.constant 0 : i32
    return %c0_i32, %c0_i32_0, %c0_i32_1 : i32, i32, i32
  }
  func.func @transform_4(%arg0: i32, %arg1: i32) -> (i32, i32) {
    %c0_i32 = arith.constant 0 : i32
    %c0_i32_0 = arith.constant 0 : i32
    %c0_i32_1 = arith.constant 0 : i32
    return %c0_i32, %c0_i32_0 : i32, i32
  }
  func.func @transform_5(%arg0: i32, %arg1: i32) -> (i32, i32, i32, i32) {
    %c0_i32 = arith.constant 0 : i32
    %c0_i32_0 = arith.constant 0 : i32
    %c0_i32_1 = arith.constant 0 : i32
    return %arg0, %arg1, %c0_i32, %c0_i32_0 : i32, i32, i32, i32
  }
}

</mosaic_0001>

<llo_original>
// kernel: tpu_custom_call.1
$region0: #{tpu_custom_call.1}
  #allocation0 [shape = 'u32[]', space=smem, size = 0x4, offset = 0x4, fixed_abs, tag = 'smem constant byte address 0x4 - core index']
  #allocation1 [shape = 'u32[72,128]{1,0:T(1,128)}', space=vmem, size = 0x9000, scoped, tag = 'internal scratch']
  %s0 = inlined_call_operand.hbm [shape: f32[16,256], index: 0, kind: input, shape index: {}]
  %s1 = inlined_call_operand.hbm [shape: f32[16,256], index: 1, kind: output, shape index: {}]
  %s2 = sld [smem:[#allocation0]]
  $region41: #{tpu_custom_call.1} parent=0
    _
  %s4 = ssub.s32 1, %s2
  %s5 = scalar_select 0, %s4, %s2
  $region1: #{tpu_custom_call.1} parent=0
    #allocation2 [shape = 'u8[8192]{0}', space=vmem, size = 0x2000, scoped, tag = 'input window, operand 0, single buffered']
    #allocation3 [shape = 's32[2]{0}', space=sflag, size = 0x8, scoped, tag = 'scoped memory for tpu_custom_call.1']
    #allocation4 [shape = 's32[2]{0}', space=sflag, size = 0x8, scoped, tag = 'scoped memory for tpu_custom_call.1']
    #allocation5 [shape = 'u8[8192]{0}', space=vmem, size = 0x2000, scoped, tag = 'output window, operand 0']
    %6 = vsyncpa [#allocation3], 0
    %7 = vsyncpa [#allocation4], 0
    %s8 = scalar_lea.sflag [#allocation4], 1
    %9 = vsyncpa %s8, 0
    loop: start=0, step=1, limit=6
    $region2: #{tpu_custom_call.1} parent=1 // loop_pre_header
      _
    $region3: #{tpu_custom_call.1} parent=1 // loop_header
      %s11 = sphi 0, %s15
      %p12 = scmp.ge.s32.totalorder %s11, 6
      %s18 = sphi 0, %s30
      %s19 = sphi 0, %s26
      %s20 = sphi 0, %s18
      %s21 = sphi 0, %s19
      %s22 = sphi 0, %s20
      %s23 = sphi 0, %s21
      %s33 = sphi 0, %s35
      %s36 = sphi 0, %s33
      %s37 = sphi 0, %s36
      %s53 = sphi 0, %s37
      %s61 = sphi 0, %s63
      %s64 = sphi 0, %s61
      %s65 = sphi 0, %s64
      %s81 = sphi 0, %s65
    $region4: #{tpu_custom_call.1} parent=1 // loop_header_branch
      %14 = sbr.rel (%p12) target = $region8
    $region5: #{tpu_custom_call.1} parent=1 // loop_body
      %s16 = ssub.s32 %s11, 1
      %s17 = ssub.s32 %s11, 2
      %s24 = sadd.s32 1, %s19
      %p25 = scmp.ge.s32.totalorder %s24, 2
      %s26 = scalar_select %p25, 0, %s24
      %s27 = sadd.s32 1, %s18
      %s28 = scalar_select %p25, %s27, %s18
      %p29 = scmp.ge.s32.totalorder %s28, 2
      %s30 = scalar_select %p29, 0, %s28
      %s31 = ssub.s32 %s18, %s30
      %p32 = scmp.eq.s32.totalorder %s31, 0
      %s34 = sadd.s32 %s33, 1
      %s35 = scalar_select %p32, %s33, %s34
      %p38 = pneg %p32
      %p39 = scmp.eq.s32.totalorder %s11, 3
      %p40 = por %p38, %p39
      %p41 = scmp.ne.s32.totalorder %s33, %s36
      %p42 = scmp.eq.s32.totalorder %s11, 0
      %p43 = por %p41, %p42
      %p44 = scmp.ne.s32.totalorder %s33, %s36
      %p45 = scmp.eq.s32.totalorder %s16, 3
      %p46 = por %p44, %p45
      %p47 = scmp.ne.s32.totalorder %s36, %s37
      %p48 = scmp.eq.s32.totalorder %s16, 0
      %p49 = por %p47, %p48
      %p50 = scmp.ne.s32.totalorder %s36, %s37
      %p51 = scmp.eq.s32.totalorder %s17, 3
      %p52 = por %p50, %p51
      %p54 = scmp.ne.s32.totalorder %s37, %s53
      %p55 = scmp.eq.s32.totalorder %s17, 0
      %p56 = por %p54, %p55
      %s57 = ssub.s32 %s18, %s30
      %s58 = ssub.s32 %s19, %s26
      %s59 = sor.u32 %s57, %s58
      %p60 = scmp.eq.s32.totalorder %s59, 0
      %s62 = sadd.s32 %s61, 1
      %s63 = scalar_select %p60, %s61, %s62
      %p66 = pneg %p60
      %p67 = scmp.eq.s32.totalorder %s11, 3
      %p68 = por %p66, %p67
      %p69 = scmp.ne.s32.totalorder %s61, %s64
      %p70 = scmp.eq.s32.totalorder %s11, 0
      %p71 = por %p69, %p70
      %p72 = scmp.ne.s32.totalorder %s61, %s64
      %p73 = scmp.eq.s32.totalorder %s16, 3
      %p74 = por %p72, %p73
      %p75 = scmp.ne.s32.totalorder %s64, %s65
      %p76 = scmp.eq.s32.totalorder %s16, 0
      %p77 = por %p75, %p76
      %p78 = scmp.ne.s32.totalorder %s64, %s65
      %p79 = scmp.eq.s32.totalorder %s17, 3
      %p80 = por %p78, %p79
      %p82 = scmp.ne.s32.totalorder %s65, %s81
      %p83 = scmp.eq.s32.totalorder %s17, 0
      %p84 = por %p82, %p83
      %p85 = scmp.le.s32.totalorder 1, %s11
      %p86 = scmp.lt.s32.totalorder %s11, 5
      %p87 = pnand %p85, %p86
      %p88 = pneg %p87
      // Predicated region
      $region9: #{tpu_custom_call.1} parent=5 // pred_check
        _
      $region10: #{tpu_custom_call.1} parent=5 // pred_check_branch
        %90 = sbr.rel (%p87) target = $region12
      $region11: #{tpu_custom_call.1} parent=5 // pred_region
        %s91 = ssub.s32 %s11, 1
        // Predicated region
        $region13: #{tpu_custom_call.1} parent=11 // pred_check
          %p92 = pneg %p49
        $region14: #{tpu_custom_call.1} parent=11 // pred_check_branch
          %94 = sbr.rel (%p92) target = $region16
        $region15: #{tpu_custom_call.1} parent=11 // pred_region
          %96 = vsyncadd [#allocation3], 0
          %s97 = smul.addr %s20, 2
          %s98 = smul.addr %s97, 8
          %s99 = scalar_lea.hbm %s0, %s98
          %s101 = sshll.u32 %s99, 4
          %s102 = int_to_ptr.hbm [resolvable:$true] %s101
          %s103 = sshll.u32 [#allocation2], 4
          %s104 = int_to_ptr.vmem [resolvable:$true] %s103
          %106 = dma.hbm_to_vmem [thread:$0]  %s102, 256, %s104, [#allocation3]
        $region16: #{tpu_custom_call.1} parent=11 // pred_fallthru
          _
      $region12: #{tpu_custom_call.1} parent=5 // pred_fallthru
        _
      %p107 = scmp.lt.s32.totalorder %s11, 4
      // Predicated region
      $region17: #{tpu_custom_call.1} parent=5 // pred_check
        %p108 = pneg %p107
      $region18: #{tpu_custom_call.1} parent=5 // pred_check_branch
        %110 = sbr.rel (%p108) target = $region20
      $region19: #{tpu_custom_call.1} parent=5 // pred_region
        _
      $region20: #{tpu_custom_call.1} parent=5 // pred_fallthru
        _
      %p111 = scmp.le.s32.totalorder 1, %s11
      %p112 = scmp.lt.s32.totalorder %s11, 5
      %p113 = pnand %p111, %p112
      %p114 = pneg %p113
      // Predicated region
      $region21: #{tpu_custom_call.1} parent=5 // pred_check
        _
      $region22: #{tpu_custom_call.1} parent=5 // pred_check_branch
        %116 = sbr.rel (%p113) target = $region24
      $region23: #{tpu_custom_call.1} parent=5 // pred_region
        %s117 = ssub.s32 %s11, 1
        // Predicated region
        $region25: #{tpu_custom_call.1} parent=23 // pred_check
          %p118 = pneg %p49
        $region26: #{tpu_custom_call.1} parent=23 // pred_check_branch
          %120 = sbr.rel (%p118) target = $region28
        $region27: #{tpu_custom_call.1} parent=23 // pred_region
          %122 = dma.done [#allocation3], 256
        $region28: #{tpu_custom_call.1} parent=23 // pred_fallthru
          _
        %p123 = pneg %p49
        %p124 = pneg %p46
        %p125 = pneg %p77
        %p126 = pneg %p74
        %s127 = sand.u32 %s64, 1
        %s128 = scalar_lea.sflag [#allocation4], %s127
        %s129 = sand.u32 %s64, 1
        %s130 = smul.addr %s129, 8
        %s131 = scalar_lea.vmem [#allocation5], %s130
        %s132 = smul.u32 %s21, 128
        %s133 = sshra.s32 %s132, 7
        %s134 = sand.u32 %s132, 127
        %s135 = smul.addr %s133, 8
        %s136 = scalar_lea.vmem [#allocation2], %s135
        %v137 = vld [vmem:[%s136] sm:$0xff]
        %v138 = vmul.f32 %v137, 2.0
        %139 = vst [vmem:[%s131] sm:$0xff] %v138
        %s140 = sand.u32 %s64, 1
        %s141 = scalar_lea.sflag [#allocation4], %s140
        %s142 = sand.u32 %s64, 1
        %s143 = smul.addr %s142, 8
        %s144 = scalar_lea.vmem [#allocation5], %s143
        // Predicated region
        $region29: #{tpu_custom_call.1} parent=23 // pred_check
          %p145 = pneg %p74
        $region30: #{tpu_custom_call.1} parent=23 // pred_check_branch
          %147 = sbr.rel (%p145) target = $region32
        $region31: #{tpu_custom_call.1} parent=23 // pred_region
          %149 = vsyncadd %s141, 0
          %s150 = smul.addr %s20, 2
          %s151 = sadd.s32 %s21, %s150
          %s152 = smul.addr %s151, 8
          %s153 = scalar_lea.hbm %s1, %s152
          %s155 = sshll.u32 %s144, 4
          %s156 = int_to_ptr.vmem [resolvable:$true] %s155
          %s157 = sshll.u32 %s153, 4
          %s158 = int_to_ptr.hbm [resolvable:$true] %s157
          %160 = dma.vmem_to_hbm [thread:$0]  %s156, 128, %s158, %s141
        $region32: #{tpu_custom_call.1} parent=23 // pred_fallthru
          _
      $region24: #{tpu_custom_call.1} parent=5 // pred_fallthru
        _
      %p161 = scmp.le.s32.totalorder 2, %s11
      // Predicated region
      $region33: #{tpu_custom_call.1} parent=5 // pred_check
        %p162 = pneg %p161
      $region34: #{tpu_custom_call.1} parent=5 // pred_check_branch
        %164 = sbr.rel (%p162) target = $region36
      $region35: #{tpu_custom_call.1} parent=5 // pred_region
        %s165 = ssub.s32 %s11, 2
        // Predicated region
        $region37: #{tpu_custom_call.1} parent=35 // pred_check
          %p166 = pneg %p80
        $region38: #{tpu_custom_call.1} parent=35 // pred_check_branch
          %168 = sbr.rel (%p166) target = $region40
        $region39: #{tpu_custom_call.1} parent=35 // pred_region
          %s169 = sand.u32 %s65, 1
          %s170 = scalar_lea.sflag [#allocation4], %s169
          %s171 = sand.u32 %s65, 1
          %s172 = smul.addr %s171, 8
          %s173 = scalar_lea.vmem [#allocation5], %s172
          %175 = dma.done %s170, 128
        $region40: #{tpu_custom_call.1} parent=35 // pred_fallthru
          _
      $region36: #{tpu_custom_call.1} parent=5 // pred_fallthru
        _
    $region6: #{tpu_custom_call.1} parent=1 // loop_footer
      %s15 = sadd.s32 1, %s11
    $region7: #{tpu_custom_call.1} parent=1 // loop_footer_branch
      %10 = sbr.rel target = $region3
    $region8: #{tpu_custom_call.1} parent=1 // loop_exit
      _
    %176 = vsyncpa [#allocation3], 1
    %s177 = scalar_lea.sflag [#allocation3], 1
    %178 = vsyncpa %s177, 1
    %179 = vsyncpa [#allocation4], 1
    %s180 = scalar_lea.sflag [#allocation4], 1
    %181 = vsyncpa %s180, 1

// kernel: tpu_custom_call.1
$region0: #{tpu_custom_call.1}
  #allocation0 [shape = 'u32[]', space=smem, size = 0x4, offset = 0x4, fixed_abs, tag = 'smem constant byte address 0x4 - core index']
  #allocation1 [shape = 'u32[72,128]{1,0:T(1,128)}', space=vmem, size = 0x9000, scoped, tag = 'internal scratch']
  #allocation2 [shape = 'bf16[18,18,128]{2,1,0:T(8,128)(2,1)}', space=vmem, size = 0x1b000, scoped, tag = 'scratch operand']
  %s0 = inlined_call_operand.vmem [shape: bf16[2,20,18,128], index: 0, kind: input, shape index: {}]
  %s1 = inlined_call_operand.vmem [shape: bf16[3,384,128], index: 1, kind: input, shape index: {}]
  %s2 = inlined_call_operand.vmem [shape: f32[1,128], index: 2, kind: input, shape index: {}]
  %s3 = inlined_call_operand.hbm [shape: bf16[3,384,128], index: 3, kind: input, shape index: {}]
  %s4 = inlined_call_operand.vmem [shape: f32[1,128], index: 4, kind: input, shape index: {}]
  %s5 = inlined_call_operand.hbm [shape: bf16[2,16,16,128], index: 5, kind: output, shape index: {}]
  %s6 = sld [smem:[#allocation0]]
  $region65: #{tpu_custom_call.1} parent=0
    _
  %s8 = ssub.s32 1, %s6
  %s9 = scalar_select 0, %s8, %s6
  $region1: #{tpu_custom_call.1} parent=0
    #allocation3 [shape = 'u8[294912]{0}', space=vmem, size = 0x48000, scoped, tag = 'input window, operand 3, single buffered']
    #allocation4 [shape = 's32[2]{0}', space=sflag, size = 0x8, scoped, tag = 'scoped memory for tpu_custom_call.1']
    #allocation5 [shape = 's32[2]{0}', space=sflag, size = 0x8, scoped, tag = 'scoped memory for tpu_custom_call.1']
    #allocation6 [shape = 'u8[131072]{0}', space=vmem, size = 0x20000, scoped, tag = 'output window, operand 0']
    %10 = vsyncpa [#allocation4], 0
    %11 = vsyncpa [#allocation5], 0
    %s12 = scalar_lea.sflag [#allocation5], 1
    %13 = vsyncpa %s12, 0
    loop: start=0, step=1, limit=4
    $region2: #{tpu_custom_call.1} parent=1 // loop_pre_header
      _
    $region3: #{tpu_custom_call.1} parent=1 // loop_header
      %s15 = sphi 0, %s19
      %p16 = scmp.ge.s32.totalorder %s15, 4
      %s22 = sphi 0, %s34
      %s23 = sphi 0, %s30
      %s24 = sphi 0, %s22
      %s25 = sphi 0, %s23
      %s26 = sphi 0, %s24
      %s27 = sphi 0, %s25
      %s37 = sphi 0, %s39
      %s40 = sphi 0, %s37
      %s41 = sphi 0, %s40
      %s57 = sphi 0, %s41
      %s61 = sphi 0, %s61
      %s63 = sphi 0, %s61
      %s64 = sphi 0, %s63
      %s78 = sphi 0, %s64
      %s82 = sphi 0, %s82
      %s84 = sphi 0, %s82
      %s85 = sphi 0, %s84
      %s99 = sphi 0, %s85
      %s103 = sphi 0, %s103
      %s105 = sphi 0, %s103
      %s106 = sphi 0, %s105
      %s120 = sphi 0, %s106
      %s124 = sphi 0, %s124
      %s126 = sphi 0, %s124
      %s127 = sphi 0, %s126
      %s141 = sphi 0, %s127
      %s149 = sphi 0, %s151
      %s152 = sphi 0, %s149
      %s153 = sphi 0, %s152
      %s169 = sphi 0, %s153
    $region4: #{tpu_custom_call.1} parent=1 // loop_header_branch
      %18 = sbr.rel (%p16) target = $region8
    $region5: #{tpu_custom_call.1} parent=1 // loop_body
      %s20 = ssub.s32 %s15, 1
      %s21 = ssub.s32 %s15, 2
      %s28 = sadd.s32 1, %s23
      %p29 = scmp.ge.s32.totalorder %s28, 1
      %s30 = scalar_select %p29, 0, %s28
      %s31 = sadd.s32 1, %s22
      %s32 = scalar_select %p29, %s31, %s22
      %p33 = scmp.ge.s32.totalorder %s32, 2
      %s34 = scalar_select %p33, 0, %s32
      %s35 = ssub.s32 %s22, %s34
      %p36 = scmp.eq.s32.totalorder %s35, 0
      %s38 = sadd.s32 %s37, 1
      %s39 = scalar_select %p36, %s37, %s38
      %p42 = pneg %p36
      %p43 = scmp.eq.s32.totalorder %s15, 1
      %p44 = por %p42, %p43
      %p45 = scmp.ne.s32.totalorder %s37, %s40
      %p46 = scmp.eq.s32.totalorder %s15, 0
      %p47 = por %p45, %p46
      %p48 = scmp.ne.s32.totalorder %s37, %s40
      %p49 = scmp.eq.s32.totalorder %s20, 1
      %p50 = por %p48, %p49
      %p51 = scmp.ne.s32.totalorder %s40, %s41
      %p52 = scmp.eq.s32.totalorder %s20, 0
      %p53 = por %p51, %p52
      %p54 = scmp.ne.s32.totalorder %s40, %s41
      %p55 = scmp.eq.s32.totalorder %s21, 1
      %p56 = por %p54, %p55
      %p58 = scmp.ne.s32.totalorder %s41, %s57
      %p59 = scmp.eq.s32.totalorder %s21, 0
      %p60 = por %p58, %p59
      %s62 = sadd.s32 %s61, 1
      %p65 = scmp.eq.s32.totalorder %s15, 1
      %p66 = scmp.ne.s32.totalorder %s61, %s63
      %p67 = scmp.eq.s32.totalorder %s15, 0
      %p68 = por %p66, %p67
      %p69 = scmp.ne.s32.totalorder %s61, %s63
      %p70 = scmp.eq.s32.totalorder %s20, 1
      %p71 = por %p69, %p70
      %p72 = scmp.ne.s32.totalorder %s63, %s64
      %p73 = scmp.eq.s32.totalorder %s20, 0
      %p74 = por %p72, %p73
      %p75 = scmp.ne.s32.totalorder %s63, %s64
      %p76 = scmp.eq.s32.totalorder %s21, 1
      %p77 = por %p75, %p76
      %p79 = scmp.ne.s32.totalorder %s64, %s78
      %p80 = scmp.eq.s32.totalorder %s21, 0
      %p81 = por %p79, %p80
      %s83 = sadd.s32 %s82, 1
      %p86 = scmp.eq.s32.totalorder %s15, 1
      %p87 = scmp.ne.s32.totalorder %s82, %s84
      %p88 = scmp.eq.s32.totalorder %s15, 0
      %p89 = por %p87, %p88
      %p90 = scmp.ne.s32.totalorder %s82, %s84
      %p91 = scmp.eq.s32.totalorder %s20, 1
      %p92 = por %p90, %p91
      %p93 = scmp.ne.s32.totalorder %s84, %s85
      %p94 = scmp.eq.s32.totalorder %s20, 0
      %p95 = por %p93, %p94
      %p96 = scmp.ne.s32.totalorder %s84, %s85
      %p97 = scmp.eq.s32.totalorder %s21, 1
      %p98 = por %p96, %p97
      %p100 = scmp.ne.s32.totalorder %s85, %s99
      %p101 = scmp.eq.s32.totalorder %s21, 0
      %p102 = por %p100, %p101
      %s104 = sadd.s32 %s103, 1
      %p107 = scmp.eq.s32.totalorder %s15, 1
      %p108 = scmp.ne.s32.totalorder %s103, %s105
      %p109 = scmp.eq.s32.totalorder %s15, 0
      %p110 = por %p108, %p109
      %p111 = scmp.ne.s32.totalorder %s103, %s105
      %p112 = scmp.eq.s32.totalorder %s20, 1
      %p113 = por %p111, %p112
      %p114 = scmp.ne.s32.totalorder %s105, %s106
      %p115 = scmp.eq.s32.totalorder %s20, 0
      %p116 = por %p114, %p115
      %p117 = scmp.ne.s32.totalorder %s105, %s106
      %p118 = scmp.eq.s32.totalorder %s21, 1
      %p119 = por %p117, %p118
      %p121 = scmp.ne.s32.totalorder %s106, %s120
      %p122 = scmp.eq.s32.totalorder %s21, 0
      %p123 = por %p121, %p122
      %s125 = sadd.s32 %s124, 1
      %p128 = scmp.eq.s32.totalorder %s15, 1
      %p129 = scmp.ne.s32.totalorder %s124, %s126
      %p130 = scmp.eq.s32.totalorder %s15, 0
      %p131 = por %p129, %p130
      %p132 = scmp.ne.s32.totalorder %s124, %s126
      %p133 = scmp.eq.s32.totalorder %s20, 1
      %p134 = por %p132, %p133
      %p135 = scmp.ne.s32.totalorder %s126, %s127
      %p136 = scmp.eq.s32.totalorder %s20, 0
      %p137 = por %p135, %p136
      %p138 = scmp.ne.s32.totalorder %s126, %s127
      %p139 = scmp.eq.s32.totalorder %s21, 1
      %p140 = por %p138, %p139
      %p142 = scmp.ne.s32.totalorder %s127, %s141
      %p143 = scmp.eq.s32.totalorder %s21, 0
      %p144 = por %p142, %p143
      %s145 = ssub.s32 %s22, %s34
      %s146 = ssub.s32 %s23, %s30
      %s147 = sor.u32 %s145, %s146
      %p148 = scmp.eq.s32.totalorder %s147, 0
      %s150 = sadd.s32 %s149, 1
      %s151 = scalar_select %p148, %s149, %s150
      %p154 = pneg %p148
      %p155 = scmp.eq.s32.totalorder %s15, 1
      %p156 = por %p154, %p155
      %p157 = scmp.ne.s32.totalorder %s149, %s152
      %p158 = scmp.eq.s32.totalorder %s15, 0
      %p159 = por %p157, %p158
      %p160 = scmp.ne.s32.totalorder %s149, %s152
      %p161 = scmp.eq.s32.totalorder %s20, 1
      %p162 = por %p160, %p161
      %p163 = scmp.ne.s32.totalorder %s152, %s153
      %p164 = scmp.eq.s32.totalorder %s20, 0
      %p165 = por %p163, %p164
      %p166 = scmp.ne.s32.totalorder %s152, %s153
      %p167 = scmp.eq.s32.totalorder %s21, 1
      %p168 = por %p166, %p167
      %p170 = scmp.ne.s32.totalorder %s153, %s169
      %p171 = scmp.eq.s32.totalorder %s21, 0
      %p172 = por %p170, %p171
      %p173 = scmp.le.s32.totalorder 1, %s15
      %p174 = scmp.lt.s32.totalorder %s15, 3
      %p175 = pnand %p173, %p174
      %p176 = pneg %p175
      // Predicated region
      $region9: #{tpu_custom_call.1} parent=5 // pred_check
        _
      $region10: #{tpu_custom_call.1} parent=5 // pred_check_branch
        %178 = sbr.rel (%p175) target = $region12
      $region11: #{tpu_custom_call.1} parent=5 // pred_region
        %s179 = ssub.s32 %s15, 1
        // Predicated region
        $region13: #{tpu_custom_call.1} parent=11 // pred_check
          %p180 = pneg %p74
        $region14: #{tpu_custom_call.1} parent=11 // pred_check_branch
          %182 = sbr.rel (%p180) target = $region16
        $region15: #{tpu_custom_call.1} parent=11 // pred_region
          _
        $region16: #{tpu_custom_call.1} parent=11 // pred_fallthru
          _
        // Predicated region
        $region17: #{tpu_custom_call.1} parent=11 // pred_check
          %p183 = pneg %p95
        $region18: #{tpu_custom_call.1} parent=11 // pred_check_branch
          %185 = sbr.rel (%p183) target = $region20
        $region19: #{tpu_custom_call.1} parent=11 // pred_region
          _
        $region20: #{tpu_custom_call.1} parent=11 // pred_fallthru
          _
        // Predicated region
        $region21: #{tpu_custom_call.1} parent=11 // pred_check
          %p186 = pneg %p116
        $region22: #{tpu_custom_call.1} parent=11 // pred_check_branch
          %188 = sbr.rel (%p186) target = $region24
        $region23: #{tpu_custom_call.1} parent=11 // pred_region
          %190 = vsyncadd [#allocation4], 0
          %s191 = sshll.u32 %s3, 4
          %s192 = int_to_ptr.hbm [resolvable:$true] %s191
          %s193 = sshll.u32 [#allocation3], 4
          %s194 = int_to_ptr.vmem [resolvable:$true] %s193
          %199 = dma.hbm_to_vmem [thread:$0]  %s192, 9216, %s194, [#allocation4], 64, 64, 4
        $region24: #{tpu_custom_call.1} parent=11 // pred_fallthru
          _
        // Predicated region
        $region25: #{tpu_custom_call.1} parent=11 // pred_check
          %p200 = pneg %p137
        $region26: #{tpu_custom_call.1} parent=11 // pred_check_branch
          %202 = sbr.rel (%p200) target = $region28
        $region27: #{tpu_custom_call.1} parent=11 // pred_region
          _
        $region28: #{tpu_custom_call.1} parent=11 // pred_fallthru
          _
      $region12: #{tpu_custom_call.1} parent=5 // pred_fallthru
        _
      %p203 = scmp.lt.s32.totalorder %s15, 2
      // Predicated region
      $region29: #{tpu_custom_call.1} parent=5 // pred_check
        %p204 = pneg %p203
      $region30: #{tpu_custom_call.1} parent=5 // pred_check_branch
        %206 = sbr.rel (%p204) target = $region32
      $region31: #{tpu_custom_call.1} parent=5 // pred_region
        // Predicated region
        $region33: #{tpu_custom_call.1} parent=31 // pred_check
          %p207 = pneg %p47
        $region34: #{tpu_custom_call.1} parent=31 // pred_check_branch
          %209 = sbr.rel (%p207) target = $region36
        $region35: #{tpu_custom_call.1} parent=31 // pred_region
          %p210 = scmp.lt.s32.totalorder %s22, 1
          %s211 = scalar_select %p210, %s22, 1
          %s212 = smul.addr %s211, 60
          %s213 = smul.addr %s212, 4
          %s214 = scalar_lea.vmem %s0, %s213
        $region36: #{tpu_custom_call.1} parent=31 // pred_fallthru
          _
      $region32: #{tpu_custom_call.1} parent=5 // pred_fallthru
        _
      %p215 = scmp.le.s32.totalorder 1, %s15
      %p216 = scmp.lt.s32.totalorder %s15, 3
      %p217 = pnand %p215, %p216
      %p218 = pneg %p217
      // Predicated region
      $region37: #{tpu_custom_call.1} parent=5 // pred_check
        _
      $region38: #{tpu_custom_call.1} parent=5 // pred_check_branch
        %220 = sbr.rel (%p217) target = $region40
      $region39: #{tpu_custom_call.1} parent=5 // pred_region
        %s221 = ssub.s32 %s15, 1
        // Predicated region
        $region41: #{tpu_custom_call.1} parent=39 // pred_check
          %p222 = pneg %p116
        $region42: #{tpu_custom_call.1} parent=39 // pred_check_branch
          %224 = sbr.rel (%p222) target = $region44
        $region43: #{tpu_custom_call.1} parent=39 // pred_region
          %226 = dma.done [#allocation4], 9216
        $region44: #{tpu_custom_call.1} parent=39 // pred_fallthru
          _
        %p227 = scmp.lt.s32.totalorder %s24, 1
        %s228 = scalar_select %p227, %s24, 1
        %s229 = smul.addr %s228, 60
        %s230 = smul.addr %s229, 4
        %s231 = scalar_lea.vmem %s0, %s230
        %p232 = pneg %p53
        %p233 = pneg %p50
        %p234 = pneg %p74
        %p235 = pneg %p71
        %p236 = pneg %p95
        %p237 = pneg %p92
        %p238 = pneg %p116
        %p239 = pneg %p113
        %p240 = pneg %p137
        %p241 = pneg %p134
        %p242 = pneg %p165
        %p243 = pneg %p162
        %s244 = sand.u32 %s152, 1
        %s245 = scalar_lea.sflag [#allocation5], %s244
        %s246 = sand.u32 %s152, 1
        %s247 = smul.addr %s246, 128
        %s248 = scalar_lea.vmem [#allocation6], %s247
        %p249 = scmp.lt.s32.totalorder %s24, 1
        %s250 = scalar_select %p249, %s24, 1
        %s251 = smul.addr %s250, 60
        %s252 = smul.addr %s251, 4
        %s253 = scalar_lea.vmem %s0, %s252
        %s254 = smul.u32 16, %s25
        %s256 = smul.u32 %s25, 16
        %s257 = smul.u32 %s256, 3
        %s258 = smul.addr %s257, 4
        %s259 = scalar_lea.vmem %s253, %s258
        %v260 = vld [vmem:[%s259] sm:$0xf]
        %v261 = vld [vmem:[%s259 + $0x4] sm:$0xf]
        %v262 = vld [vmem:[%s259 + $0x8] sm:$0x1]
        %v263 = vld [vmem:[%s259 + $0xc] sm:$0xf]
        %v264 = vld [vmem:[%s259 + $0x10] sm:$0xf]
        %v265 = vld [vmem:[%s259 + $0x14] sm:$0x1]
        %v266 = vld [vmem:[%s259 + $0x18] sm:$0xf]
        %v267 = vld [vmem:[%s259 + $0x1c] sm:$0xf]
        %v268 = vld [vmem:[%s259 + $0x20] sm:$0x1]
        %v269 = vld [vmem:[%s259 + $0x24] sm:$0xf]
        %v270 = vld [vmem:[%s259 + $0x28] sm:$0xf]
        %v271 = vld [vmem:[%s259 + $0x2c] sm:$0x1]
        %v272 = vld [vmem:[%s259 + $0x30] sm:$0xf]
        %v273 = vld [vmem:[%s259 + $0x34] sm:$0xf]
        %v274 = vld [vmem:[%s259 + $0x38] sm:$0x1]
        %v275 = vld [vmem:[%s259 + $0x3c] sm:$0xf]
        %v276 = vld [vmem:[%s259 + $0x40] sm:$0xf]
        %v277 = vld [vmem:[%s259 + $0x44] sm:$0x1]
        %v278 = vld [vmem:[%s259 + $0x48] sm:$0xf]
        %v279 = vld [vmem:[%s259 + $0x4c] sm:$0xf]
        %v280 = vld [vmem:[%s259 + $0x50] sm:$0x1]
        %v281 = vld [vmem:[%s259 + $0x54] sm:$0xf]
        %v282 = vld [vmem:[%s259 + $0x58] sm:$0xf]
        %v283 = vld [vmem:[%s259 + $0x5c] sm:$0x1]
        %v284 = vld [vmem:[%s259 + $0x60] sm:$0xf]
        %v285 = vld [vmem:[%s259 + $0x64] sm:$0xf]
        %v286 = vld [vmem:[%s259 + $0x68] sm:$0x1]
        %v287 = vld [vmem:[%s259 + $0x6c] sm:$0xf]
        %v288 = vld [vmem:[%s259 + $0x70] sm:$0xf]
        %v289 = vld [vmem:[%s259 + $0x74] sm:$0x1]
        %v290 = vld [vmem:[%s259 + $0x78] sm:$0xf]
        %v291 = vld [vmem:[%s259 + $0x7c] sm:$0xf]
        %v292 = vld [vmem:[%s259 + $0x80] sm:$0x1]
        %v293 = vld [vmem:[%s259 + $0x84] sm:$0xf]
        %v294 = vld [vmem:[%s259 + $0x88] sm:$0xf]
        %v295 = vld [vmem:[%s259 + $0x8c] sm:$0x1]
        %v296 = vld [vmem:[%s259 + $0x90] sm:$0xf]
        %v297 = vld [vmem:[%s259 + $0x94] sm:$0xf]
        %v298 = vld [vmem:[%s259 + $0x98] sm:$0x1]
        %v299 = vld [vmem:[%s259 + $0x9c] sm:$0xf]
        %v300 = vld [vmem:[%s259 + $0xa0] sm:$0xf]
        %v301 = vld [vmem:[%s259 + $0xa4] sm:$0x1]
        %v302 = vld [vmem:[%s259 + $0xa8] sm:$0xf]
        %v303 = vld [vmem:[%s259 + $0xac] sm:$0xf]
        %v304 = vld [vmem:[%s259 + $0xb0] sm:$0x1]
        %v305 = vld [vmem:[%s259 + $0xb4] sm:$0xf]
        %v306 = vld [vmem:[%s259 + $0xb8] sm:$0xf]
        %v307 = vld [vmem:[%s259 + $0xbc] sm:$0x1]
        %v308 = vld [vmem:[%s259 + $0xc0] sm:$0xf]
        %v309 = vld [vmem:[%s259 + $0xc4] sm:$0xf]
        %v310 = vld [vmem:[%s259 + $0xc8] sm:$0x1]
        %v311 = vld [vmem:[%s259 + $0xcc] sm:$0xf]
        %v312 = vld [vmem:[%s259 + $0xd0] sm:$0xf]
        %v313 = vld [vmem:[%s259 + $0xd4] sm:$0x1]
        %v350 = vunpack.c.l.b16 %v260
        %v351 = vunpack.c.l.b16 %v261
        %v352 = vunpack.c.l.b16 %v263
        %v353 = vunpack.c.l.b16 %v264
        %v354 = vunpack.c.l.b16 %v266
        %v355 = vunpack.c.l.b16 %v267
        %v356 = vunpack.c.l.b16 %v269
        %v357 = vunpack.c.l.b16 %v270
        %v358 = vunpack.c.l.b16 %v272
        %v359 = vunpack.c.l.b16 %v273
        %v360 = vunpack.c.l.b16 %v275
        %v361 = vunpack.c.l.b16 %v276
        %v362 = vunpack.c.l.b16 %v278
        %v363 = vunpack.c.l.b16 %v279
        %v364 = vunpack.c.l.b16 %v281
        %v365 = vunpack.c.l.b16 %v282
        %v366 = vunpack.c.l.b16 %v284
        %v367 = vunpack.c.l.b16 %v285
        %v368 = vunpack.c.l.b16 %v287
        %v369 = vunpack.c.l.b16 %v288
        %v370 = vunpack.c.l.b16 %v290
        %v371 = vunpack.c.l.b16 %v291
        %v372 = vunpack.c.l.b16 %v293
        %v373 = vunpack.c.l.b16 %v294
        %v374 = vunpack.c.l.b16 %v296
        %v375 = vunpack.c.l.b16 %v297
        %v376 = vunpack.c.l.b16 %v299
        %v377 = vunpack.c.l.b16 %v300
        %v378 = vunpack.c.l.b16 %v302
        %v379 = vunpack.c.l.b16 %v303
        %v380 = vunpack.c.l.b16 %v305
        %v381 = vunpack.c.l.b16 %v306
        %v382 = vunpack.c.l.b16 %v308
        %v383 = vunpack.c.l.b16 %v309
        %v384 = vunpack.c.l.b16 %v311
        %v385 = vunpack.c.l.b16 %v312
        %v386 = vpack.c.b16 %v351, %v350
        %v387 = vpack.c.b16 %v353, %v352
        %v388 = vpack.c.b16 %v355, %v354
        %v389 = vpack.c.b16 %v357, %v356
        %v390 = vpack.c.b16 %v359, %v358
        %v391 = vpack.c.b16 %v361, %v360
        %v392 = vpack.c.b16 %v363, %v362
        %v393 = vpack.c.b16 %v365, %v364
        %v394 = vpack.c.b16 %v367, %v366
        %v395 = vpack.c.b16 %v369, %v368
        %v396 = vpack.c.b16 %v371, %v370
        %v397 = vpack.c.b16 %v373, %v372
        %v398 = vpack.c.b16 %v375, %v374
        %v399 = vpack.c.b16 %v377, %v376
        %v400 = vpack.c.b16 %v379, %v378
        %v401 = vpack.c.b16 %v381, %v380
        %v402 = vpack.c.b16 %v383, %v382
        %v403 = vpack.c.b16 %v385, %v384
        %v440 = vunpack.c.l.b16 %v262
        %v441 = vunpack.c.l.b16 %v265
        %v442 = vunpack.c.l.b16 %v268
        %v443 = vunpack.c.l.b16 %v271
        %v444 = vunpack.c.l.b16 %v274
        %v445 = vunpack.c.l.b16 %v277
        %v446 = vunpack.c.l.b16 %v280
        %v447 = vunpack.c.l.b16 %v283
        %v448 = vunpack.c.l.b16 %v286
        %v449 = vunpack.c.l.b16 %v289
        %v450 = vunpack.c.l.b16 %v292
        %v451 = vunpack.c.l.b16 %v295
        %v452 = vunpack.c.l.b16 %v298
        %v453 = vunpack.c.l.b16 %v301
        %v454 = vunpack.c.l.b16 %v304
        %v455 = vunpack.c.l.b16 %v307
        %v456 = vunpack.c.l.b16 %v310
        %v457 = vunpack.c.l.b16 %v313
        %v458 = vpack.c.b16 %v440, %v440
        %v459 = vpack.c.b16 %v441, %v441
        %v460 = vpack.c.b16 %v442, %v442
        %v461 = vpack.c.b16 %v443, %v443
        %v462 = vpack.c.b16 %v444, %v444
        %v463 = vpack.c.b16 %v445, %v445
        %v464 = vpack.c.b16 %v446, %v446
        %v465 = vpack.c.b16 %v447, %v447
        %v466 = vpack.c.b16 %v448, %v448
        %v467 = vpack.c.b16 %v449, %v449
        %v468 = vpack.c.b16 %v450, %v450
        %v469 = vpack.c.b16 %v451, %v451
        %v470 = vpack.c.b16 %v452, %v452
        %v471 = vpack.c.b16 %v453, %v453
        %v472 = vpack.c.b16 %v454, %v454
        %v473 = vpack.c.b16 %v455, %v455
        %v474 = vpack.c.b16 %v456, %v456
        %v475 = vpack.c.b16 %v457, %v457
        %vm476 = vsmask.f32 7424
        %v478 = vshrl.u32 %v386, 16
        %v480 = vshll.u32 %v386, 16
        %v482 = vrot.slane %v480, 1
        %v483 = vor.u32 %v478, %v482
        %v485 = vshll.u32 %v458, 16
        %v487 = vrot.slane %v485, 1
        %v488 = vsel %vm476, %v483, %v487
        %v490 = vshrl.u32 %v387, 16
        %v492 = vshll.u32 %v387, 16
        %v494 = vrot.slane %v492, 1
        %v495 = vor.u32 %v490, %v494
        %v497 = vshll.u32 %v459, 16
        %v499 = vrot.slane %v497, 1
        %v500 = vsel %vm476, %v495, %v499
        %v502 = vshrl.u32 %v388, 16
        %v504 = vshll.u32 %v388, 16
        %v506 = vrot.slane %v504, 1
        %v507 = vor.u32 %v502, %v506
        %v509 = vshll.u32 %v460, 16
        %v511 = vrot.slane %v509, 1
        %v512 = vsel %vm476, %v507, %v511
        %v514 = vshrl.u32 %v389, 16
        %v516 = vshll.u32 %v389, 16
        %v518 = vrot.slane %v516, 1
        %v519 = vor.u32 %v514, %v518
        %v521 = vshll.u32 %v461, 16
        %v523 = vrot.slane %v521, 1
        %v524 = vsel %vm476, %v519, %v523
        %v526 = vshrl.u32 %v390, 16
        %v528 = vshll.u32 %v390, 16
        %v530 = vrot.slane %v528, 1
        %v531 = vor.u32 %v526, %v530
        %v533 = vshll.u32 %v462, 16
        %v535 = vrot.slane %v533, 1
        %v536 = vsel %vm476, %v531, %v535
        %v538 = vshrl.u32 %v391, 16
        %v540 = vshll.u32 %v391, 16
        %v542 = vrot.slane %v540, 1
        %v543 = vor.u32 %v538, %v542
        %v545 = vshll.u32 %v463, 16
        %v547 = vrot.slane %v545, 1
        %v548 = vsel %vm476, %v543, %v547
        %v550 = vshrl.u32 %v392, 16
        %v552 = vshll.u32 %v392, 16
        %v554 = vrot.slane %v552, 1
        %v555 = vor.u32 %v550, %v554
        %v557 = vshll.u32 %v464, 16
        %v559 = vrot.slane %v557, 1
        %v560 = vsel %vm476, %v555, %v559
        %v562 = vshrl.u32 %v393, 16
        %v564 = vshll.u32 %v393, 16
        %v566 = vrot.slane %v564, 1
        %v567 = vor.u32 %v562, %v566
        %v569 = vshll.u32 %v465, 16
        %v571 = vrot.slane %v569, 1
        %v572 = vsel %vm476, %v567, %v571
        %v574 = vshrl.u32 %v394, 16
        %v576 = vshll.u32 %v394, 16
        %v578 = vrot.slane %v576, 1
        %v579 = vor.u32 %v574, %v578
        %v581 = vshll.u32 %v466, 16
        %v583 = vrot.slane %v581, 1
        %v584 = vsel %vm476, %v579, %v583
        %v586 = vshrl.u32 %v395, 16
        %v588 = vshll.u32 %v395, 16
        %v590 = vrot.slane %v588, 1
        %v591 = vor.u32 %v586, %v590
        %v593 = vshll.u32 %v467, 16
        %v595 = vrot.slane %v593, 1
        %v596 = vsel %vm476, %v591, %v595
        %v598 = vshrl.u32 %v396, 16
        %v600 = vshll.u32 %v396, 16
        %v602 = vrot.slane %v600, 1
        %v603 = vor.u32 %v598, %v602
        %v605 = vshll.u32 %v468, 16
        %v607 = vrot.slane %v605, 1
        %v608 = vsel %vm476, %v603, %v607
        %v610 = vshrl.u32 %v397, 16
        %v612 = vshll.u32 %v397, 16
        %v614 = vrot.slane %v612, 1
        %v615 = vor.u32 %v610, %v614
        %v617 = vshll.u32 %v469, 16
        %v619 = vrot.slane %v617, 1
        %v620 = vsel %vm476, %v615, %v619
        %v622 = vshrl.u32 %v398, 16
        %v624 = vshll.u32 %v398, 16
        %v626 = vrot.slane %v624, 1
        %v627 = vor.u32 %v622, %v626
        %v629 = vshll.u32 %v470, 16
        %v631 = vrot.slane %v629, 1
        %v632 = vsel %vm476, %v627, %v631
        %v634 = vshrl.u32 %v399, 16
        %v636 = vshll.u32 %v399, 16
        %v638 = vrot.slane %v636, 1
        %v639 = vor.u32 %v634, %v638
        %v641 = vshll.u32 %v471, 16
        %v643 = vrot.slane %v641, 1
        %v644 = vsel %vm476, %v639, %v643
        %v646 = vshrl.u32 %v400, 16
        %v648 = vshll.u32 %v400, 16
        %v650 = vrot.slane %v648, 1
        %v651 = vor.u32 %v646, %v650
        %v653 = vshll.u32 %v472, 16
        %v655 = vrot.slane %v653, 1
        %v656 = vsel %vm476, %v651, %v655
        %v658 = vshrl.u32 %v401, 16
        %v660 = vshll.u32 %v401, 16
        %v662 = vrot.slane %v660, 1
        %v663 = vor.u32 %v658, %v662
        %v665 = vshll.u32 %v473, 16
        %v667 = vrot.slane %v665, 1
        %v668 = vsel %vm476, %v663, %v667
        %v670 = vshrl.u32 %v402, 16
        %v672 = vshll.u32 %v402, 16
        %v674 = vrot.slane %v672, 1
        %v675 = vor.u32 %v670, %v674
        %v677 = vshll.u32 %v474, 16
        %v679 = vrot.slane %v677, 1
        %v680 = vsel %vm476, %v675, %v679
        %v682 = vshrl.u32 %v403, 16
        %v684 = vshll.u32 %v403, 16
        %v686 = vrot.slane %v684, 1
        %v687 = vor.u32 %v682, %v686
        %v689 = vshll.u32 %v475, 16
        %v691 = vrot.slane %v689, 1
        %v692 = vsel %vm476, %v687, %v691
        %vm711 = vcmask 1046528
        %v712 = vrot.slane %v386, 1
        %v713 = vrot.slane %v458, 1
        %v714 = vsel %vm711, %v712, %v713
        %v715 = vrot.slane %v387, 1
        %v716 = vrot.slane %v459, 1
        %v717 = vsel %vm711, %v715, %v716
        %v718 = vrot.slane %v388, 1
        %v719 = vrot.slane %v460, 1
        %v720 = vsel %vm711, %v718, %v719
        %v721 = vrot.slane %v389, 1
        %v722 = vrot.slane %v461, 1
        %v723 = vsel %vm711, %v721, %v722
        %v724 = vrot.slane %v390, 1
        %v725 = vrot.slane %v462, 1
        %v726 = vsel %vm711, %v724, %v725
        %v727 = vrot.slane %v391, 1
        %v728 = vrot.slane %v463, 1
        %v729 = vsel %vm711, %v727, %v728
        %v730 = vrot.slane %v392, 1
        %v731 = vrot.slane %v464, 1
        %v732 = vsel %vm711, %v730, %v731
        %v733 = vrot.slane %v393, 1
        %v734 = vrot.slane %v465, 1
        %v735 = vsel %vm711, %v733, %v734
        %v736 = vrot.slane %v394, 1
        %v737 = vrot.slane %v466, 1
        %v738 = vsel %vm711, %v736, %v737
        %v739 = vrot.slane %v395, 1
        %v740 = vrot.slane %v467, 1
        %v741 = vsel %vm711, %v739, %v740
        %v742 = vrot.slane %v396, 1
        %v743 = vrot.slane %v468, 1
        %v744 = vsel %vm711, %v742, %v743
        %v745 = vrot.slane %v397, 1
        %v746 = vrot.slane %v469, 1
        %v747 = vsel %vm711, %v745, %v746
        %v748 = vrot.slane %v398, 1
        %v749 = vrot.slane %v470, 1
        %v750 = vsel %vm711, %v748, %v749
        %v751 = vrot.slane %v399, 1
        %v752 = vrot.slane %v471, 1
        %v753 = vsel %vm711, %v751, %v752
        %v754 = vrot.slane %v400, 1
        %v755 = vrot.slane %v472, 1
        %v756 = vsel %vm711, %v754, %v755
        %v757 = vrot.slane %v401, 1
        %v758 = vrot.slane %v473, 1
        %v759 = vsel %vm711, %v757, %v758
        %v760 = vrot.slane %v402, 1
        %v761 = vrot.slane %v474, 1
        %v762 = vsel %vm711, %v760, %v761
        %v763 = vrot.slane %v403, 1
        %v764 = vrot.slane %v475, 1
        %v765 = vsel %vm711, %v763, %v764
        %v784 = vld [vmem:[%s1] sm:$0xf]
        %v785 = vld [vmem:[%s1 + $0x4] sm:$0xf]
        %v786 = vld [vmem:[%s1 + $0x8] sm:$0xf]
        %v787 = vld [vmem:[%s1 + $0xc] sm:$0xf]
        %v788 = vld [vmem:[%s1 + $0x10] sm:$0xf]
        %v789 = vld [vmem:[%s1 + $0x14] sm:$0xf]
        %v790 = vld [vmem:[%s1 + $0x18] sm:$0xf]
        %v791 = vld [vmem:[%s1 + $0x1c] sm:$0xf]
        %v792 = vld [vmem:[%s1 + $0x20] sm:$0xf]
        %v793 = vld [vmem:[%s1 + $0x24] sm:$0xf]
        %v794 = vld [vmem:[%s1 + $0x28] sm:$0xf]
        %v795 = vld [vmem:[%s1 + $0x2c] sm:$0xf]
        %v796 = vld [vmem:[%s1 + $0x30] sm:$0xf]
        %v797 = vld [vmem:[%s1 + $0x34] sm:$0xf]
        %v798 = vld [vmem:[%s1 + $0x38] sm:$0xf]
        %v799 = vld [vmem:[%s1 + $0x3c] sm:$0xf]
        %v800 = vld [vmem:[%s1 + $0x40] sm:$0xf]
        %v801 = vld [vmem:[%s1 + $0x44] sm:$0xf]
        %v802 = vld [vmem:[%s1 + $0x48] sm:$0xf]
        %v803 = vld [vmem:[%s1 + $0x4c] sm:$0xf]
        %v804 = vld [vmem:[%s1 + $0x50] sm:$0xf]
        %v805 = vld [vmem:[%s1 + $0x54] sm:$0xf]
        %v806 = vld [vmem:[%s1 + $0x58] sm:$0xf]
        %v807 = vld [vmem:[%s1 + $0x5c] sm:$0xf]
        %v808 = vld [vmem:[%s1 + $0x60] sm:$0xf]
        %v809 = vld [vmem:[%s1 + $0x64] sm:$0xf]
        %v810 = vld [vmem:[%s1 + $0x68] sm:$0xf]
        %v811 = vld [vmem:[%s1 + $0x6c] sm:$0xf]
        %v812 = vld [vmem:[%s1 + $0x70] sm:$0xf]
        %v813 = vld [vmem:[%s1 + $0x74] sm:$0xf]
        %v814 = vld [vmem:[%s1 + $0x78] sm:$0xf]
        %v815 = vld [vmem:[%s1 + $0x7c] sm:$0xf]
        %v816 = vld [vmem:[%s1 + $0x80] sm:$0xf]
        %v817 = vld [vmem:[%s1 + $0x84] sm:$0xf]
        %v818 = vld [vmem:[%s1 + $0x88] sm:$0xf]
        %v819 = vld [vmem:[%s1 + $0x8c] sm:$0xf]
        %v820 = vld [vmem:[%s1 + $0x90] sm:$0xf]
        %v821 = vld [vmem:[%s1 + $0x94] sm:$0xf]
        %v822 = vld [vmem:[%s1 + $0x98] sm:$0xf]
        %v823 = vld [vmem:[%s1 + $0x9c] sm:$0xf]
        %v824 = vld [vmem:[%s1 + $0xa0] sm:$0xf]
        %v825 = vld [vmem:[%s1 + $0xa4] sm:$0xf]
        %v826 = vld [vmem:[%s1 + $0xa8] sm:$0xf]
        %v827 = vld [vmem:[%s1 + $0xac] sm:$0xf]
        %v828 = vld [vmem:[%s1 + $0xb0] sm:$0xf]
        %v829 = vld [vmem:[%s1 + $0xb4] sm:$0xf]
        %v830 = vld [vmem:[%s1 + $0xb8] sm:$0xf]
        %v831 = vld [vmem:[%s1 + $0xbc] sm:$0xf]
        %s832 = sadd.s32 %s256, 1
        %s833 = smul.u32 %s832, 3
        %s834 = smul.addr %s833, 4
        %s835 = scalar_lea.vmem %s253, %s834
        %v836 = vld [vmem:[%s835] sm:$0xf]
        %v837 = vld [vmem:[%s835 + $0x4] sm:$0xf]
        %v838 = vld [vmem:[%s835 + $0x8] sm:$0x1]
        %v839 = vld [vmem:[%s835 + $0xc] sm:$0xf]
        %v840 = vld [vmem:[%s835 + $0x10] sm:$0xf]
        %v841 = vld [vmem:[%s835 + $0x14] sm:$0x1]
        %v842 = vld [vmem:[%s835 + $0x18] sm:$0xf]
        %v843 = vld [vmem:[%s835 + $0x1c] sm:$0xf]
        %v844 = vld [vmem:[%s835 + $0x20] sm:$0x1]
        %v845 = vld [vmem:[%s835 + $0x24] sm:$0xf]
        %v846 = vld [vmem:[%s835 + $0x28] sm:$0xf]
        %v847 = vld [vmem:[%s835 + $0x2c] sm:$0x1]
        %v848 = vld [vmem:[%s835 + $0x30] sm:$0xf]
        %v849 = vld [vmem:[%s835 + $0x34] sm:$0xf]
        %v850 = vld [vmem:[%s835 + $0x38] sm:$0x1]
        %v851 = vld [vmem:[%s835 + $0x3c] sm:$0xf]
        %v852 = vld [vmem:[%s835 + $0x40] sm:$0xf]
        %v853 = vld [vmem:[%s835 + $0x44] sm:$0x1]
        %v854 = vld [vmem:[%s835 + $0x48] sm:$0xf]
        %v855 = vld [vmem:[%s835 + $0x4c] sm:$0xf]
        %v856 = vld [vmem:[%s835 + $0x50] sm:$0x1]
        %v857 = vld [vmem:[%s835 + $0x54] sm:$0xf]
        %v858 = vld [vmem:[%s835 + $0x58] sm:$0xf]
        %v859 = vld [vmem:[%s835 + $0x5c] sm:$0x1]
        %v860 = vld [vmem:[%s835 + $0x60] sm:$0xf]
        %v861 = vld [vmem:[%s835 + $0x64] sm:$0xf]
        %v862 = vld [vmem:[%s835 + $0x68] sm:$0x1]
        %v863 = vld [vmem:[%s835 + $0x6c] sm:$0xf]
        %v864 = vld [vmem:[%s835 + $0x70] sm:$0xf]
        %v865 = vld [vmem:[%s835 + $0x74] sm:$0x1]
        %v866 = vld [vmem:[%s835 + $0x78] sm:$0xf]
        %v867 = vld [vmem:[%s835 + $0x7c] sm:$0xf]
        %v868 = vld [vmem:[%s835 + $0x80] sm:$0x1]
        %v869 = vld [vmem:[%s835 + $0x84] sm:$0xf]
        %v870 = vld [vmem:[%s835 + $0x88] sm:$0xf]
        %v871 = vld [vmem:[%s835 + $0x8c] sm:$0x1]
        %v872 = vld [vmem:[%s835 + $0x90] sm:$0xf]
        %v873 = vld [vmem:[%s835 + $0x94] sm:$0xf]
        %v874 = vld [vmem:[%s835 + $0x98] sm:$0x1]
        %v875 = vld [vmem:[%s835 + $0x9c] sm:$0xf]
        %v876 = vld [vmem:[%s835 + $0xa0] sm:$0xf]
        %v877 = vld [vmem:[%s835 + $0xa4] sm:$0x1]
        %v878 = vld [vmem:[%s835 + $0xa8] sm:$0xf]
        %v879 = vld [vmem:[%s835 + $0xac] sm:$0xf]
        %v880 = vld [vmem:[%s835 + $0xb0] sm:$0x1]
        %v881 = vld [vmem:[%s835 + $0xb4] sm:$0xf]
        %v882 = vld [vmem:[%s835 + $0xb8] sm:$0xf]
        %v883 = vld [vmem:[%s835 + $0xbc] sm:$0x1]
        %v884 = vld [vmem:[%s835 + $0xc0] sm:$0xf]
        %v885 = vld [vmem:[%s835 + $0xc4] sm:$0xf]
        %v886 = vld [vmem:[%s835 + $0xc8] sm:$0x1]
        %v887 = vld [vmem:[%s835 + $0xcc] sm:$0xf]
        %v888 = vld [vmem:[%s835 + $0xd0] sm:$0xf]
        %v889 = vld [vmem:[%s835 + $0xd4] sm:$0x1]
        %v926 = vunpack.c.l.b16 %v836
        %v927 = vunpack.c.l.b16 %v837
        %v928 = vunpack.c.l.b16 %v839
        %v929 = vunpack.c.l.b16 %v840
        %v930 = vunpack.c.l.b16 %v842
        %v931 = vunpack.c.l.b16 %v843
        %v932 = vunpack.c.l.b16 %v845
        %v933 = vunpack.c.l.b16 %v846
        %v934 = vunpack.c.l.b16 %v848
        %v935 = vunpack.c.l.b16 %v849
        %v936 = vunpack.c.l.b16 %v851
        %v937 = vunpack.c.l.b16 %v852
        %v938 = vunpack.c.l.b16 %v854
        %v939 = vunpack.c.l.b16 %v855
        %v940 = vunpack.c.l.b16 %v857
        %v941 = vunpack.c.l.b16 %v858
        %v942 = vunpack.c.l.b16 %v860
        %v943 = vunpack.c.l.b16 %v861
        %v944 = vunpack.c.l.b16 %v863
        %v945 = vunpack.c.l.b16 %v864
        %v946 = vunpack.c.l.b16 %v866
        %v947 = vunpack.c.l.b16 %v867
        %v948 = vunpack.c.l.b16 %v869
        %v949 = vunpack.c.l.b16 %v870
        %v950 = vunpack.c.l.b16 %v872
        %v951 = vunpack.c.l.b16 %v873
        %v952 = vunpack.c.l.b16 %v875
        %v953 = vunpack.c.l.b16 %v876
        %v954 = vunpack.c.l.b16 %v878
        %v955 = vunpack.c.l.b16 %v879
        %v956 = vunpack.c.l.b16 %v881
        %v957 = vunpack.c.l.b16 %v882
        %v958 = vunpack.c.l.b16 %v884
        %v959 = vunpack.c.l.b16 %v885
        %v960 = vunpack.c.l.b16 %v887
        %v961 = vunpack.c.l.b16 %v888
        %v962 = vpack.c.b16 %v927, %v926
        %v963 = vpack.c.b16 %v929, %v928
        %v964 = vpack.c.b16 %v931, %v930
        %v965 = vpack.c.b16 %v933, %v932
        %v966 = vpack.c.b16 %v935, %v934
        %v967 = vpack.c.b16 %v937, %v936
        %v968 = vpack.c.b16 %v939, %v938
        %v969 = vpack.c.b16 %v941, %v940
        %v970 = vpack.c.b16 %v943, %v942
        %v971 = vpack.c.b16 %v945, %v944
        %v972 = vpack.c.b16 %v947, %v946
        %v973 = vpack.c.b16 %v949, %v948
        %v974 = vpack.c.b16 %v951, %v950
        %v975 = vpack.c.b16 %v953, %v952
        %v976 = vpack.c.b16 %v955, %v954
        %v977 = vpack.c.b16 %v957, %v956
        %v978 = vpack.c.b16 %v959, %v958
        %v979 = vpack.c.b16 %v961, %v960
        %v1016 = vunpack.c.l.b16 %v838
        %v1017 = vunpack.c.l.b16 %v841
        %v1018 = vunpack.c.l.b16 %v844
        %v1019 = vunpack.c.l.b16 %v847
        %v1020 = vunpack.c.l.b16 %v850
        %v1021 = vunpack.c.l.b16 %v853
        %v1022 = vunpack.c.l.b16 %v856
        %v1023 = vunpack.c.l.b16 %v859
        %v1024 = vunpack.c.l.b16 %v862
        %v1025 = vunpack.c.l.b16 %v865
        %v1026 = vunpack.c.l.b16 %v868
        %v1027 = vunpack.c.l.b16 %v871
        %v1028 = vunpack.c.l.b16 %v874
        %v1029 = vunpack.c.l.b16 %v877
        %v1030 = vunpack.c.l.b16 %v880
        %v1031 = vunpack.c.l.b16 %v883
        %v1032 = vunpack.c.l.b16 %v886
        %v1033 = vunpack.c.l.b16 %v889
        %v1034 = vpack.c.b16 %v1016, %v1016
        %v1035 = vpack.c.b16 %v1017, %v1017
        %v1036 = vpack.c.b16 %v1018, %v1018
        %v1037 = vpack.c.b16 %v1019, %v1019
        %v1038 = vpack.c.b16 %v1020, %v1020
        %v1039 = vpack.c.b16 %v1021, %v1021
        %v1040 = vpack.c.b16 %v1022, %v1022
        %v1041 = vpack.c.b16 %v1023, %v1023
        %v1042 = vpack.c.b16 %v1024, %v1024
        %v1043 = vpack.c.b16 %v1025, %v1025
        %v1044 = vpack.c.b16 %v1026, %v1026
        %v1045 = vpack.c.b16 %v1027, %v1027
        %v1046 = vpack.c.b16 %v1028, %v1028
        %v1047 = vpack.c.b16 %v1029, %v1029
        %v1048 = vpack.c.b16 %v1030, %v1030
        %v1049 = vpack.c.b16 %v1031, %v1031
        %v1050 = vpack.c.b16 %v1032, %v1032
        %v1051 = vpack.c.b16 %v1033, %v1033
        %v1053 = vshrl.u32 %v962, 16
        %v1055 = vshll.u32 %v962, 16
        %v1057 = vrot.slane %v1055, 1
        %v1058 = vor.u32 %v1053, %v1057
        %v1060 = vshll.u32 %v1034, 16
        %v1062 = vrot.slane %v1060, 1
        %v1063 = vsel %vm476, %v1058, %v1062
        %v1065 = vshrl.u32 %v963, 16
        %v1067 = vshll.u32 %v963, 16
        %v1069 = vrot.slane %v1067, 1
        %v1070 = vor.u32 %v1065, %v1069
        %v1072 = vshll.u32 %v1035, 16
        %v1074 = vrot.slane %v1072, 1
        %v1075 = vsel %vm476, %v1070, %v1074
        %v1077 = vshrl.u32 %v964, 16
        %v1079 = vshll.u32 %v964, 16
        %v1081 = vrot.slane %v1079, 1
        %v1082 = vor.u32 %v1077, %v1081
        %v1084 = vshll.u32 %v1036, 16
        %v1086 = vrot.slane %v1084, 1
        %v1087 = vsel %vm476, %v1082, %v1086
        %v1089 = vshrl.u32 %v965, 16
        %v1091 = vshll.u32 %v965, 16
        %v1093 = vrot.slane %v1091, 1
        %v1094 = vor.u32 %v1089, %v1093
        %v1096 = vshll.u32 %v1037, 16
        %v1098 = vrot.slane %v1096, 1
        %v1099 = vsel %vm476, %v1094, %v1098
        %v1101 = vshrl.u32 %v966, 16
        %v1103 = vshll.u32 %v966, 16
        %v1105 = vrot.slane %v1103, 1
        %v1106 = vor.u32 %v1101, %v1105
        %v1108 = vshll.u32 %v1038, 16
        %v1110 = vrot.slane %v1108, 1
        %v1111 = vsel %vm476, %v1106, %v1110
        %v1113 = vshrl.u32 %v967, 16
        %v1115 = vshll.u32 %v967, 16
        %v1117 = vrot.slane %v1115, 1
        %v1118 = vor.u32 %v1113, %v1117
        %v1120 = vshll.u32 %v1039, 16
        %v1122 = vrot.slane %v1120, 1
        %v1123 = vsel %vm476, %v1118, %v1122
        %v1125 = vshrl.u32 %v968, 16
        %v1127 = vshll.u32 %v968, 16
        %v1129 = vrot.slane %v1127, 1
        %v1130 = vor.u32 %v1125, %v1129
        %v1132 = vshll.u32 %v1040, 16
        %v1134 = vrot.slane %v1132, 1
        %v1135 = vsel %vm476, %v1130, %v1134
        %v1137 = vshrl.u32 %v969, 16
        %v1139 = vshll.u32 %v969, 16
        %v1141 = vrot.slane %v1139, 1
        %v1142 = vor.u32 %v1137, %v1141
        %v1144 = vshll.u32 %v1041, 16
        %v1146 = vrot.slane %v1144, 1
        %v1147 = vsel %vm476, %v1142, %v1146
        %v1149 = vshrl.u32 %v970, 16
        %v1151 = vshll.u32 %v970, 16
        %v1153 = vrot.slane %v1151, 1
        %v1154 = vor.u32 %v1149, %v1153
        %v1156 = vshll.u32 %v1042, 16
        %v1158 = vrot.slane %v1156, 1
        %v1159 = vsel %vm476, %v1154, %v1158
        %v1161 = vshrl.u32 %v971, 16
        %v1163 = vshll.u32 %v971, 16
        %v1165 = vrot.slane %v1163, 1
        %v1166 = vor.u32 %v1161, %v1165
        %v1168 = vshll.u32 %v1043, 16
        %v1170 = vrot.slane %v1168, 1
        %v1171 = vsel %vm476, %v1166, %v1170
        %v1173 = vshrl.u32 %v972, 16
        %v1175 = vshll.u32 %v972, 16
        %v1177 = vrot.slane %v1175, 1
        %v1178 = vor.u32 %v1173, %v1177
        %v1180 = vshll.u32 %v1044, 16
        %v1182 = vrot.slane %v1180, 1
        %v1183 = vsel %vm476, %v1178, %v1182
        %v1185 = vshrl.u32 %v973, 16
        %v1187 = vshll.u32 %v973, 16
        %v1189 = vrot.slane %v1187, 1
        %v1190 = vor.u32 %v1185, %v1189
        %v1192 = vshll.u32 %v1045, 16
        %v1194 = vrot.slane %v1192, 1
        %v1195 = vsel %vm476, %v1190, %v1194
        %v1197 = vshrl.u32 %v974, 16
        %v1199 = vshll.u32 %v974, 16
        %v1201 = vrot.slane %v1199, 1
        %v1202 = vor.u32 %v1197, %v1201
        %v1204 = vshll.u32 %v1046, 16
        %v1206 = vrot.slane %v1204, 1
        %v1207 = vsel %vm476, %v1202, %v1206
        %v1209 = vshrl.u32 %v975, 16
        %v1211 = vshll.u32 %v975, 16
        %v1213 = vrot.slane %v1211, 1
        %v1214 = vor.u32 %v1209, %v1213
        %v1216 = vshll.u32 %v1047, 16
        %v1218 = vrot.slane %v1216, 1
        %v1219 = vsel %vm476, %v1214, %v1218
        %v1221 = vshrl.u32 %v976, 16
        %v1223 = vshll.u32 %v976, 16
        %v1225 = vrot.slane %v1223, 1
        %v1226 = vor.u32 %v1221, %v1225
        %v1228 = vshll.u32 %v1048, 16
        %v1230 = vrot.slane %v1228, 1
        %v1231 = vsel %vm476, %v1226, %v1230
        %v1233 = vshrl.u32 %v977, 16
        %v1235 = vshll.u32 %v977, 16
        %v1237 = vrot.slane %v1235, 1
        %v1238 = vor.u32 %v1233, %v1237
        %v1240 = vshll.u32 %v1049, 16
        %v1242 = vrot.slane %v1240, 1
        %v1243 = vsel %vm476, %v1238, %v1242
        %v1245 = vshrl.u32 %v978, 16
        %v1247 = vshll.u32 %v978, 16
        %v1249 = vrot.slane %v1247, 1
        %v1250 = vor.u32 %v1245, %v1249
        %v1252 = vshll.u32 %v1050, 16
        %v1254 = vrot.slane %v1252, 1
        %v1255 = vsel %vm476, %v1250, %v1254
        %v1257 = vshrl.u32 %v979, 16
        %v1259 = vshll.u32 %v979, 16
        %v1261 = vrot.slane %v1259, 1
        %v1262 = vor.u32 %v1257, %v1261
        %v1264 = vshll.u32 %v1051, 16
        %v1266 = vrot.slane %v1264, 1
        %v1267 = vsel %vm476, %v1262, %v1266
        %v1286 = vrot.slane %v962, 1
        %v1287 = vrot.slane %v1034, 1
        %v1288 = vsel %vm711, %v1286, %v1287
        %v1289 = vrot.slane %v963, 1
        %v1290 = vrot.slane %v1035, 1
        %v1291 = vsel %vm711, %v1289, %v1290
        %v1292 = vrot.slane %v964, 1
        %v1293 = vrot.slane %v1036, 1
        %v1294 = vsel %vm711, %v1292, %v1293
        %v1295 = vrot.slane %v965, 1
        %v1296 = vrot.slane %v1037, 1
        %v1297 = vsel %vm711, %v1295, %v1296
        %v1298 = vrot.slane %v966, 1
        %v1299 = vrot.slane %v1038, 1
        %v1300 = vsel %vm711, %v1298, %v1299
        %v1301 = vrot.slane %v967, 1
        %v1302 = vrot.slane %v1039, 1
        %v1303 = vsel %vm711, %v1301, %v1302
        %v1304 = vrot.slane %v968, 1
        %v1305 = vrot.slane %v1040, 1
        %v1306 = vsel %vm711, %v1304, %v1305
        %v1307 = vrot.slane %v969, 1
        %v1308 = vrot.slane %v1041, 1
        %v1309 = vsel %vm711, %v1307, %v1308
        %v1310 = vrot.slane %v970, 1
        %v1311 = vrot.slane %v1042, 1
        %v1312 = vsel %vm711, %v1310, %v1311
        %v1313 = vrot.slane %v971, 1
        %v1314 = vrot.slane %v1043, 1
        %v1315 = vsel %vm711, %v1313, %v1314
        %v1316 = vrot.slane %v972, 1
        %v1317 = vrot.slane %v1044, 1
        %v1318 = vsel %vm711, %v1316, %v1317
        %v1319 = vrot.slane %v973, 1
        %v1320 = vrot.slane %v1045, 1
        %v1321 = vsel %vm711, %v1319, %v1320
        %v1322 = vrot.slane %v974, 1
        %v1323 = vrot.slane %v1046, 1
        %v1324 = vsel %vm711, %v1322, %v1323
        %v1325 = vrot.slane %v975, 1
        %v1326 = vrot.slane %v1047, 1
        %v1327 = vsel %vm711, %v1325, %v1326
        %v1328 = vrot.slane %v976, 1
        %v1329 = vrot.slane %v1048, 1
        %v1330 = vsel %vm711, %v1328, %v1329
        %v1331 = vrot.slane %v977, 1
        %v1332 = vrot.slane %v1049, 1
        %v1333 = vsel %vm711, %v1331, %v1332
        %v1334 = vrot.slane %v978, 1
        %v1335 = vrot.slane %v1050, 1
        %v1336 = vsel %vm711, %v1334, %v1335
        %v1337 = vrot.slane %v979, 1
        %v1338 = vrot.slane %v1051, 1
        %v1339 = vsel %vm711, %v1337, %v1338
        %s1358 = scalar_lea.vmem %s1, 192
        %v1359 = vld [vmem:[%s1358] sm:$0xf]
        %v1360 = vld [vmem:[%s1358 + $0x4] sm:$0xf]
        %v1361 = vld [vmem:[%s1358 + $0x8] sm:$0xf]
        %v1362 = vld [vmem:[%s1358 + $0xc] sm:$0xf]
        %v1363 = vld [vmem:[%s1358 + $0x10] sm:$0xf]
        %v1364 = vld [vmem:[%s1358 + $0x14] sm:$0xf]
        %v1365 = vld [vmem:[%s1358 + $0x18] sm:$0xf]
        %v1366 = vld [vmem:[%s1358 + $0x1c] sm:$0xf]
        %v1367 = vld [vmem:[%s1358 + $0x20] sm:$0xf]
        %v1368 = vld [vmem:[%s1358 + $0x24] sm:$0xf]
        %v1369 = vld [vmem:[%s1358 + $0x28] sm:$0xf]
        %v1370 = vld [vmem:[%s1358 + $0x2c] sm:$0xf]
        %v1371 = vld [vmem:[%s1358 + $0x30] sm:$0xf]
        %v1372 = vld [vmem:[%s1358 + $0x34] sm:$0xf]
        %v1373 = vld [vmem:[%s1358 + $0x38] sm:$0xf]
        %v1374 = vld [vmem:[%s1358 + $0x3c] sm:$0xf]
        %v1375 = vld [vmem:[%s1358 + $0x40] sm:$0xf]
        %v1376 = vld [vmem:[%s1358 + $0x44] sm:$0xf]
        %v1377 = vld [vmem:[%s1358 + $0x48] sm:$0xf]
        %v1378 = vld [vmem:[%s1358 + $0x4c] sm:$0xf]
        %v1379 = vld [vmem:[%s1358 + $0x50] sm:$0xf]
        %v1380 = vld [vmem:[%s1358 + $0x54] sm:$0xf]
        %v1381 = vld [vmem:[%s1358 + $0x58] sm:$0xf]
        %v1382 = vld [vmem:[%s1358 + $0x5c] sm:$0xf]
        %v1383 = vld [vmem:[%s1358 + $0x60] sm:$0xf]
        %v1384 = vld [vmem:[%s1358 + $0x64] sm:$0xf]
        %v1385 = vld [vmem:[%s1358 + $0x68] sm:$0xf]
        %v1386 = vld [vmem:[%s1358 + $0x6c] sm:$0xf]
        %v1387 = vld [vmem:[%s1358 + $0x70] sm:$0xf]
        %v1388 = vld [vmem:[%s1358 + $0x74] sm:$0xf]
        %v1389 = vld [vmem:[%s1358 + $0x78] sm:$0xf]
        %v1390 = vld [vmem:[%s1358 + $0x7c] sm:$0xf]
        %v1391 = vld [vmem:[%s1358 + $0x80] sm:$0xf]
        %v1392 = vld [vmem:[%s1358 + $0x84] sm:$0xf]
        %v1393 = vld [vmem:[%s1358 + $0x88] sm:$0xf]
        %v1394 = vld [vmem:[%s1358 + $0x8c] sm:$0xf]
        %v1395 = vld [vmem:[%s1358 + $0x90] sm:$0xf]
        %v1396 = vld [vmem:[%s1358 + $0x94] sm:$0xf]
        %v1397 = vld [vmem:[%s1358 + $0x98] sm:$0xf]
        %v1398 = vld [vmem:[%s1358 + $0x9c] sm:$0xf]
        %v1399 = vld [vmem:[%s1358 + $0xa0] sm:$0xf]
        %v1400 = vld [vmem:[%s1358 + $0xa4] sm:$0xf]
        %v1401 = vld [vmem:[%s1358 + $0xa8] sm:$0xf]
        %v1402 = vld [vmem:[%s1358 + $0xac] sm:$0xf]
        %v1403 = vld [vmem:[%s1358 + $0xb0] sm:$0xf]
        %v1404 = vld [vmem:[%s1358 + $0xb4] sm:$0xf]
        %v1405 = vld [vmem:[%s1358 + $0xb8] sm:$0xf]
        %v1406 = vld [vmem:[%s1358 + $0xbc] sm:$0xf]
        %v1455 = vunpack.c.l.b16 %v1359
        %v1456 = vunpack.c.l.b16 %v1360
        %v1457 = vunpack.c.l.b16 %v1361
        %v1458 = vunpack.c.l.b16 %v1362
        %v1459 = vunpack.c.l.b16 %v1363
        %v1460 = vunpack.c.l.b16 %v1364
        %v1461 = vunpack.c.l.b16 %v1365
        %v1462 = vunpack.c.l.b16 %v1366
        %v1463 = vunpack.c.l.b16 %v1367
        %v1464 = vunpack.c.l.b16 %v1368
        %v1465 = vunpack.c.l.b16 %v1369
        %v1466 = vunpack.c.l.b16 %v1370
        %v1467 = vunpack.c.l.b16 %v1371
        %v1468 = vunpack.c.l.b16 %v1372
        %v1469 = vunpack.c.l.b16 %v1373
        %v1470 = vunpack.c.l.b16 %v1374
        %v1471 = vunpack.c.l.b16 %v1375
        %v1472 = vunpack.c.l.b16 %v1376
        %v1473 = vunpack.c.l.b16 %v1377
        %v1474 = vunpack.c.l.b16 %v1378
        %v1475 = vunpack.c.l.b16 %v1379
        %v1476 = vunpack.c.l.b16 %v1380
        %v1477 = vunpack.c.l.b16 %v1381
        %v1478 = vunpack.c.l.b16 %v1382
        %v1479 = vunpack.c.l.b16 %v1383
        %v1480 = vunpack.c.l.b16 %v1384
        %v1481 = vunpack.c.l.b16 %v1385
        %v1482 = vunpack.c.l.b16 %v1386
        %v1483 = vunpack.c.l.b16 %v1387
        %v1484 = vunpack.c.l.b16 %v1388
        %v1485 = vunpack.c.l.b16 %v1389
        %v1486 = vunpack.c.l.b16 %v1390
        %v1487 = vunpack.c.l.b16 %v1391
        %v1488 = vunpack.c.l.b16 %v1392
        %v1489 = vunpack.c.l.b16 %v1393
        %v1490 = vunpack.c.l.b16 %v1394
        %v1491 = vunpack.c.l.b16 %v1395
        %v1492 = vunpack.c.l.b16 %v1396
        %v1493 = vunpack.c.l.b16 %v1397
        %v1494 = vunpack.c.l.b16 %v1398
        %v1495 = vunpack.c.l.b16 %v1399
        %v1496 = vunpack.c.l.b16 %v1400
        %v1497 = vunpack.c.l.b16 %v1401
        %v1498 = vunpack.c.l.b16 %v1402
        %v1499 = vunpack.c.l.b16 %v1403
        %v1500 = vunpack.c.l.b16 %v1404
        %v1501 = vunpack.c.l.b16 %v1405
        %v1502 = vunpack.c.l.b16 %v1406
        %v1503 = vpack.c.b16 %v1456, %v1455
        %v1504 = vpack.c.b16 %v1458, %v1457
        %v1505 = vpack.c.b16 %v1460, %v1459
        %v1506 = vpack.c.b16 %v1462, %v1461
        %v1507 = vpack.c.b16 %v1464, %v1463
        %v1508 = vpack.c.b16 %v1466, %v1465
        %v1509 = vpack.c.b16 %v1468, %v1467
        %v1510 = vpack.c.b16 %v1470, %v1469
        %v1511 = vpack.c.b16 %v1472, %v1471
        %v1512 = vpack.c.b16 %v1474, %v1473
        %v1513 = vpack.c.b16 %v1476, %v1475
        %v1514 = vpack.c.b16 %v1478, %v1477
        %v1515 = vpack.c.b16 %v1480, %v1479
        %v1516 = vpack.c.b16 %v1482, %v1481
        %v1517 = vpack.c.b16 %v1484, %v1483
        %v1518 = vpack.c.b16 %v1486, %v1485
        %v1519 = vpack.c.b16 %v1488, %v1487
        %v1520 = vpack.c.b16 %v1490, %v1489
        %v1521 = vpack.c.b16 %v1492, %v1491
        %v1522 = vpack.c.b16 %v1494, %v1493
        %v1523 = vpack.c.b16 %v1496, %v1495
        %v1524 = vpack.c.b16 %v1498, %v1497
        %v1525 = vpack.c.b16 %v1500, %v1499
        %v1526 = vpack.c.b16 %v1502, %v1501
        %1551 = vmatpush.bf16.msra.mxu0 %v1510
        %1552 = vmatpush.bf16.msra.mxu0 %v1509
        %1553 = vmatpush.bf16.msra.mxu0 %v1508
        %1554 = vmatpush.bf16.msra.mxu0 %v1507
        %1555 = vmatpush.bf16.msra.mxu0 %v1506
        %1556 = vmatpush.bf16.msra.mxu0 %v1505
        %1557 = vmatpush.bf16.msra.mxu0 %v1504
        %1558 = vmatpush.bf16.msra.mxu0 %v1503
        %1559 = vmatmul.bf16.gmra.mxu0 %v962
        %v1560 = vpop.f32.mrf.mxu0
        %v1561 = vadd.f32 0.0, %v1560
        %v1562 = vpop.f32.mrf.mxu0
        %v1563 = vadd.f32 0.0, %v1562
        %1564 = vmatmul.bf16.gmra.mxu0 %v963
        %v1565 = vpop.f32.mrf.mxu0
        %v1566 = vadd.f32 0.0, %v1565
        %v1567 = vpop.f32.mrf.mxu0
        %v1568 = vadd.f32 0.0, %v1567
        %1569 = vmatmul.bf16.gmra.mxu0 %v964
        %v1570 = vpop.f32.mrf.mxu0
        %v1571 = vadd.f32 0.0, %v1570
        %v1572 = vpop.f32.mrf.mxu0
        %v1573 = vadd.f32 0.0, %v1572
        %1574 = vmatmul.bf16.gmra.mxu0 %v965
        %v1575 = vpop.f32.mrf.mxu0
        %v1576 = vadd.f32 0.0, %v1575
        %v1577 = vpop.f32.mrf.mxu0
        %v1578 = vadd.f32 0.0, %v1577
        %1579 = vmatmul.bf16.gmra.mxu0 %v966
        %v1580 = vpop.f32.mrf.mxu0
        %v1581 = vadd.f32 0.0, %v1580
        %v1582 = vpop.f32.mrf.mxu0
        %v1583 = vadd.f32 0.0, %v1582
        %1584 = vmatmul.bf16.gmra.mxu0 %v967
        %v1585 = vpop.f32.mrf.mxu0
        %v1586 = vadd.f32 0.0, %v1585
        %v1587 = vpop.f32.mrf.mxu0
        %v1588 = vadd.f32 0.0, %v1587
        %1589 = vmatmul.bf16.gmra.mxu0 %v968
        %v1590 = vpop.f32.mrf.mxu0
        %v1591 = vadd.f32 0.0, %v1590
        %v1592 = vpop.f32.mrf.mxu0
        %v1593 = vadd.f32 0.0, %v1592
        %1594 = vmatmul.bf16.gmra.mxu0 %v969
        %v1595 = vpop.f32.mrf.mxu0
        %v1596 = vadd.f32 0.0, %v1595
        %v1597 = vpop.f32.mrf.mxu0
        %v1598 = vadd.f32 0.0, %v1597
        %1599 = vmatmul.bf16.gmra.mxu0 %v970
        %v1600 = vpop.f32.mrf.mxu0
        %v1601 = vadd.f32 0.0, %v1600
        %v1602 = vpop.f32.mrf.mxu0
        %v1603 = vadd.f32 0.0, %v1602
        %1604 = vmatmul.bf16.gmra.mxu0 %v971
        %v1605 = vpop.f32.mrf.mxu0
        %v1606 = vadd.f32 0.0, %v1605
        %v1607 = vpop.f32.mrf.mxu0
        %v1608 = vadd.f32 0.0, %v1607
        %1609 = vmatmul.bf16.gmra.mxu0 %v972
        %v1610 = vpop.f32.mrf.mxu0
        %v1611 = vadd.f32 0.0, %v1610
        %v1612 = vpop.f32.mrf.mxu0
        %v1613 = vadd.f32 0.0, %v1612
        %1614 = vmatmul.bf16.gmra.mxu0 %v973
        %v1615 = vpop.f32.mrf.mxu0
        %v1616 = vadd.f32 0.0, %v1615
        %v1617 = vpop.f32.mrf.mxu0
        %v1618 = vadd.f32 0.0, %v1617
        %1619 = vmatmul.bf16.gmra.mxu0 %v974
        %v1620 = vpop.f32.mrf.mxu0
        %v1621 = vadd.f32 0.0, %v1620
        %v1622 = vpop.f32.mrf.mxu0
        %v1623 = vadd.f32 0.0, %v1622
        %1624 = vmatmul.bf16.gmra.mxu0 %v975
        %v1625 = vpop.f32.mrf.mxu0
        %v1626 = vadd.f32 0.0, %v1625
        %v1627 = vpop.f32.mrf.mxu0
        %v1628 = vadd.f32 0.0, %v1627
        %1629 = vmatmul.bf16.gmra.mxu0 %v976
        %v1630 = vpop.f32.mrf.mxu0
        %v1631 = vadd.f32 0.0, %v1630
        %v1632 = vpop.f32.mrf.mxu0
        %v1633 = vadd.f32 0.0, %v1632
        %1634 = vmatmul.bf16.gmra.mxu0 %v977
        %v1635 = vpop.f32.mrf.mxu0
        %v1636 = vadd.f32 0.0, %v1635
        %v1637 = vpop.f32.mrf.mxu0
        %v1638 = vadd.f32 0.0, %v1637
        %1639 = vmatmul.bf16.gmra.mxu0 %v978
        %v1640 = vpop.f32.mrf.mxu0
        %v1641 = vadd.f32 0.0, %v1640
        %v1642 = vpop.f32.mrf.mxu0
        %v1643 = vadd.f32 0.0, %v1642
        %1644 = vmatmul.bf16.gmra.mxu0 %v979
        %v1645 = vpop.f32.mrf.mxu0
        %v1646 = vadd.f32 0.0, %v1645
        %v1647 = vpop.f32.mrf.mxu0
        %v1648 = vadd.f32 0.0, %v1647
        %1649 = vdwg.mxu0
        %1650 = vmatpush.bf16.msra.mxu0 %v1518
        %1651 = vmatpush.bf16.msra.mxu0 %v1517
        %1652 = vmatpush.bf16.msra.mxu0 %v1516
        %1653 = vmatpush.bf16.msra.mxu0 %v1515
        %1654 = vmatpush.bf16.msra.mxu0 %v1514
        %1655 = vmatpush.bf16.msra.mxu0 %v1513
        %1656 = vmatpush.bf16.msra.mxu0 %v1512
        %1657 = vmatpush.bf16.msra.mxu0 %v1511
        %1658 = vmatmul.bf16.gmra.mxu0 %v1063
        %v1659 = vpop.f32.mrf.mxu0
        %v1660 = vadd.f32 %v1561, %v1659
        %v1661 = vpop.f32.mrf.mxu0
        %v1662 = vadd.f32 %v1563, %v1661
        %1663 = vmatmul.bf16.gmra.mxu0 %v1075
        %v1664 = vpop.f32.mrf.mxu0
        %v1665 = vadd.f32 %v1566, %v1664
        %v1666 = vpop.f32.mrf.mxu0
        %v1667 = vadd.f32 %v1568, %v1666
        %1668 = vmatmul.bf16.gmra.mxu0 %v1087
        %v1669 = vpop.f32.mrf.mxu0
        %v1670 = vadd.f32 %v1571, %v1669
        %v1671 = vpop.f32.mrf.mxu0
        %v1672 = vadd.f32 %v1573, %v1671
        %1673 = vmatmul.bf16.gmra.mxu0 %v1099
        %v1674 = vpop.f32.mrf.mxu0
        %v1675 = vadd.f32 %v1576, %v1674
        %v1676 = vpop.f32.mrf.mxu0
        %v1677 = vadd.f32 %v1578, %v1676
        %1678 = vmatmul.bf16.gmra.mxu0 %v1111
        %v1679 = vpop.f32.mrf.mxu0
        %v1680 = vadd.f32 %v1581, %v1679
        %v1681 = vpop.f32.mrf.mxu0
        %v1682 = vadd.f32 %v1583, %v1681
        %1683 = vmatmul.bf16.gmra.mxu0 %v1123
        %v1684 = vpop.f32.mrf.mxu0
        %v1685 = vadd.f32 %v1586, %v1684
        %v1686 = vpop.f32.mrf.mxu0
        %v1687 = vadd.f32 %v1588, %v1686
        %1688 = vmatmul.bf16.gmra.mxu0 %v1135
        %v1689 = vpop.f32.mrf.mxu0
        %v1690 = vadd.f32 %v1591, %v1689
        %v1691 = vpop.f32.mrf.mxu0
        %v1692 = vadd.f32 %v1593, %v1691
        %1693 = vmatmul.bf16.gmra.mxu0 %v1147
        %v1694 = vpop.f32.mrf.mxu0
        %v1695 = vadd.f32 %v1596, %v1694
        %v1696 = vpop.f32.mrf.mxu0
        %v1697 = vadd.f32 %v1598, %v1696
        %1698 = vmatmul.bf16.gmra.mxu0 %v1159
        %v1699 = vpop.f32.mrf.mxu0
        %v1700 = vadd.f32 %v1601, %v1699
        %v1701 = vpop.f32.mrf.mxu0
        %v1702 = vadd.f32 %v1603, %v1701
        %1703 = vmatmul.bf16.gmra.mxu0 %v1171
        %v1704 = vpop.f32.mrf.mxu0
        %v1705 = vadd.f32 %v1606, %v1704
        %v1706 = vpop.f32.mrf.mxu0
        %v1707 = vadd.f32 %v1608, %v1706
        %1708 = vmatmul.bf16.gmra.mxu0 %v1183
        %v1709 = vpop.f32.mrf.mxu0
        %v1710 = vadd.f32 %v1611, %v1709
        %v1711 = vpop.f32.mrf.mxu0
        %v1712 = vadd.f32 %v1613, %v1711
        %1713 = vmatmul.bf16.gmra.mxu0 %v1195
        %v1714 = vpop.f32.mrf.mxu0
        %v1715 = vadd.f32 %v1616, %v1714
        %v1716 = vpop.f32.mrf.mxu0
        %v1717 = vadd.f32 %v1618, %v1716
        %1718 = vmatmul.bf16.gmra.mxu0 %v1207
        %v1719 = vpop.f32.mrf.mxu0
        %v1720 = vadd.f32 %v1621, %v1719
        %v1721 = vpop.f32.mrf.mxu0
        %v1722 = vadd.f32 %v1623, %v1721
        %1723 = vmatmul.bf16.gmra.mxu0 %v1219
        %v1724 = vpop.f32.mrf.mxu0
        %v1725 = vadd.f32 %v1626, %v1724
        %v1726 = vpop.f32.mrf.mxu0
        %v1727 = vadd.f32 %v1628, %v1726
        %1728 = vmatmul.bf16.gmra.mxu0 %v1231
        %v1729 = vpop.f32.mrf.mxu0
        %v1730 = vadd.f32 %v1631, %v1729
        %v1731 = vpop.f32.mrf.mxu0
        %v1732 = vadd.f32 %v1633, %v1731
        %1733 = vmatmul.bf16.gmra.mxu0 %v1243
        %v1734 = vpop.f32.mrf.mxu0
        %v1735 = vadd.f32 %v1636, %v1734
        %v1736 = vpop.f32.mrf.mxu0
        %v1737 = vadd.f32 %v1638, %v1736
        %1738 = vmatmul.bf16.gmra.mxu0 %v1255
        %v1739 = vpop.f32.mrf.mxu0
        %v1740 = vadd.f32 %v1641, %v1739
        %v1741 = vpop.f32.mrf.mxu0
        %v1742 = vadd.f32 %v1643, %v1741
        %1743 = vmatmul.bf16.gmra.mxu0 %v1267
        %v1744 = vpop.f32.mrf.mxu0
        %v1745 = vadd.f32 %v1646, %v1744
        %v1746 = vpop.f32.mrf.mxu0
        %v1747 = vadd.f32 %v1648, %v1746
        %1748 = vdwg.mxu0
        %1749 = vmatpush.bf16.msra.mxu0 %v1526
        %1750 = vmatpush.bf16.msra.mxu0 %v1525
        %1751 = vmatpush.bf16.msra.mxu0 %v1524
        %1752 = vmatpush.bf16.msra.mxu0 %v1523
        %1753 = vmatpush.bf16.msra.mxu0 %v1522
        %1754 = vmatpush.bf16.msra.mxu0 %v1521
        %1755 = vmatpush.bf16.msra.mxu0 %v1520
        %1756 = vmatpush.bf16.msra.mxu0 %v1519
        %1757 = vmatmul.bf16.gmra.mxu0 %v1288
        %v1758 = vpop.f32.mrf.mxu0
        %v1759 = vadd.f32 %v1660, %v1758
        %v1760 = vpop.f32.mrf.mxu0
        %v1761 = vadd.f32 %v1662, %v1760
        %1762 = vmatmul.bf16.gmra.mxu0 %v1291
        %v1763 = vpop.f32.mrf.mxu0
        %v1764 = vadd.f32 %v1665, %v1763
        %v1765 = vpop.f32.mrf.mxu0
        %v1766 = vadd.f32 %v1667, %v1765
        %1767 = vmatmul.bf16.gmra.mxu0 %v1294
        %v1768 = vpop.f32.mrf.mxu0
        %v1769 = vadd.f32 %v1670, %v1768
        %v1770 = vpop.f32.mrf.mxu0
        %v1771 = vadd.f32 %v1672, %v1770
        %1772 = vmatmul.bf16.gmra.mxu0 %v1297
        %v1773 = vpop.f32.mrf.mxu0
        %v1774 = vadd.f32 %v1675, %v1773
        %v1775 = vpop.f32.mrf.mxu0
        %v1776 = vadd.f32 %v1677, %v1775
        %1777 = vmatmul.bf16.gmra.mxu0 %v1300
        %v1778 = vpop.f32.mrf.mxu0
        %v1779 = vadd.f32 %v1680, %v1778
        %v1780 = vpop.f32.mrf.mxu0
        %v1781 = vadd.f32 %v1682, %v1780
        %1782 = vmatmul.bf16.gmra.mxu0 %v1303
        %v1783 = vpop.f32.mrf.mxu0
        %v1784 = vadd.f32 %v1685, %v1783
        %v1785 = vpop.f32.mrf.mxu0
        %v1786 = vadd.f32 %v1687, %v1785
        %1787 = vmatmul.bf16.gmra.mxu0 %v1306
        %v1788 = vpop.f32.mrf.mxu0
        %v1789 = vadd.f32 %v1690, %v1788
        %v1790 = vpop.f32.mrf.mxu0
        %v1791 = vadd.f32 %v1692, %v1790
        %1792 = vmatmul.bf16.gmra.mxu0 %v1309
        %v1793 = vpop.f32.mrf.mxu0
        %v1794 = vadd.f32 %v1695, %v1793
        %v1795 = vpop.f32.mrf.mxu0
        %v1796 = vadd.f32 %v1697, %v1795
        %1797 = vmatmul.bf16.gmra.mxu0 %v1312
        %v1798 = vpop.f32.mrf.mxu0
        %v1799 = vadd.f32 %v1700, %v1798
        %v1800 = vpop.f32.mrf.mxu0
        %v1801 = vadd.f32 %v1702, %v1800
        %1802 = vmatmul.bf16.gmra.mxu0 %v1315
        %v1803 = vpop.f32.mrf.mxu0
        %v1804 = vadd.f32 %v1705, %v1803
        %v1805 = vpop.f32.mrf.mxu0
        %v1806 = vadd.f32 %v1707, %v1805
        %1807 = vmatmul.bf16.gmra.mxu0 %v1318
        %v1808 = vpop.f32.mrf.mxu0
        %v1809 = vadd.f32 %v1710, %v1808
        %v1810 = vpop.f32.mrf.mxu0
        %v1811 = vadd.f32 %v1712, %v1810
        %1812 = vmatmul.bf16.gmra.mxu0 %v1321
        %v1813 = vpop.f32.mrf.mxu0
        %v1814 = vadd.f32 %v1715, %v1813
        %v1815 = vpop.f32.mrf.mxu0
        %v1816 = vadd.f32 %v1717, %v1815
        %1817 = vmatmul.bf16.gmra.mxu0 %v1324
        %v1818 = vpop.f32.mrf.mxu0
        %v1819 = vadd.f32 %v1720, %v1818
        %v1820 = vpop.f32.mrf.mxu0
        %v1821 = vadd.f32 %v1722, %v1820
        %1822 = vmatmul.bf16.gmra.mxu0 %v1327
        %v1823 = vpop.f32.mrf.mxu0
        %v1824 = vadd.f32 %v1725, %v1823
        %v1825 = vpop.f32.mrf.mxu0
        %v1826 = vadd.f32 %v1727, %v1825
        %1827 = vmatmul.bf16.gmra.mxu0 %v1330
        %v1828 = vpop.f32.mrf.mxu0
        %v1829 = vadd.f32 %v1730, %v1828
        %v1830 = vpop.f32.mrf.mxu0
        %v1831 = vadd.f32 %v1732, %v1830
        %1832 = vmatmul.bf16.gmra.mxu0 %v1333
        %v1833 = vpop.f32.mrf.mxu0
        %v1834 = vadd.f32 %v1735, %v1833
        %v1835 = vpop.f32.mrf.mxu0
        %v1836 = vadd.f32 %v1737, %v1835
        %1837 = vmatmul.bf16.gmra.mxu0 %v1336
        %v1838 = vpop.f32.mrf.mxu0
        %v1839 = vadd.f32 %v1740, %v1838
        %v1840 = vpop.f32.mrf.mxu0
        %v1841 = vadd.f32 %v1742, %v1840
        %1842 = vmatmul.bf16.gmra.mxu0 %v1339
        %v1843 = vpop.f32.mrf.mxu0
        %v1844 = vadd.f32 %v1745, %v1843
        %v1845 = vpop.f32.mrf.mxu0
        %v1846 = vadd.f32 %v1747, %v1845
        %1847 = vdwg.mxu0
        %v1896 = vunpack.c.l.b16 %v784
        %v1897 = vunpack.c.l.b16 %v785
        %v1898 = vunpack.c.l.b16 %v786
        %v1899 = vunpack.c.l.b16 %v787
        %v1900 = vunpack.c.l.b16 %v788
        %v1901 = vunpack.c.l.b16 %v789
        %v1902 = vunpack.c.l.b16 %v790
        %v1903 = vunpack.c.l.b16 %v791
        %v1904 = vunpack.c.l.b16 %v792
        %v1905 = vunpack.c.l.b16 %v793
        %v1906 = vunpack.c.l.b16 %v794
        %v1907 = vunpack.c.l.b16 %v795
        %v1908 = vunpack.c.l.b16 %v796
        %v1909 = vunpack.c.l.b16 %v797
        %v1910 = vunpack.c.l.b16 %v798
        %v1911 = vunpack.c.l.b16 %v799
        %v1912 = vunpack.c.l.b16 %v800
        %v1913 = vunpack.c.l.b16 %v801
        %v1914 = vunpack.c.l.b16 %v802
        %v1915 = vunpack.c.l.b16 %v803
        %v1916 = vunpack.c.l.b16 %v804
        %v1917 = vunpack.c.l.b16 %v805
        %v1918 = vunpack.c.l.b16 %v806
        %v1919 = vunpack.c.l.b16 %v807
        %v1920 = vunpack.c.l.b16 %v808
        %v1921 = vunpack.c.l.b16 %v809
        %v1922 = vunpack.c.l.b16 %v810
        %v1923 = vunpack.c.l.b16 %v811
        %v1924 = vunpack.c.l.b16 %v812
        %v1925 = vunpack.c.l.b16 %v813
        %v1926 = vunpack.c.l.b16 %v814
        %v1927 = vunpack.c.l.b16 %v815
        %v1928 = vunpack.c.l.b16 %v816
        %v1929 = vunpack.c.l.b16 %v817
        %v1930 = vunpack.c.l.b16 %v818
        %v1931 = vunpack.c.l.b16 %v819
        %v1932 = vunpack.c.l.b16 %v820
        %v1933 = vunpack.c.l.b16 %v821
        %v1934 = vunpack.c.l.b16 %v822
        %v1935 = vunpack.c.l.b16 %v823
        %v1936 = vunpack.c.l.b16 %v824
        %v1937 = vunpack.c.l.b16 %v825
        %v1938 = vunpack.c.l.b16 %v826
        %v1939 = vunpack.c.l.b16 %v827
        %v1940 = vunpack.c.l.b16 %v828
        %v1941 = vunpack.c.l.b16 %v829
        %v1942 = vunpack.c.l.b16 %v830
        %v1943 = vunpack.c.l.b16 %v831
        %v1944 = vpack.c.b16 %v1897, %v1896
        %v1945 = vpack.c.b16 %v1899, %v1898
        %v1946 = vpack.c.b16 %v1901, %v1900
        %v1947 = vpack.c.b16 %v1903, %v1902
        %v1948 = vpack.c.b16 %v1905, %v1904
        %v1949 = vpack.c.b16 %v1907, %v1906
        %v1950 = vpack.c.b16 %v1909, %v1908
        %v1951 = vpack.c.b16 %v1911, %v1910
        %v1952 = vpack.c.b16 %v1913, %v1912
        %v1953 = vpack.c.b16 %v1915, %v1914
        %v1954 = vpack.c.b16 %v1917, %v1916
        %v1955 = vpack.c.b16 %v1919, %v1918
        %v1956 = vpack.c.b16 %v1921, %v1920
        %v1957 = vpack.c.b16 %v1923, %v1922
        %v1958 = vpack.c.b16 %v1925, %v1924
        %v1959 = vpack.c.b16 %v1927, %v1926
        %v1960 = vpack.c.b16 %v1929, %v1928
        %v1961 = vpack.c.b16 %v1931, %v1930
        %v1962 = vpack.c.b16 %v1933, %v1932
        %v1963 = vpack.c.b16 %v1935, %v1934
        %v1964 = vpack.c.b16 %v1937, %v1936
        %v1965 = vpack.c.b16 %v1939, %v1938
        %v1966 = vpack.c.b16 %v1941, %v1940
        %v1967 = vpack.c.b16 %v1943, %v1942
        %1992 = vmatpush.bf16.msra.mxu0 %v1951
        %1993 = vmatpush.bf16.msra.mxu0 %v1950
        %1994 = vmatpush.bf16.msra.mxu0 %v1949
        %1995 = vmatpush.bf16.msra.mxu0 %v1948
        %1996 = vmatpush.bf16.msra.mxu0 %v1947
        %1997 = vmatpush.bf16.msra.mxu0 %v1946
        %1998 = vmatpush.bf16.msra.mxu0 %v1945
        %1999 = vmatpush.bf16.msra.mxu0 %v1944
        %2000 = vmatmul.bf16.gmra.mxu0 %v386
        %v2001 = vpop.f32.mrf.mxu0
        %v2002 = vadd.f32 %v1759, %v2001
        %v2003 = vpop.f32.mrf.mxu0
        %v2004 = vadd.f32 %v1761, %v2003
        %2005 = vmatmul.bf16.gmra.mxu0 %v387
        %v2006 = vpop.f32.mrf.mxu0
        %v2007 = vadd.f32 %v1764, %v2006
        %v2008 = vpop.f32.mrf.mxu0
        %v2009 = vadd.f32 %v1766, %v2008
        %2010 = vmatmul.bf16.gmra.mxu0 %v388
        %v2011 = vpop.f32.mrf.mxu0
        %v2012 = vadd.f32 %v1769, %v2011
        %v2013 = vpop.f32.mrf.mxu0
        %v2014 = vadd.f32 %v1771, %v2013
        %2015 = vmatmul.bf16.gmra.mxu0 %v389
        %v2016 = vpop.f32.mrf.mxu0
        %v2017 = vadd.f32 %v1774, %v2016
        %v2018 = vpop.f32.mrf.mxu0
        %v2019 = vadd.f32 %v1776, %v2018
        %2020 = vmatmul.bf16.gmra.mxu0 %v390
        %v2021 = vpop.f32.mrf.mxu0
        %v2022 = vadd.f32 %v1779, %v2021
        %v2023 = vpop.f32.mrf.mxu0
        %v2024 = vadd.f32 %v1781, %v2023
        %2025 = vmatmul.bf16.gmra.mxu0 %v391
        %v2026 = vpop.f32.mrf.mxu0
        %v2027 = vadd.f32 %v1784, %v2026
        %v2028 = vpop.f32.mrf.mxu0
        %v2029 = vadd.f32 %v1786, %v2028
        %2030 = vmatmul.bf16.gmra.mxu0 %v392
        %v2031 = vpop.f32.mrf.mxu0
        %v2032 = vadd.f32 %v1789, %v2031
        %v2033 = vpop.f32.mrf.mxu0
        %v2034 = vadd.f32 %v1791, %v2033
        %2035 = vmatmul.bf16.gmra.mxu0 %v393
        %v2036 = vpop.f32.mrf.mxu0
        %v2037 = vadd.f32 %v1794, %v2036
        %v2038 = vpop.f32.mrf.mxu0
        %v2039 = vadd.f32 %v1796, %v2038
        %2040 = vmatmul.bf16.gmra.mxu0 %v394
        %v2041 = vpop.f32.mrf.mxu0
        %v2042 = vadd.f32 %v1799, %v2041
        %v2043 = vpop.f32.mrf.mxu0
        %v2044 = vadd.f32 %v1801, %v2043
        %2045 = vmatmul.bf16.gmra.mxu0 %v395
        %v2046 = vpop.f32.mrf.mxu0
        %v2047 = vadd.f32 %v1804, %v2046
        %v2048 = vpop.f32.mrf.mxu0
        %v2049 = vadd.f32 %v1806, %v2048
        %2050 = vmatmul.bf16.gmra.mxu0 %v396
        %v2051 = vpop.f32.mrf.mxu0
        %v2052 = vadd.f32 %v1809, %v2051
        %v2053 = vpop.f32.mrf.mxu0
        %v2054 = vadd.f32 %v1811, %v2053
        %2055 = vmatmul.bf16.gmra.mxu0 %v397
        %v2056 = vpop.f32.mrf.mxu0
        %v2057 = vadd.f32 %v1814, %v2056
        %v2058 = vpop.f32.mrf.mxu0
        %v2059 = vadd.f32 %v1816, %v2058
        %2060 = vmatmul.bf16.gmra.mxu0 %v398
        %v2061 = vpop.f32.mrf.mxu0
        %v2062 = vadd.f32 %v1819, %v2061
        %v2063 = vpop.f32.mrf.mxu0
        %v2064 = vadd.f32 %v1821, %v2063
        %2065 = vmatmul.bf16.gmra.mxu0 %v399
        %v2066 = vpop.f32.mrf.mxu0
        %v2067 = vadd.f32 %v1824, %v2066
        %v2068 = vpop.f32.mrf.mxu0
        %v2069 = vadd.f32 %v1826, %v2068
        %2070 = vmatmul.bf16.gmra.mxu0 %v400
        %v2071 = vpop.f32.mrf.mxu0
        %v2072 = vadd.f32 %v1829, %v2071
        %v2073 = vpop.f32.mrf.mxu0
        %v2074 = vadd.f32 %v1831, %v2073
        %2075 = vmatmul.bf16.gmra.mxu0 %v401
        %v2076 = vpop.f32.mrf.mxu0
        %v2077 = vadd.f32 %v1834, %v2076
        %v2078 = vpop.f32.mrf.mxu0
        %v2079 = vadd.f32 %v1836, %v2078
        %2080 = vmatmul.bf16.gmra.mxu0 %v402
        %v2081 = vpop.f32.mrf.mxu0
        %v2082 = vadd.f32 %v1839, %v2081
        %v2083 = vpop.f32.mrf.mxu0
        %v2084 = vadd.f32 %v1841, %v2083
        %2085 = vmatmul.bf16.gmra.mxu0 %v403
        %v2086 = vpop.f32.mrf.mxu0
        %v2087 = vadd.f32 %v1844, %v2086
        %v2088 = vpop.f32.mrf.mxu0
        %v2089 = vadd.f32 %v1846, %v2088
        %2090 = vdwg.mxu0
        %2091 = vmatpush.bf16.msra.mxu0 %v1959
        %2092 = vmatpush.bf16.msra.mxu0 %v1958
        %2093 = vmatpush.bf16.msra.mxu0 %v1957
        %2094 = vmatpush.bf16.msra.mxu0 %v1956
        %2095 = vmatpush.bf16.msra.mxu0 %v1955
        %2096 = vmatpush.bf16.msra.mxu0 %v1954
        %2097 = vmatpush.bf16.msra.mxu0 %v1953
        %2098 = vmatpush.bf16.msra.mxu0 %v1952
        %2099 = vmatmul.bf16.gmra.mxu0 %v488
        %v2100 = vpop.f32.mrf.mxu0
        %v2101 = vadd.f32 %v2002, %v2100
        %v2102 = vpop.f32.mrf.mxu0
        %v2103 = vadd.f32 %v2004, %v2102
        %2104 = vmatmul.bf16.gmra.mxu0 %v500
        %v2105 = vpop.f32.mrf.mxu0
        %v2106 = vadd.f32 %v2007, %v2105
        %v2107 = vpop.f32.mrf.mxu0
        %v2108 = vadd.f32 %v2009, %v2107
        %2109 = vmatmul.bf16.gmra.mxu0 %v512
        %v2110 = vpop.f32.mrf.mxu0
        %v2111 = vadd.f32 %v2012, %v2110
        %v2112 = vpop.f32.mrf.mxu0
        %v2113 = vadd.f32 %v2014, %v2112
        %2114 = vmatmul.bf16.gmra.mxu0 %v524
        %v2115 = vpop.f32.mrf.mxu0
        %v2116 = vadd.f32 %v2017, %v2115
        %v2117 = vpop.f32.mrf.mxu0
        %v2118 = vadd.f32 %v2019, %v2117
        %2119 = vmatmul.bf16.gmra.mxu0 %v536
        %v2120 = vpop.f32.mrf.mxu0
        %v2121 = vadd.f32 %v2022, %v2120
        %v2122 = vpop.f32.mrf.mxu0
        %v2123 = vadd.f32 %v2024, %v2122
        %2124 = vmatmul.bf16.gmra.mxu0 %v548
        %v2125 = vpop.f32.mrf.mxu0
        %v2126 = vadd.f32 %v2027, %v2125
        %v2127 = vpop.f32.mrf.mxu0
        %v2128 = vadd.f32 %v2029, %v2127
        %2129 = vmatmul.bf16.gmra.mxu0 %v560
        %v2130 = vpop.f32.mrf.mxu0
        %v2131 = vadd.f32 %v2032, %v2130
        %v2132 = vpop.f32.mrf.mxu0
        %v2133 = vadd.f32 %v2034, %v2132
        %2134 = vmatmul.bf16.gmra.mxu0 %v572
        %v2135 = vpop.f32.mrf.mxu0
        %v2136 = vadd.f32 %v2037, %v2135
        %v2137 = vpop.f32.mrf.mxu0
        %v2138 = vadd.f32 %v2039, %v2137
        %2139 = vmatmul.bf16.gmra.mxu0 %v584
        %v2140 = vpop.f32.mrf.mxu0
        %v2141 = vadd.f32 %v2042, %v2140
        %v2142 = vpop.f32.mrf.mxu0
        %v2143 = vadd.f32 %v2044, %v2142
        %2144 = vmatmul.bf16.gmra.mxu0 %v596
        %v2145 = vpop.f32.mrf.mxu0
        %v2146 = vadd.f32 %v2047, %v2145
        %v2147 = vpop.f32.mrf.mxu0
        %v2148 = vadd.f32 %v2049, %v2147
        %2149 = vmatmul.bf16.gmra.mxu0 %v608
        %v2150 = vpop.f32.mrf.mxu0
        %v2151 = vadd.f32 %v2052, %v2150
        %v2152 = vpop.f32.mrf.mxu0
        %v2153 = vadd.f32 %v2054, %v2152
        %2154 = vmatmul.bf16.gmra.mxu0 %v620
        %v2155 = vpop.f32.mrf.mxu0
        %v2156 = vadd.f32 %v2057, %v2155
        %v2157 = vpop.f32.mrf.mxu0
        %v2158 = vadd.f32 %v2059, %v2157
        %2159 = vmatmul.bf16.gmra.mxu0 %v632
        %v2160 = vpop.f32.mrf.mxu0
        %v2161 = vadd.f32 %v2062, %v2160
        %v2162 = vpop.f32.mrf.mxu0
        %v2163 = vadd.f32 %v2064, %v2162
        %2164 = vmatmul.bf16.gmra.mxu0 %v644
        %v2165 = vpop.f32.mrf.mxu0
        %v2166 = vadd.f32 %v2067, %v2165
        %v2167 = vpop.f32.mrf.mxu0
        %v2168 = vadd.f32 %v2069, %v2167
        %2169 = vmatmul.bf16.gmra.mxu0 %v656
        %v2170 = vpop.f32.mrf.mxu0
        %v2171 = vadd.f32 %v2072, %v2170
        %v2172 = vpop.f32.mrf.mxu0
        %v2173 = vadd.f32 %v2074, %v2172
        %2174 = vmatmul.bf16.gmra.mxu0 %v668
        %v2175 = vpop.f32.mrf.mxu0
        %v2176 = vadd.f32 %v2077, %v2175
        %v2177 = vpop.f32.mrf.mxu0
        %v2178 = vadd.f32 %v2079, %v2177
        %2179 = vmatmul.bf16.gmra.mxu0 %v680
        %v2180 = vpop.f32.mrf.mxu0
        %v2181 = vadd.f32 %v2082, %v2180
        %v2182 = vpop.f32.mrf.mxu0
        %v2183 = vadd.f32 %v2084, %v2182
        %2184 = vmatmul.bf16.gmra.mxu0 %v692
        %v2185 = vpop.f32.mrf.mxu0
        %v2186 = vadd.f32 %v2087, %v2185
        %v2187 = vpop.f32.mrf.mxu0
        %v2188 = vadd.f32 %v2089, %v2187
        %2189 = vdwg.mxu0
        %2190 = vmatpush.bf16.msra.mxu0 %v1967
        %2191 = vmatpush.bf16.msra.mxu0 %v1966
        %2192 = vmatpush.bf16.msra.mxu0 %v1965
        %2193 = vmatpush.bf16.msra.mxu0 %v1964
        %2194 = vmatpush.bf16.msra.mxu0 %v1963
        %2195 = vmatpush.bf16.msra.mxu0 %v1962
        %2196 = vmatpush.bf16.msra.mxu0 %v1961
        %2197 = vmatpush.bf16.msra.mxu0 %v1960
        %2198 = vmatmul.bf16.gmra.mxu0 %v714
        %v2199 = vpop.f32.mrf.mxu0
        %v2200 = vadd.f32 %v2101, %v2199
        %v2201 = vpop.f32.mrf.mxu0
        %v2202 = vadd.f32 %v2103, %v2201
        %2203 = vmatmul.bf16.gmra.mxu0 %v717
        %v2204 = vpop.f32.mrf.mxu0
        %v2205 = vadd.f32 %v2106, %v2204
        %v2206 = vpop.f32.mrf.mxu0
        %v2207 = vadd.f32 %v2108, %v2206
        %2208 = vmatmul.bf16.gmra.mxu0 %v720
        %v2209 = vpop.f32.mrf.mxu0
        %v2210 = vadd.f32 %v2111, %v2209
        %v2211 = vpop.f32.mrf.mxu0
        %v2212 = vadd.f32 %v2113, %v2211
        %2213 = vmatmul.bf16.gmra.mxu0 %v723
        %v2214 = vpop.f32.mrf.mxu0
        %v2215 = vadd.f32 %v2116, %v2214
        %v2216 = vpop.f32.mrf.mxu0
        %v2217 = vadd.f32 %v2118, %v2216
        %2218 = vmatmul.bf16.gmra.mxu0 %v726
        %v2219 = vpop.f32.mrf.mxu0
        %v2220 = vadd.f32 %v2121, %v2219
        %v2221 = vpop.f32.mrf.mxu0
        %v2222 = vadd.f32 %v2123, %v2221
        %2223 = vmatmul.bf16.gmra.mxu0 %v729
        %v2224 = vpop.f32.mrf.mxu0
        %v2225 = vadd.f32 %v2126, %v2224
        %v2226 = vpop.f32.mrf.mxu0
        %v2227 = vadd.f32 %v2128, %v2226
        %2228 = vmatmul.bf16.gmra.mxu0 %v732
        %v2229 = vpop.f32.mrf.mxu0
        %v2230 = vadd.f32 %v2131, %v2229
        %v2231 = vpop.f32.mrf.mxu0
        %v2232 = vadd.f32 %v2133, %v2231
        %2233 = vmatmul.bf16.gmra.mxu0 %v735
        %v2234 = vpop.f32.mrf.mxu0
        %v2235 = vadd.f32 %v2136, %v2234
        %v2236 = vpop.f32.mrf.mxu0
        %v2237 = vadd.f32 %v2138, %v2236
        %2238 = vmatmul.bf16.gmra.mxu0 %v738
        %v2239 = vpop.f32.mrf.mxu0
        %v2240 = vadd.f32 %v2141, %v2239
        %v2241 = vpop.f32.mrf.mxu0
        %v2242 = vadd.f32 %v2143, %v2241
        %2243 = vmatmul.bf16.gmra.mxu0 %v741
        %v2244 = vpop.f32.mrf.mxu0
        %v2245 = vadd.f32 %v2146, %v2244
        %v2246 = vpop.f32.mrf.mxu0
        %v2247 = vadd.f32 %v2148, %v2246
        %2248 = vmatmul.bf16.gmra.mxu0 %v744
        %v2249 = vpop.f32.mrf.mxu0
        %v2250 = vadd.f32 %v2151, %v2249
        %v2251 = vpop.f32.mrf.mxu0
        %v2252 = vadd.f32 %v2153, %v2251
        %2253 = vmatmul.bf16.gmra.mxu0 %v747
        %v2254 = vpop.f32.mrf.mxu0
        %v2255 = vadd.f32 %v2156, %v2254
        %v2256 = vpop.f32.mrf.mxu0
        %v2257 = vadd.f32 %v2158, %v2256
        %2258 = vmatmul.bf16.gmra.mxu0 %v750
        %v2259 = vpop.f32.mrf.mxu0
        %v2260 = vadd.f32 %v2161, %v2259
        %v2261 = vpop.f32.mrf.mxu0
        %v2262 = vadd.f32 %v2163, %v2261
        %2263 = vmatmul.bf16.gmra.mxu0 %v753
        %v2264 = vpop.f32.mrf.mxu0
        %v2265 = vadd.f32 %v2166, %v2264
        %v2266 = vpop.f32.mrf.mxu0
        %v2267 = vadd.f32 %v2168, %v2266
        %2268 = vmatmul.bf16.gmra.mxu0 %v756
        %v2269 = vpop.f32.mrf.mxu0
        %v2270 = vadd.f32 %v2171, %v2269
        %v2271 = vpop.f32.mrf.mxu0
        %v2272 = vadd.f32 %v2173, %v2271
        %2273 = vmatmul.bf16.gmra.mxu0 %v759
        %v2274 = vpop.f32.mrf.mxu0
        %v2275 = vadd.f32 %v2176, %v2274
        %v2276 = vpop.f32.mrf.mxu0
        %v2277 = vadd.f32 %v2178, %v2276
        %2278 = vmatmul.bf16.gmra.mxu0 %v762
        %v2279 = vpop.f32.mrf.mxu0
        %v2280 = vadd.f32 %v2181, %v2279
        %v2281 = vpop.f32.mrf.mxu0
        %v2282 = vadd.f32 %v2183, %v2281
        %2283 = vmatmul.bf16.gmra.mxu0 %v765
        %v2284 = vpop.f32.mrf.mxu0
        %v2285 = vadd.f32 %v2186, %v2284
        %v2286 = vpop.f32.mrf.mxu0
        %v2287 = vadd.f32 %v2188, %v2286
        %2288 = vdwg.mxu0
        %s2289 = sadd.s32 %s256, 2
        %s2290 = smul.u32 %s2289, 3
        %s2291 = smul.addr %s2290, 4
        %s2292 = scalar_lea.vmem %s253, %s2291
        %v2293 = vld [vmem:[%s2292] sm:$0xf]
        %v2294 = vld [vmem:[%s2292 + $0x4] sm:$0xf]
        %v2295 = vld [vmem:[%s2292 + $0x8] sm:$0x1]
        %v2296 = vld [vmem:[%s2292 + $0xc] sm:$0xf]
        %v2297 = vld [vmem:[%s2292 + $0x10] sm:$0xf]
        %v2298 = vld [vmem:[%s2292 + $0x14] sm:$0x1]
        %v2299 = vld [vmem:[%s2292 + $0x18] sm:$0xf]
        %v2300 = vld [vmem:[%s2292 + $0x1c] sm:$0xf]
        %v2301 = vld [vmem:[%s2292 + $0x20] sm:$0x1]
        %v2302 = vld [vmem:[%s2292 + $0x24] sm:$0xf]
        %v2303 = vld [vmem:[%s2292 + $0x28] sm:$0xf]
        %v2304 = vld [vmem:[%s2292 + $0x2c] sm:$0x1]
        %v2305 = vld [vmem:[%s2292 + $0x30] sm:$0xf]
        %v2306 = vld [vmem:[%s2292 + $0x34] sm:$0xf]
        %v2307 = vld [vmem:[%s2292 + $0x38] sm:$0x1]
        %v2308 = vld [vmem:[%s2292 + $0x3c] sm:$0xf]
        %v2309 = vld [vmem:[%s2292 + $0x40] sm:$0xf]
        %v2310 = vld [vmem:[%s2292 + $0x44] sm:$0x1]
        %v2311 = vld [vmem:[%s2292 + $0x48] sm:$0xf]
        %v2312 = vld [vmem:[%s2292 + $0x4c] sm:$0xf]
        %v2313 = vld [vmem:[%s2292 + $0x50] sm:$0x1]
        %v2314 = vld [vmem:[%s2292 + $0x54] sm:$0xf]
        %v2315 = vld [vmem:[%s2292 + $0x58] sm:$0xf]
        %v2316 = vld [vmem:[%s2292 + $0x5c] sm:$0x1]
        %v2317 = vld [vmem:[%s2292 + $0x60] sm:$0xf]
        %v2318 = vld [vmem:[%s2292 + $0x64] sm:$0xf]
        %v2319 = vld [vmem:[%s2292 + $0x68] sm:$0x1]
        %v2320 = vld [vmem:[%s2292 + $0x6c] sm:$0xf]
        %v2321 = vld [vmem:[%s2292 + $0x70] sm:$0xf]
        %v2322 = vld [vmem:[%s2292 + $0x74] sm:$0x1]
        %v2323 = vld [vmem:[%s2292 + $0x78] sm:$0xf]
        %v2324 = vld [vmem:[%s2292 + $0x7c] sm:$0xf]
        %v2325 = vld [vmem:[%s2292 + $0x80] sm:$0x1]
        %v2326 = vld [vmem:[%s2292 + $0x84] sm:$0xf]
        %v2327 = vld [vmem:[%s2292 + $0x88] sm:$0xf]
        %v2328 = vld [vmem:[%s2292 + $0x8c] sm:$0x1]
        %v2329 = vld [vmem:[%s2292 + $0x90] sm:$0xf]
        %v2330 = vld [vmem:[%s2292 + $0x94] sm:$0xf]
        %v2331 = vld [vmem:[%s2292 + $0x98] sm:$0x1]
        %v2332 = vld [vmem:[%s2292 + $0x9c] sm:$0xf]
        %v2333 = vld [vmem:[%s2292 + $0xa0] sm:$0xf]
        %v2334 = vld [vmem:[%s2292 + $0xa4] sm:$0x1]
        %v2335 = vld [vmem:[%s2292 + $0xa8] sm:$0xf]
        %v2336 = vld [vmem:[%s2292 + $0xac] sm:$0xf]
        %v2337 = vld [vmem:[%s2292 + $0xb0] sm:$0x1]
        %v2338 = vld [vmem:[%s2292 + $0xb4] sm:$0xf]
        %v2339 = vld [vmem:[%s2292 + $0xb8] sm:$0xf]
        %v2340 = vld [vmem:[%s2292 + $0xbc] sm:$0x1]
        %v2341 = vld [vmem:[%s2292 + $0xc0] sm:$0xf]
        %v2342 = vld [vmem:[%s2292 + $0xc4] sm:$0xf]
        %v2343 = vld [vmem:[%s2292 + $0xc8] sm:$0x1]
        %v2344 = vld [vmem:[%s2292 + $0xcc] sm:$0xf]
        %v2345 = vld [vmem:[%s2292 + $0xd0] sm:$0xf]
        %v2346 = vld [vmem:[%s2292 + $0xd4] sm:$0x1]
        %v2383 = vunpack.c.l.b16 %v2293
        %v2384 = vunpack.c.l.b16 %v2294
        %v2385 = vunpack.c.l.b16 %v2296
        %v2386 = vunpack.c.l.b16 %v2297
        %v2387 = vunpack.c.l.b16 %v2299
        %v2388 = vunpack.c.l.b16 %v2300
        %v2389 = vunpack.c.l.b16 %v2302
        %v2390 = vunpack.c.l.b16 %v2303
        %v2391 = vunpack.c.l.b16 %v2305
        %v2392 = vunpack.c.l.b16 %v2306
        %v2393 = vunpack.c.l.b16 %v2308
        %v2394 = vunpack.c.l.b16 %v2309
        %v2395 = vunpack.c.l.b16 %v2311
        %v2396 = vunpack.c.l.b16 %v2312
        %v2397 = vunpack.c.l.b16 %v2314
        %v2398 = vunpack.c.l.b16 %v2315
        %v2399 = vunpack.c.l.b16 %v2317
        %v2400 = vunpack.c.l.b16 %v2318
        %v2401 = vunpack.c.l.b16 %v2320
        %v2402 = vunpack.c.l.b16 %v2321
        %v2403 = vunpack.c.l.b16 %v2323
        %v2404 = vunpack.c.l.b16 %v2324
        %v2405 = vunpack.c.l.b16 %v2326
        %v2406 = vunpack.c.l.b16 %v2327
        %v2407 = vunpack.c.l.b16 %v2329
        %v2408 = vunpack.c.l.b16 %v2330
        %v2409 = vunpack.c.l.b16 %v2332
        %v2410 = vunpack.c.l.b16 %v2333
        %v2411 = vunpack.c.l.b16 %v2335
        %v2412 = vunpack.c.l.b16 %v2336
        %v2413 = vunpack.c.l.b16 %v2338
        %v2414 = vunpack.c.l.b16 %v2339
        %v2415 = vunpack.c.l.b16 %v2341
        %v2416 = vunpack.c.l.b16 %v2342
        %v2417 = vunpack.c.l.b16 %v2344
        %v2418 = vunpack.c.l.b16 %v2345
        %v2419 = vpack.c.b16 %v2384, %v2383
        %v2420 = vpack.c.b16 %v2386, %v2385
        %v2421 = vpack.c.b16 %v2388, %v2387
        %v2422 = vpack.c.b16 %v2390, %v2389
        %v2423 = vpack.c.b16 %v2392, %v2391
        %v2424 = vpack.c.b16 %v2394, %v2393
        %v2425 = vpack.c.b16 %v2396, %v2395
        %v2426 = vpack.c.b16 %v2398, %v2397
        %v2427 = vpack.c.b16 %v2400, %v2399
        %v2428 = vpack.c.b16 %v2402, %v2401
        %v2429 = vpack.c.b16 %v2404, %v2403
        %v2430 = vpack.c.b16 %v2406, %v2405
        %v2431 = vpack.c.b16 %v2408, %v2407
        %v2432 = vpack.c.b16 %v2410, %v2409
        %v2433 = vpack.c.b16 %v2412, %v2411
        %v2434 = vpack.c.b16 %v2414, %v2413
        %v2435 = vpack.c.b16 %v2416, %v2415
        %v2436 = vpack.c.b16 %v2418, %v2417
        %v2473 = vunpack.c.l.b16 %v2295
        %v2474 = vunpack.c.l.b16 %v2298
        %v2475 = vunpack.c.l.b16 %v2301
        %v2476 = vunpack.c.l.b16 %v2304
        %v2477 = vunpack.c.l.b16 %v2307
        %v2478 = vunpack.c.l.b16 %v2310
        %v2479 = vunpack.c.l.b16 %v2313
        %v2480 = vunpack.c.l.b16 %v2316
        %v2481 = vunpack.c.l.b16 %v2319
        %v2482 = vunpack.c.l.b16 %v2322
        %v2483 = vunpack.c.l.b16 %v2325
        %v2484 = vunpack.c.l.b16 %v2328
        %v2485 = vunpack.c.l.b16 %v2331
        %v2486 = vunpack.c.l.b16 %v2334
        %v2487 = vunpack.c.l.b16 %v2337
        %v2488 = vunpack.c.l.b16 %v2340
        %v2489 = vunpack.c.l.b16 %v2343
        %v2490 = vunpack.c.l.b16 %v2346
        %v2491 = vpack.c.b16 %v2473, %v2473
        %v2492 = vpack.c.b16 %v2474, %v2474
        %v2493 = vpack.c.b16 %v2475, %v2475
        %v2494 = vpack.c.b16 %v2476, %v2476
        %v2495 = vpack.c.b16 %v2477, %v2477
        %v2496 = vpack.c.b16 %v2478, %v2478
        %v2497 = vpack.c.b16 %v2479, %v2479
        %v2498 = vpack.c.b16 %v2480, %v2480
        %v2499 = vpack.c.b16 %v2481, %v2481
        %v2500 = vpack.c.b16 %v2482, %v2482
        %v2501 = vpack.c.b16 %v2483, %v2483
        %v2502 = vpack.c.b16 %v2484, %v2484
        %v2503 = vpack.c.b16 %v2485, %v2485
        %v2504 = vpack.c.b16 %v2486, %v2486
        %v2505 = vpack.c.b16 %v2487, %v2487
        %v2506 = vpack.c.b16 %v2488, %v2488
        %v2507 = vpack.c.b16 %v2489, %v2489
        %v2508 = vpack.c.b16 %v2490, %v2490
        %v2510 = vshrl.u32 %v2419, 16
        %v2512 = vshll.u32 %v2419, 16
        %v2514 = vrot.slane %v2512, 1
        %v2515 = vor.u32 %v2510, %v2514
        %v2517 = vshll.u32 %v2491, 16
        %v2519 = vrot.slane %v2517, 1
        %v2520 = vsel %vm476, %v2515, %v2519
        %v2522 = vshrl.u32 %v2420, 16
        %v2524 = vshll.u32 %v2420, 16
        %v2526 = vrot.slane %v2524, 1
        %v2527 = vor.u32 %v2522, %v2526
        %v2529 = vshll.u32 %v2492, 16
        %v2531 = vrot.slane %v2529, 1
        %v2532 = vsel %vm476, %v2527, %v2531
        %v2534 = vshrl.u32 %v2421, 16
        %v2536 = vshll.u32 %v2421, 16
        %v2538 = vrot.slane %v2536, 1
        %v2539 = vor.u32 %v2534, %v2538
        %v2541 = vshll.u32 %v2493, 16
        %v2543 = vrot.slane %v2541, 1
        %v2544 = vsel %vm476, %v2539, %v2543
        %v2546 = vshrl.u32 %v2422, 16
        %v2548 = vshll.u32 %v2422, 16
        %v2550 = vrot.slane %v2548, 1
        %v2551 = vor.u32 %v2546, %v2550
        %v2553 = vshll.u32 %v2494, 16
        %v2555 = vrot.slane %v2553, 1
        %v2556 = vsel %vm476, %v2551, %v2555
        %v2558 = vshrl.u32 %v2423, 16
        %v2560 = vshll.u32 %v2423, 16
        %v2562 = vrot.slane %v2560, 1
        %v2563 = vor.u32 %v2558, %v2562
        %v2565 = vshll.u32 %v2495, 16
        %v2567 = vrot.slane %v2565, 1
        %v2568 = vsel %vm476, %v2563, %v2567
        %v2570 = vshrl.u32 %v2424, 16
        %v2572 = vshll.u32 %v2424, 16
        %v2574 = vrot.slane %v2572, 1
        %v2575 = vor.u32 %v2570, %v2574
        %v2577 = vshll.u32 %v2496, 16
        %v2579 = vrot.slane %v2577, 1
        %v2580 = vsel %vm476, %v2575, %v2579
        %v2582 = vshrl.u32 %v2425, 16
        %v2584 = vshll.u32 %v2425, 16
        %v2586 = vrot.slane %v2584, 1
        %v2587 = vor.u32 %v2582, %v2586
        %v2589 = vshll.u32 %v2497, 16
        %v2591 = vrot.slane %v2589, 1
        %v2592 = vsel %vm476, %v2587, %v2591
        %v2594 = vshrl.u32 %v2426, 16
        %v2596 = vshll.u32 %v2426, 16
        %v2598 = vrot.slane %v2596, 1
        %v2599 = vor.u32 %v2594, %v2598
        %v2601 = vshll.u32 %v2498, 16
        %v2603 = vrot.slane %v2601, 1
        %v2604 = vsel %vm476, %v2599, %v2603
        %v2606 = vshrl.u32 %v2427, 16
        %v2608 = vshll.u32 %v2427, 16
        %v2610 = vrot.slane %v2608, 1
        %v2611 = vor.u32 %v2606, %v2610
        %v2613 = vshll.u32 %v2499, 16
        %v2615 = vrot.slane %v2613, 1
        %v2616 = vsel %vm476, %v2611, %v2615
        %v2618 = vshrl.u32 %v2428, 16
        %v2620 = vshll.u32 %v2428, 16
        %v2622 = vrot.slane %v2620, 1
        %v2623 = vor.u32 %v2618, %v2622
        %v2625 = vshll.u32 %v2500, 16
        %v2627 = vrot.slane %v2625, 1
        %v2628 = vsel %vm476, %v2623, %v2627
        %v2630 = vshrl.u32 %v2429, 16
        %v2632 = vshll.u32 %v2429, 16
        %v2634 = vrot.slane %v2632, 1
        %v2635 = vor.u32 %v2630, %v2634
        %v2637 = vshll.u32 %v2501, 16
        %v2639 = vrot.slane %v2637, 1
        %v2640 = vsel %vm476, %v2635, %v2639
        %v2642 = vshrl.u32 %v2430, 16
        %v2644 = vshll.u32 %v2430, 16
        %v2646 = vrot.slane %v2644, 1
        %v2647 = vor.u32 %v2642, %v2646
        %v2649 = vshll.u32 %v2502, 16
        %v2651 = vrot.slane %v2649, 1
        %v2652 = vsel %vm476, %v2647, %v2651
        %v2654 = vshrl.u32 %v2431, 16
        %v2656 = vshll.u32 %v2431, 16
        %v2658 = vrot.slane %v2656, 1
        %v2659 = vor.u32 %v2654, %v2658
        %v2661 = vshll.u32 %v2503, 16
        %v2663 = vrot.slane %v2661, 1
        %v2664 = vsel %vm476, %v2659, %v2663
        %v2666 = vshrl.u32 %v2432, 16
        %v2668 = vshll.u32 %v2432, 16
        %v2670 = vrot.slane %v2668, 1
        %v2671 = vor.u32 %v2666, %v2670
        %v2673 = vshll.u32 %v2504, 16
        %v2675 = vrot.slane %v2673, 1
        %v2676 = vsel %vm476, %v2671, %v2675
        %v2678 = vshrl.u32 %v2433, 16
        %v2680 = vshll.u32 %v2433, 16
        %v2682 = vrot.slane %v2680, 1
        %v2683 = vor.u32 %v2678, %v2682
        %v2685 = vshll.u32 %v2505, 16
        %v2687 = vrot.slane %v2685, 1
        %v2688 = vsel %vm476, %v2683, %v2687
        %v2690 = vshrl.u32 %v2434, 16
        %v2692 = vshll.u32 %v2434, 16
        %v2694 = vrot.slane %v2692, 1
        %v2695 = vor.u32 %v2690, %v2694
        %v2697 = vshll.u32 %v2506, 16
        %v2699 = vrot.slane %v2697, 1
        %v2700 = vsel %vm476, %v2695, %v2699
        %v2702 = vshrl.u32 %v2435, 16
        %v2704 = vshll.u32 %v2435, 16
        %v2706 = vrot.slane %v2704, 1
        %v2707 = vor.u32 %v2702, %v2706
        %v2709 = vshll.u32 %v2507, 16
        %v2711 = vrot.slane %v2709, 1
        %v2712 = vsel %vm476, %v2707, %v2711
        %v2714 = vshrl.u32 %v2436, 16
        %v2716 = vshll.u32 %v2436, 16
        %v2718 = vrot.slane %v2716, 1
        %v2719 = vor.u32 %v2714, %v2718
        %v2721 = vshll.u32 %v2508, 16
        %v2723 = vrot.slane %v2721, 1
        %v2724 = vsel %vm476, %v2719, %v2723
        %v2743 = vrot.slane %v2419, 1
        %v2744 = vrot.slane %v2491, 1
        %v2745 = vsel %vm711, %v2743, %v2744
        %v2746 = vrot.slane %v2420, 1
        %v2747 = vrot.slane %v2492, 1
        %v2748 = vsel %vm711, %v2746, %v2747
        %v2749 = vrot.slane %v2421, 1
        %v2750 = vrot.slane %v2493, 1
        %v2751 = vsel %vm711, %v2749, %v2750
        %v2752 = vrot.slane %v2422, 1
        %v2753 = vrot.slane %v2494, 1
        %v2754 = vsel %vm711, %v2752, %v2753
        %v2755 = vrot.slane %v2423, 1
        %v2756 = vrot.slane %v2495, 1
        %v2757 = vsel %vm711, %v2755, %v2756
        %v2758 = vrot.slane %v2424, 1
        %v2759 = vrot.slane %v2496, 1
        %v2760 = vsel %vm711, %v2758, %v2759
        %v2761 = vrot.slane %v2425, 1
        %v2762 = vrot.slane %v2497, 1
        %v2763 = vsel %vm711, %v2761, %v2762
        %v2764 = vrot.slane %v2426, 1
        %v2765 = vrot.slane %v2498, 1
        %v2766 = vsel %vm711, %v2764, %v2765
        %v2767 = vrot.slane %v2427, 1
        %v2768 = vrot.slane %v2499, 1
        %v2769 = vsel %vm711, %v2767, %v2768
        %v2770 = vrot.slane %v2428, 1
        %v2771 = vrot.slane %v2500, 1
        %v2772 = vsel %vm711, %v2770, %v2771
        %v2773 = vrot.slane %v2429, 1
        %v2774 = vrot.slane %v2501, 1
        %v2775 = vsel %vm711, %v2773, %v2774
        %v2776 = vrot.slane %v2430, 1
        %v2777 = vrot.slane %v2502, 1
        %v2778 = vsel %vm711, %v2776, %v2777
        %v2779 = vrot.slane %v2431, 1
        %v2780 = vrot.slane %v2503, 1
        %v2781 = vsel %vm711, %v2779, %v2780
        %v2782 = vrot.slane %v2432, 1
        %v2783 = vrot.slane %v2504, 1
        %v2784 = vsel %vm711, %v2782, %v2783
        %v2785 = vrot.slane %v2433, 1
        %v2786 = vrot.slane %v2505, 1
        %v2787 = vsel %vm711, %v2785, %v2786
        %v2788 = vrot.slane %v2434, 1
        %v2789 = vrot.slane %v2506, 1
        %v2790 = vsel %vm711, %v2788, %v2789
        %v2791 = vrot.slane %v2435, 1
        %v2792 = vrot.slane %v2507, 1
        %v2793 = vsel %vm711, %v2791, %v2792
        %v2794 = vrot.slane %v2436, 1
        %v2795 = vrot.slane %v2508, 1
        %v2796 = vsel %vm711, %v2794, %v2795
        %s2815 = scalar_lea.vmem %s1, 384
        %v2816 = vld [vmem:[%s2815] sm:$0xf]
        %v2817 = vld [vmem:[%s2815 + $0x4] sm:$0xf]
        %v2818 = vld [vmem:[%s2815 + $0x8] sm:$0xf]
        %v2819 = vld [vmem:[%s2815 + $0xc] sm:$0xf]
        %v2820 = vld [vmem:[%s2815 + $0x10] sm:$0xf]
        %v2821 = vld [vmem:[%s2815 + $0x14] sm:$0xf]
        %v2822 = vld [vmem:[%s2815 + $0x18] sm:$0xf]
        %v2823 = vld [vmem:[%s2815 + $0x1c] sm:$0xf]
        %v2824 = vld [vmem:[%s2815 + $0x20] sm:$0xf]
        %v2825 = vld [vmem:[%s2815 + $0x24] sm:$0xf]
        %v2826 = vld [vmem:[%s2815 + $0x28] sm:$0xf]
        %v2827 = vld [vmem:[%s2815 + $0x2c] sm:$0xf]
        %v2828 = vld [vmem:[%s2815 + $0x30] sm:$0xf]
        %v2829 = vld [vmem:[%s2815 + $0x34] sm:$0xf]
        %v2830 = vld [vmem:[%s2815 + $0x38] sm:$0xf]
        %v2831 = vld [vmem:[%s2815 + $0x3c] sm:$0xf]
        %v2832 = vld [vmem:[%s2815 + $0x40] sm:$0xf]
        %v2833 = vld [vmem:[%s2815 + $0x44] sm:$0xf]
        %v2834 = vld [vmem:[%s2815 + $0x48] sm:$0xf]
        %v2835 = vld [vmem:[%s2815 + $0x4c] sm:$0xf]
        %v2836 = vld [vmem:[%s2815 + $0x50] sm:$0xf]
        %v2837 = vld [vmem:[%s2815 + $0x54] sm:$0xf]
        %v2838 = vld [vmem:[%s2815 + $0x58] sm:$0xf]
        %v2839 = vld [vmem:[%s2815 + $0x5c] sm:$0xf]
        %v2840 = vld [vmem:[%s2815 + $0x60] sm:$0xf]
        %v2841 = vld [vmem:[%s2815 + $0x64] sm:$0xf]
        %v2842 = vld [vmem:[%s2815 + $0x68] sm:$0xf]
        %v2843 = vld [vmem:[%s2815 + $0x6c] sm:$0xf]
        %v2844 = vld [vmem:[%s2815 + $0x70] sm:$0xf]
        %v2845 = vld [vmem:[%s2815 + $0x74] sm:$0xf]
        %v2846 = vld [vmem:[%s2815 + $0x78] sm:$0xf]
        %v2847 = vld [vmem:[%s2815 + $0x7c] sm:$0xf]
        %v2848 = vld [vmem:[%s2815 + $0x80] sm:$0xf]
        %v2849 = vld [vmem:[%s2815 + $0x84] sm:$0xf]
        %v2850 = vld [vmem:[%s2815 + $0x88] sm:$0xf]
        %v2851 = vld [vmem:[%s2815 + $0x8c] sm:$0xf]
        %v2852 = vld [vmem:[%s2815 + $0x90] sm:$0xf]
        %v2853 = vld [vmem:[%s2815 + $0x94] sm:$0xf]
        %v2854 = vld [vmem:[%s2815 + $0x98] sm:$0xf]
        %v2855 = vld [vmem:[%s2815 + $0x9c] sm:$0xf]
        %v2856 = vld [vmem:[%s2815 + $0xa0] sm:$0xf]
        %v2857 = vld [vmem:[%s2815 + $0xa4] sm:$0xf]
        %v2858 = vld [vmem:[%s2815 + $0xa8] sm:$0xf]
        %v2859 = vld [vmem:[%s2815 + $0xac] sm:$0xf]
        %v2860 = vld [vmem:[%s2815 + $0xb0] sm:$0xf]
        %v2861 = vld [vmem:[%s2815 + $0xb4] sm:$0xf]
        %v2862 = vld [vmem:[%s2815 + $0xb8] sm:$0xf]
        %v2863 = vld [vmem:[%s2815 + $0xbc] sm:$0xf]
        %v2912 = vunpack.c.l.b16 %v2816
        %v2913 = vunpack.c.l.b16 %v2817
        %v2914 = vunpack.c.l.b16 %v2818
        %v2915 = vunpack.c.l.b16 %v2819
        %v2916 = vunpack.c.l.b16 %v2820
        %v2917 = vunpack.c.l.b16 %v2821
        %v2918 = vunpack.c.l.b16 %v2822
        %v2919 = vunpack.c.l.b16 %v2823
        %v2920 = vunpack.c.l.b16 %v2824
        %v2921 = vunpack.c.l.b16 %v2825
        %v2922 = vunpack.c.l.b16 %v2826
        %v2923 = vunpack.c.l.b16 %v2827
        %v2924 = vunpack.c.l.b16 %v2828
        %v2925 = vunpack.c.l.b16 %v2829
        %v2926 = vunpack.c.l.b16 %v2830
        %v2927 = vunpack.c.l.b16 %v2831
        %v2928 = vunpack.c.l.b16 %v2832
        %v2929 = vunpack.c.l.b16 %v2833
        %v2930 = vunpack.c.l.b16 %v2834
        %v2931 = vunpack.c.l.b16 %v2835
        %v2932 = vunpack.c.l.b16 %v2836
        %v2933 = vunpack.c.l.b16 %v2837
        %v2934 = vunpack.c.l.b16 %v2838
        %v2935 = vunpack.c.l.b16 %v2839
        %v2936 = vunpack.c.l.b16 %v2840
        %v2937 = vunpack.c.l.b16 %v2841
        %v2938 = vunpack.c.l.b16 %v2842
        %v2939 = vunpack.c.l.b16 %v2843
        %v2940 = vunpack.c.l.b16 %v2844
        %v2941 = vunpack.c.l.b16 %v2845
        %v2942 = vunpack.c.l.b16 %v2846
        %v2943 = vunpack.c.l.b16 %v2847
        %v2944 = vunpack.c.l.b16 %v2848
        %v2945 = vunpack.c.l.b16 %v2849
        %v2946 = vunpack.c.l.b16 %v2850
        %v2947 = vunpack.c.l.b16 %v2851
        %v2948 = vunpack.c.l.b16 %v2852
        %v2949 = vunpack.c.l.b16 %v2853
        %v2950 = vunpack.c.l.b16 %v2854
        %v2951 = vunpack.c.l.b16 %v2855
        %v2952 = vunpack.c.l.b16 %v2856
        %v2953 = vunpack.c.l.b16 %v2857
        %v2954 = vunpack.c.l.b16 %v2858
        %v2955 = vunpack.c.l.b16 %v2859
        %v2956 = vunpack.c.l.b16 %v2860
        %v2957 = vunpack.c.l.b16 %v2861
        %v2958 = vunpack.c.l.b16 %v2862
        %v2959 = vunpack.c.l.b16 %v2863
        %v2960 = vpack.c.b16 %v2913, %v2912
        %v2961 = vpack.c.b16 %v2915, %v2914
        %v2962 = vpack.c.b16 %v2917, %v2916
        %v2963 = vpack.c.b16 %v2919, %v2918
        %v2964 = vpack.c.b16 %v2921, %v2920
        %v2965 = vpack.c.b16 %v2923, %v2922
        %v2966 = vpack.c.b16 %v2925, %v2924
        %v2967 = vpack.c.b16 %v2927, %v2926
        %v2968 = vpack.c.b16 %v2929, %v2928
        %v2969 = vpack.c.b16 %v2931, %v2930
        %v2970 = vpack.c.b16 %v2933, %v2932
        %v2971 = vpack.c.b16 %v2935, %v2934
        %v2972 = vpack.c.b16 %v2937, %v2936
        %v2973 = vpack.c.b16 %v2939, %v2938
        %v2974 = vpack.c.b16 %v2941, %v2940
        %v2975 = vpack.c.b16 %v2943, %v2942
        %v2976 = vpack.c.b16 %v2945, %v2944
        %v2977 = vpack.c.b16 %v2947, %v2946
        %v2978 = vpack.c.b16 %v2949, %v2948
        %v2979 = vpack.c.b16 %v2951, %v2950
        %v2980 = vpack.c.b16 %v2953, %v2952
        %v2981 = vpack.c.b16 %v2955, %v2954
        %v2982 = vpack.c.b16 %v2957, %v2956
        %v2983 = vpack.c.b16 %v2959, %v2958
        %3008 = vmatpush.bf16.msra.mxu0 %v2967
        %3009 = vmatpush.bf16.msra.mxu0 %v2966
        %3010 = vmatpush.bf16.msra.mxu0 %v2965
        %3011 = vmatpush.bf16.msra.mxu0 %v2964
        %3012 = vmatpush.bf16.msra.mxu0 %v2963
        %3013 = vmatpush.bf16.msra.mxu0 %v2962
        %3014 = vmatpush.bf16.msra.mxu0 %v2961
        %3015 = vmatpush.bf16.msra.mxu0 %v2960
        %3016 = vmatmul.bf16.gmra.mxu0 %v2419
        %v3017 = vpop.f32.mrf.mxu0
        %v3018 = vadd.f32 0.0, %v3017
        %v3019 = vpop.f32.mrf.mxu0
        %v3020 = vadd.f32 0.0, %v3019
        %3021 = vmatmul.bf16.gmra.mxu0 %v2420
        %v3022 = vpop.f32.mrf.mxu0
        %v3023 = vadd.f32 0.0, %v3022
        %v3024 = vpop.f32.mrf.mxu0
        %v3025 = vadd.f32 0.0, %v3024
        %3026 = vmatmul.bf16.gmra.mxu0 %v2421
        %v3027 = vpop.f32.mrf.mxu0
        %v3028 = vadd.f32 0.0, %v3027
        %v3029 = vpop.f32.mrf.mxu0
        %v3030 = vadd.f32 0.0, %v3029
        %3031 = vmatmul.bf16.gmra.mxu0 %v2422
        %v3032 = vpop.f32.mrf.mxu0
        %v3033 = vadd.f32 0.0, %v3032
        %v3034 = vpop.f32.mrf.mxu0
        %v3035 = vadd.f32 0.0, %v3034
        %3036 = vmatmul.bf16.gmra.mxu0 %v2423
        %v3037 = vpop.f32.mrf.mxu0
        %v3038 = vadd.f32 0.0, %v3037
        %v3039 = vpop.f32.mrf.mxu0
        %v3040 = vadd.f32 0.0, %v3039
        %3041 = vmatmul.bf16.gmra.mxu0 %v2424
        %v3042 = vpop.f32.mrf.mxu0
        %v3043 = vadd.f32 0.0, %v3042
        %v3044 = vpop.f32.mrf.mxu0
        %v3045 = vadd.f32 0.0, %v3044
        %3046 = vmatmul.bf16.gmra.mxu0 %v2425
        %v3047 = vpop.f32.mrf.mxu0
        %v3048 = vadd.f32 0.0, %v3047
        %v3049 = vpop.f32.mrf.mxu0
        %v3050 = vadd.f32 0.0, %v3049
        %3051 = vmatmul.bf16.gmra.mxu0 %v2426
        %v3052 = vpop.f32.mrf.mxu0
        %v3053 = vadd.f32 0.0, %v3052
        %v3054 = vpop.f32.mrf.mxu0
        %v3055 = vadd.f32 0.0, %v3054
        %3056 = vmatmul.bf16.gmra.mxu0 %v2427
        %v3057 = vpop.f32.mrf.mxu0
        %v3058 = vadd.f32 0.0, %v3057
        %v3059 = vpop.f32.mrf.mxu0
        %v3060 = vadd.f32 0.0, %v3059
        %3061 = vmatmul.bf16.gmra.mxu0 %v2428
        %v3062 = vpop.f32.mrf.mxu0
        %v3063 = vadd.f32 0.0, %v3062
        %v3064 = vpop.f32.mrf.mxu0
        %v3065 = vadd.f32 0.0, %v3064
        %3066 = vmatmul.bf16.gmra.mxu0 %v2429
        %v3067 = vpop.f32.mrf.mxu0
        %v3068 = vadd.f32 0.0, %v3067
        %v3069 = vpop.f32.mrf.mxu0
        %v3070 = vadd.f32 0.0, %v3069
        %3071 = vmatmul.bf16.gmra.mxu0 %v2430
        %v3072 = vpop.f32.mrf.mxu0
        %v3073 = vadd.f32 0.0, %v3072
        %v3074 = vpop.f32.mrf.mxu0
        %v3075 = vadd.f32 0.0, %v3074
        %3076 = vmatmul.bf16.gmra.mxu0 %v2431
        %v3077 = vpop.f32.mrf.mxu0
        %v3078 = vadd.f32 0.0, %v3077
        %v3079 = vpop.f32.mrf.mxu0
        %v3080 = vadd.f32 0.0, %v3079
        %3081 = vmatmul.bf16.gmra.mxu0 %v2432
        %v3082 = vpop.f32.mrf.mxu0
        %v3083 = vadd.f32 0.0, %v3082
        %v3084 = vpop.f32.mrf.mxu0
        %v3085 = vadd.f32 0.0, %v3084
        %3086 = vmatmul.bf16.gmra.mxu0 %v2433
        %v3087 = vpop.f32.mrf.mxu0
        %v3088 = vadd.f32 0.0, %v3087
        %v3089 = vpop.f32.mrf.mxu0
        %v3090 = vadd.f32 0.0, %v3089
        %3091 = vmatmul.bf16.gmra.mxu0 %v2434
        %v3092 = vpop.f32.mrf.mxu0
        %v3093 = vadd.f32 0.0, %v3092
        %v3094 = vpop.f32.mrf.mxu0
        %v3095 = vadd.f32 0.0, %v3094
        %3096 = vmatmul.bf16.gmra.mxu0 %v2435
        %v3097 = vpop.f32.mrf.mxu0
        %v3098 = vadd.f32 0.0, %v3097
        %v3099 = vpop.f32.mrf.mxu0
        %v3100 = vadd.f32 0.0, %v3099
        %3101 = vmatmul.bf16.gmra.mxu0 %v2436
        %v3102 = vpop.f32.mrf.mxu0
        %v3103 = vadd.f32 0.0, %v3102
        %v3104 = vpop.f32.mrf.mxu0
        %v3105 = vadd.f32 0.0, %v3104
        %3106 = vdwg.mxu0
        %3107 = vmatpush.bf16.msra.mxu0 %v2975
        %3108 = vmatpush.bf16.msra.mxu0 %v2974
        %3109 = vmatpush.bf16.msra.mxu0 %v2973
        %3110 = vmatpush.bf16.msra.mxu0 %v2972
        %3111 = vmatpush.bf16.msra.mxu0 %v2971
        %3112 = vmatpush.bf16.msra.mxu0 %v2970
        %3113 = vmatpush.bf16.msra.mxu0 %v2969
        %3114 = vmatpush.bf16.msra.mxu0 %v2968
        %3115 = vmatmul.bf16.gmra.mxu0 %v2520
        %v3116 = vpop.f32.mrf.mxu0
        %v3117 = vadd.f32 %v3018, %v3116
        %v3118 = vpop.f32.mrf.mxu0
        %v3119 = vadd.f32 %v3020, %v3118
        %3120 = vmatmul.bf16.gmra.mxu0 %v2532
        %v3121 = vpop.f32.mrf.mxu0
        %v3122 = vadd.f32 %v3023, %v3121
        %v3123 = vpop.f32.mrf.mxu0
        %v3124 = vadd.f32 %v3025, %v3123
        %3125 = vmatmul.bf16.gmra.mxu0 %v2544
        %v3126 = vpop.f32.mrf.mxu0
        %v3127 = vadd.f32 %v3028, %v3126
        %v3128 = vpop.f32.mrf.mxu0
        %v3129 = vadd.f32 %v3030, %v3128
        %3130 = vmatmul.bf16.gmra.mxu0 %v2556
        %v3131 = vpop.f32.mrf.mxu0
        %v3132 = vadd.f32 %v3033, %v3131
        %v3133 = vpop.f32.mrf.mxu0
        %v3134 = vadd.f32 %v3035, %v3133
        %3135 = vmatmul.bf16.gmra.mxu0 %v2568
        %v3136 = vpop.f32.mrf.mxu0
        %v3137 = vadd.f32 %v3038, %v3136
        %v3138 = vpop.f32.mrf.mxu0
        %v3139 = vadd.f32 %v3040, %v3138
        %3140 = vmatmul.bf16.gmra.mxu0 %v2580
        %v3141 = vpop.f32.mrf.mxu0
        %v3142 = vadd.f32 %v3043, %v3141
        %v3143 = vpop.f32.mrf.mxu0
        %v3144 = vadd.f32 %v3045, %v3143
        %3145 = vmatmul.bf16.gmra.mxu0 %v2592
        %v3146 = vpop.f32.mrf.mxu0
        %v3147 = vadd.f32 %v3048, %v3146
        %v3148 = vpop.f32.mrf.mxu0
        %v3149 = vadd.f32 %v3050, %v3148
        %3150 = vmatmul.bf16.gmra.mxu0 %v2604
        %v3151 = vpop.f32.mrf.mxu0
        %v3152 = vadd.f32 %v3053, %v3151
        %v3153 = vpop.f32.mrf.mxu0
        %v3154 = vadd.f32 %v3055, %v3153
        %3155 = vmatmul.bf16.gmra.mxu0 %v2616
        %v3156 = vpop.f32.mrf.mxu0
        %v3157 = vadd.f32 %v3058, %v3156
        %v3158 = vpop.f32.mrf.mxu0
        %v3159 = vadd.f32 %v3060, %v3158
        %3160 = vmatmul.bf16.gmra.mxu0 %v2628
        %v3161 = vpop.f32.mrf.mxu0
        %v3162 = vadd.f32 %v3063, %v3161
        %v3163 = vpop.f32.mrf.mxu0
        %v3164 = vadd.f32 %v3065, %v3163
        %3165 = vmatmul.bf16.gmra.mxu0 %v2640
        %v3166 = vpop.f32.mrf.mxu0
        %v3167 = vadd.f32 %v3068, %v3166
        %v3168 = vpop.f32.mrf.mxu0
        %v3169 = vadd.f32 %v3070, %v3168
        %3170 = vmatmul.bf16.gmra.mxu0 %v2652
        %v3171 = vpop.f32.mrf.mxu0
        %v3172 = vadd.f32 %v3073, %v3171
        %v3173 = vpop.f32.mrf.mxu0
        %v3174 = vadd.f32 %v3075, %v3173
        %3175 = vmatmul.bf16.gmra.mxu0 %v2664
        %v3176 = vpop.f32.mrf.mxu0
        %v3177 = vadd.f32 %v3078, %v3176
        %v3178 = vpop.f32.mrf.mxu0
        %v3179 = vadd.f32 %v3080, %v3178
        %3180 = vmatmul.bf16.gmra.mxu0 %v2676
        %v3181 = vpop.f32.mrf.mxu0
        %v3182 = vadd.f32 %v3083, %v3181
        %v3183 = vpop.f32.mrf.mxu0
        %v3184 = vadd.f32 %v3085, %v3183
        %3185 = vmatmul.bf16.gmra.mxu0 %v2688
        %v3186 = vpop.f32.mrf.mxu0
        %v3187 = vadd.f32 %v3088, %v3186
        %v3188 = vpop.f32.mrf.mxu0
        %v3189 = vadd.f32 %v3090, %v3188
        %3190 = vmatmul.bf16.gmra.mxu0 %v2700
        %v3191 = vpop.f32.mrf.mxu0
        %v3192 = vadd.f32 %v3093, %v3191
        %v3193 = vpop.f32.mrf.mxu0
        %v3194 = vadd.f32 %v3095, %v3193
        %3195 = vmatmul.bf16.gmra.mxu0 %v2712
        %v3196 = vpop.f32.mrf.mxu0
        %v3197 = vadd.f32 %v3098, %v3196
        %v3198 = vpop.f32.mrf.mxu0
        %v3199 = vadd.f32 %v3100, %v3198
        %3200 = vmatmul.bf16.gmra.mxu0 %v2724
        %v3201 = vpop.f32.mrf.mxu0
        %v3202 = vadd.f32 %v3103, %v3201
        %v3203 = vpop.f32.mrf.mxu0
        %v3204 = vadd.f32 %v3105, %v3203
        %3205 = vdwg.mxu0
        %3206 = vmatpush.bf16.msra.mxu0 %v2983
        %3207 = vmatpush.bf16.msra.mxu0 %v2982
        %3208 = vmatpush.bf16.msra.mxu0 %v2981
        %3209 = vmatpush.bf16.msra.mxu0 %v2980
        %3210 = vmatpush.bf16.msra.mxu0 %v2979
        %3211 = vmatpush.bf16.msra.mxu0 %v2978
        %3212 = vmatpush.bf16.msra.mxu0 %v2977
        %3213 = vmatpush.bf16.msra.mxu0 %v2976
        %3214 = vmatmul.bf16.gmra.mxu0 %v2745
        %v3215 = vpop.f32.mrf.mxu0
        %v3216 = vadd.f32 %v3117, %v3215
        %v3217 = vpop.f32.mrf.mxu0
        %v3218 = vadd.f32 %v3119, %v3217
        %3219 = vmatmul.bf16.gmra.mxu0 %v2748
        %v3220 = vpop.f32.mrf.mxu0
        %v3221 = vadd.f32 %v3122, %v3220
        %v3222 = vpop.f32.mrf.mxu0
        %v3223 = vadd.f32 %v3124, %v3222
        %3224 = vmatmul.bf16.gmra.mxu0 %v2751
        %v3225 = vpop.f32.mrf.mxu0
        %v3226 = vadd.f32 %v3127, %v3225
        %v3227 = vpop.f32.mrf.mxu0
        %v3228 = vadd.f32 %v3129, %v3227
        %3229 = vmatmul.bf16.gmra.mxu0 %v2754
        %v3230 = vpop.f32.mrf.mxu0
        %v3231 = vadd.f32 %v3132, %v3230
        %v3232 = vpop.f32.mrf.mxu0
        %v3233 = vadd.f32 %v3134, %v3232
        %3234 = vmatmul.bf16.gmra.mxu0 %v2757
        %v3235 = vpop.f32.mrf.mxu0
        %v3236 = vadd.f32 %v3137, %v3235
        %v3237 = vpop.f32.mrf.mxu0
        %v3238 = vadd.f32 %v3139, %v3237
        %3239 = vmatmul.bf16.gmra.mxu0 %v2760
        %v3240 = vpop.f32.mrf.mxu0
        %v3241 = vadd.f32 %v3142, %v3240
        %v3242 = vpop.f32.mrf.mxu0
        %v3243 = vadd.f32 %v3144, %v3242
        %3244 = vmatmul.bf16.gmra.mxu0 %v2763
        %v3245 = vpop.f32.mrf.mxu0
        %v3246 = vadd.f32 %v3147, %v3245
        %v3247 = vpop.f32.mrf.mxu0
        %v3248 = vadd.f32 %v3149, %v3247
        %3249 = vmatmul.bf16.gmra.mxu0 %v2766
        %v3250 = vpop.f32.mrf.mxu0
        %v3251 = vadd.f32 %v3152, %v3250
        %v3252 = vpop.f32.mrf.mxu0
        %v3253 = vadd.f32 %v3154, %v3252
        %3254 = vmatmul.bf16.gmra.mxu0 %v2769
        %v3255 = vpop.f32.mrf.mxu0
        %v3256 = vadd.f32 %v3157, %v3255
        %v3257 = vpop.f32.mrf.mxu0
        %v3258 = vadd.f32 %v3159, %v3257
        %3259 = vmatmul.bf16.gmra.mxu0 %v2772
        %v3260 = vpop.f32.mrf.mxu0
        %v3261 = vadd.f32 %v3162, %v3260
        %v3262 = vpop.f32.mrf.mxu0
        %v3263 = vadd.f32 %v3164, %v3262
        %3264 = vmatmul.bf16.gmra.mxu0 %v2775
        %v3265 = vpop.f32.mrf.mxu0
        %v3266 = vadd.f32 %v3167, %v3265
        %v3267 = vpop.f32.mrf.mxu0
        %v3268 = vadd.f32 %v3169, %v3267
        %3269 = vmatmul.bf16.gmra.mxu0 %v2778
        %v3270 = vpop.f32.mrf.mxu0
        %v3271 = vadd.f32 %v3172, %v3270
        %v3272 = vpop.f32.mrf.mxu0
        %v3273 = vadd.f32 %v3174, %v3272
        %3274 = vmatmul.bf16.gmra.mxu0 %v2781
        %v3275 = vpop.f32.mrf.mxu0
        %v3276 = vadd.f32 %v3177, %v3275
        %v3277 = vpop.f32.mrf.mxu0
        %v3278 = vadd.f32 %v3179, %v3277
        %3279 = vmatmul.bf16.gmra.mxu0 %v2784
        %v3280 = vpop.f32.mrf.mxu0
        %v3281 = vadd.f32 %v3182, %v3280
        %v3282 = vpop.f32.mrf.mxu0
        %v3283 = vadd.f32 %v3184, %v3282
        %3284 = vmatmul.bf16.gmra.mxu0 %v2787
        %v3285 = vpop.f32.mrf.mxu0
        %v3286 = vadd.f32 %v3187, %v3285
        %v3287 = vpop.f32.mrf.mxu0
        %v3288 = vadd.f32 %v3189, %v3287
        %3289 = vmatmul.bf16.gmra.mxu0 %v2790
        %v3290 = vpop.f32.mrf.mxu0
        %v3291 = vadd.f32 %v3192, %v3290
        %v3292 = vpop.f32.mrf.mxu0
        %v3293 = vadd.f32 %v3194, %v3292
        %3294 = vmatmul.bf16.gmra.mxu0 %v2793
        %v3295 = vpop.f32.mrf.mxu0
        %v3296 = vadd.f32 %v3197, %v3295
        %v3297 = vpop.f32.mrf.mxu0
        %v3298 = vadd.f32 %v3199, %v3297
        %3299 = vmatmul.bf16.gmra.mxu0 %v2796
        %v3300 = vpop.f32.mrf.mxu0
        %v3301 = vadd.f32 %v3202, %v3300
        %v3302 = vpop.f32.mrf.mxu0
        %v3303 = vadd.f32 %v3204, %v3302
        %3304 = vdwg.mxu0
        %v3305 = vadd.f32 %v2200, %v3216
        %v3306 = vadd.f32 %v2202, %v3218
        %v3307 = vadd.f32 %v2205, %v3221
        %v3308 = vadd.f32 %v2207, %v3223
        %v3309 = vadd.f32 %v2210, %v3226
        %v3310 = vadd.f32 %v2212, %v3228
        %v3311 = vadd.f32 %v2215, %v3231
        %v3312 = vadd.f32 %v2217, %v3233
        %v3313 = vadd.f32 %v2220, %v3236
        %v3314 = vadd.f32 %v2222, %v3238
        %v3315 = vadd.f32 %v2225, %v3241
        %v3316 = vadd.f32 %v2227, %v3243
        %v3317 = vadd.f32 %v2230, %v3246
        %v3318 = vadd.f32 %v2232, %v3248
        %v3319 = vadd.f32 %v2235, %v3251
        %v3320 = vadd.f32 %v2237, %v3253
        %v3321 = vadd.f32 %v2240, %v3256
        %v3322 = vadd.f32 %v2242, %v3258
        %v3323 = vadd.f32 %v2245, %v3261
        %v3324 = vadd.f32 %v2247, %v3263
        %v3325 = vadd.f32 %v2250, %v3266
        %v3326 = vadd.f32 %v2252, %v3268
        %v3327 = vadd.f32 %v2255, %v3271
        %v3328 = vadd.f32 %v2257, %v3273
        %v3329 = vadd.f32 %v2260, %v3276
        %v3330 = vadd.f32 %v2262, %v3278
        %v3331 = vadd.f32 %v2265, %v3281
        %v3332 = vadd.f32 %v2267, %v3283
        %v3333 = vadd.f32 %v2270, %v3286
        %v3334 = vadd.f32 %v2272, %v3288
        %v3335 = vadd.f32 %v2275, %v3291
        %v3336 = vadd.f32 %v2277, %v3293
        %v3337 = vadd.f32 %v2280, %v3296
        %v3338 = vadd.f32 %v2282, %v3298
        %v3339 = vadd.f32 %v2285, %v3301
        %v3340 = vadd.f32 %v2287, %v3303
        %v3341 = vld [vmem:[%s2] sm:$0x1]
        %v3343 = vperm.slane %v3341, 0
        %v3345 = vadd.f32 %v3305, %v3343
        %v3346 = vadd.f32 %v3306, %v3343
        %v3347 = vadd.f32 %v3307, %v3343
        %v3348 = vadd.f32 %v3308, %v3343
        %v3349 = vadd.f32 %v3309, %v3343
        %v3350 = vadd.f32 %v3310, %v3343
        %v3351 = vadd.f32 %v3311, %v3343
        %v3352 = vadd.f32 %v3312, %v3343
        %v3353 = vadd.f32 %v3313, %v3343
        %v3354 = vadd.f32 %v3314, %v3343
        %v3355 = vadd.f32 %v3315, %v3343
        %v3356 = vadd.f32 %v3316, %v3343
        %v3357 = vadd.f32 %v3317, %v3343
        %v3358 = vadd.f32 %v3318, %v3343
        %v3359 = vadd.f32 %v3319, %v3343
        %v3360 = vadd.f32 %v3320, %v3343
        %v3361 = vadd.f32 %v3321, %v3343
        %v3362 = vadd.f32 %v3322, %v3343
        %v3363 = vadd.f32 %v3323, %v3343
        %v3364 = vadd.f32 %v3324, %v3343
        %v3365 = vadd.f32 %v3325, %v3343
        %v3366 = vadd.f32 %v3326, %v3343
        %v3367 = vadd.f32 %v3327, %v3343
        %v3368 = vadd.f32 %v3328, %v3343
        %v3369 = vadd.f32 %v3329, %v3343
        %v3370 = vadd.f32 %v3330, %v3343
        %v3371 = vadd.f32 %v3331, %v3343
        %v3372 = vadd.f32 %v3332, %v3343
        %v3373 = vadd.f32 %v3333, %v3343
        %v3374 = vadd.f32 %v3334, %v3343
        %v3375 = vadd.f32 %v3335, %v3343
        %v3376 = vadd.f32 %v3336, %v3343
        %v3377 = vadd.f32 %v3337, %v3343
        %v3378 = vadd.f32 %v3338, %v3343
        %v3379 = vadd.f32 %v3339, %v3343
        %v3380 = vadd.f32 %v3340, %v3343
        %v3381 = vmax.f32 %v3345, 0.0
        %v3382 = vmax.f32 %v3346, 0.0
        %v3383 = vmax.f32 %v3347, 0.0
        %v3384 = vmax.f32 %v3348, 0.0
        %v3385 = vmax.f32 %v3349, 0.0
        %v3386 = vmax.f32 %v3350, 0.0
        %v3387 = vmax.f32 %v3351, 0.0
        %v3388 = vmax.f32 %v3352, 0.0
        %v3389 = vmax.f32 %v3353, 0.0
        %v3390 = vmax.f32 %v3354, 0.0
        %v3391 = vmax.f32 %v3355, 0.0
        %v3392 = vmax.f32 %v3356, 0.0
        %v3393 = vmax.f32 %v3357, 0.0
        %v3394 = vmax.f32 %v3358, 0.0
        %v3395 = vmax.f32 %v3359, 0.0
        %v3396 = vmax.f32 %v3360, 0.0
        %v3397 = vmax.f32 %v3361, 0.0
        %v3398 = vmax.f32 %v3362, 0.0
        %v3399 = vmax.f32 %v3363, 0.0
        %v3400 = vmax.f32 %v3364, 0.0
        %v3401 = vmax.f32 %v3365, 0.0
        %v3402 = vmax.f32 %v3366, 0.0
        %v3403 = vmax.f32 %v3367, 0.0
        %v3404 = vmax.f32 %v3368, 0.0
        %v3405 = vmax.f32 %v3369, 0.0
        %v3406 = vmax.f32 %v3370, 0.0
        %v3407 = vmax.f32 %v3371, 0.0
        %v3408 = vmax.f32 %v3372, 0.0
        %v3409 = vmax.f32 %v3373, 0.0
        %v3410 = vmax.f32 %v3374, 0.0
        %v3411 = vmax.f32 %v3375, 0.0
        %v3412 = vmax.f32 %v3376, 0.0
        %v3413 = vmax.f32 %v3377, 0.0
        %v3414 = vmax.f32 %v3378, 0.0
        %v3415 = vmax.f32 %v3379, 0.0
        %v3416 = vmax.f32 %v3380, 0.0
        %vm3453 = vcmask 1040384
        %v3454 = vrot.slane %v3381, 7
        %v3455 = vrot.slane %v3382, 7
        %v3456 = vsel %vm3453, %v3454, %v3455
        %v3457 = vrot.slane %v3383, 7
        %v3458 = vrot.slane %v3384, 7
        %v3459 = vsel %vm3453, %v3457, %v3458
        %v3460 = vrot.slane %v3385, 7
        %v3461 = vrot.slane %v3386, 7
        %v3462 = vsel %vm3453, %v3460, %v3461
        %v3463 = vrot.slane %v3387, 7
        %v3464 = vrot.slane %v3388, 7
        %v3465 = vsel %vm3453, %v3463, %v3464
        %v3466 = vrot.slane %v3389, 7
        %v3467 = vrot.slane %v3390, 7
        %v3468 = vsel %vm3453, %v3466, %v3467
        %v3469 = vrot.slane %v3391, 7
        %v3470 = vrot.slane %v3392, 7
        %v3471 = vsel %vm3453, %v3469, %v3470
        %v3472 = vrot.slane %v3393, 7
        %v3473 = vrot.slane %v3394, 7
        %v3474 = vsel %vm3453, %v3472, %v3473
        %v3475 = vrot.slane %v3395, 7
        %v3476 = vrot.slane %v3396, 7
        %v3477 = vsel %vm3453, %v3475, %v3476
        %v3478 = vrot.slane %v3397, 7
        %v3479 = vrot.slane %v3398, 7
        %v3480 = vsel %vm3453, %v3478, %v3479
        %v3481 = vrot.slane %v3399, 7
        %v3482 = vrot.slane %v3400, 7
        %v3483 = vsel %vm3453, %v3481, %v3482
        %v3484 = vrot.slane %v3401, 7
        %v3485 = vrot.slane %v3402, 7
        %v3486 = vsel %vm3453, %v3484, %v3485
        %v3487 = vrot.slane %v3403, 7
        %v3488 = vrot.slane %v3404, 7
        %v3489 = vsel %vm3453, %v3487, %v3488
        %v3490 = vrot.slane %v3405, 7
        %v3491 = vrot.slane %v3406, 7
        %v3492 = vsel %vm3453, %v3490, %v3491
        %v3493 = vrot.slane %v3407, 7
        %v3494 = vrot.slane %v3408, 7
        %v3495 = vsel %vm3453, %v3493, %v3494
        %v3496 = vrot.slane %v3409, 7
        %v3497 = vrot.slane %v3410, 7
        %v3498 = vsel %vm3453, %v3496, %v3497
        %v3499 = vrot.slane %v3411, 7
        %v3500 = vrot.slane %v3412, 7
        %v3501 = vsel %vm3453, %v3499, %v3500
        %v3502 = vrot.slane %v3413, 7
        %v3503 = vrot.slane %v3414, 7
        %v3504 = vsel %vm3453, %v3502, %v3503
        %v3505 = vrot.slane %v3415, 7
        %v3506 = vrot.slane %v3416, 7
        %v3507 = vsel %vm3453, %v3505, %v3506
        %v3562 = vsel %vm3453, 0.0, %v3454
        %v3563 = vsel %vm3453, 0.0, %v3457
        %v3564 = vsel %vm3453, 0.0, %v3460
        %v3565 = vsel %vm3453, 0.0, %v3463
        %v3566 = vsel %vm3453, 0.0, %v3466
        %v3567 = vsel %vm3453, 0.0, %v3469
        %v3568 = vsel %vm3453, 0.0, %v3472
        %v3569 = vsel %vm3453, 0.0, %v3475
        %v3570 = vsel %vm3453, 0.0, %v3478
        %v3571 = vsel %vm3453, 0.0, %v3481
        %v3572 = vsel %vm3453, 0.0, %v3484
        %v3573 = vsel %vm3453, 0.0, %v3487
        %v3574 = vsel %vm3453, 0.0, %v3490
        %v3575 = vsel %vm3453, 0.0, %v3493
        %v3576 = vsel %vm3453, 0.0, %v3496
        %v3577 = vsel %vm3453, 0.0, %v3499
        %v3578 = vsel %vm3453, 0.0, %v3502
        %v3579 = vsel %vm3453, 0.0, %v3505
        %v3580 = vsel %vm3453, %v3455, 0.0
        %v3581 = vsel %vm3453, %v3458, 0.0
        %v3582 = vsel %vm3453, %v3461, 0.0
        %v3583 = vsel %vm3453, %v3464, 0.0
        %v3584 = vsel %vm3453, %v3467, 0.0
        %v3585 = vsel %vm3453, %v3470, 0.0
        %v3586 = vsel %vm3453, %v3473, 0.0
        %v3587 = vsel %vm3453, %v3476, 0.0
        %v3588 = vsel %vm3453, %v3479, 0.0
        %v3589 = vsel %vm3453, %v3482, 0.0
        %v3590 = vsel %vm3453, %v3485, 0.0
        %v3591 = vsel %vm3453, %v3488, 0.0
        %v3592 = vsel %vm3453, %v3491, 0.0
        %v3593 = vsel %vm3453, %v3494, 0.0
        %v3594 = vsel %vm3453, %v3497, 0.0
        %v3595 = vsel %vm3453, %v3500, 0.0
        %v3596 = vsel %vm3453, %v3503, 0.0
        %v3597 = vsel %vm3453, %v3506, 0.0
        %v3598 = vpack.c.bf16 %v3562, %v3562
        %v3599 = vpack.c.bf16 %v3456, %v3456
        %v3600 = vpack.c.bf16 %v3580, %v3580
        %v3601 = vpack.c.bf16 %v3563, %v3563
        %v3602 = vpack.c.bf16 %v3459, %v3459
        %v3603 = vpack.c.bf16 %v3581, %v3581
        %v3604 = vpack.c.bf16 %v3564, %v3564
        %v3605 = vpack.c.bf16 %v3462, %v3462
        %v3606 = vpack.c.bf16 %v3582, %v3582
        %v3607 = vpack.c.bf16 %v3565, %v3565
        %v3608 = vpack.c.bf16 %v3465, %v3465
        %v3609 = vpack.c.bf16 %v3583, %v3583
        %v3610 = vpack.c.bf16 %v3566, %v3566
        %v3611 = vpack.c.bf16 %v3468, %v3468
        %v3612 = vpack.c.bf16 %v3584, %v3584
        %v3613 = vpack.c.bf16 %v3567, %v3567
        %v3614 = vpack.c.bf16 %v3471, %v3471
        %v3615 = vpack.c.bf16 %v3585, %v3585
        %v3616 = vpack.c.bf16 %v3568, %v3568
        %v3617 = vpack.c.bf16 %v3474, %v3474
        %v3618 = vpack.c.bf16 %v3586, %v3586
        %v3619 = vpack.c.bf16 %v3569, %v3569
        %v3620 = vpack.c.bf16 %v3477, %v3477
        %v3621 = vpack.c.bf16 %v3587, %v3587
        %v3622 = vpack.c.bf16 %v3570, %v3570
        %v3623 = vpack.c.bf16 %v3480, %v3480
        %v3624 = vpack.c.bf16 %v3588, %v3588
        %v3625 = vpack.c.bf16 %v3571, %v3571
        %v3626 = vpack.c.bf16 %v3483, %v3483
        %v3627 = vpack.c.bf16 %v3589, %v3589
        %v3628 = vpack.c.bf16 %v3572, %v3572
        %v3629 = vpack.c.bf16 %v3486, %v3486
        %v3630 = vpack.c.bf16 %v3590, %v3590
        %v3631 = vpack.c.bf16 %v3573, %v3573
        %v3632 = vpack.c.bf16 %v3489, %v3489
        %v3633 = vpack.c.bf16 %v3591, %v3591
        %v3634 = vpack.c.bf16 %v3574, %v3574
        %v3635 = vpack.c.bf16 %v3492, %v3492
        %v3636 = vpack.c.bf16 %v3592, %v3592
        %v3637 = vpack.c.bf16 %v3575, %v3575
        %v3638 = vpack.c.bf16 %v3495, %v3495
        %v3639 = vpack.c.bf16 %v3593, %v3593
        %v3640 = vpack.c.bf16 %v3576, %v3576
        %v3641 = vpack.c.bf16 %v3498, %v3498
        %v3642 = vpack.c.bf16 %v3594, %v3594
        %v3643 = vpack.c.bf16 %v3577, %v3577
        %v3644 = vpack.c.bf16 %v3501, %v3501
        %v3645 = vpack.c.bf16 %v3595, %v3595
        %v3646 = vpack.c.bf16 %v3578, %v3578
        %v3647 = vpack.c.bf16 %v3504, %v3504
        %v3648 = vpack.c.bf16 %v3596, %v3596
        %v3649 = vpack.c.bf16 %v3579, %v3579
        %v3650 = vpack.c.bf16 %v3507, %v3507
        %v3651 = vpack.c.bf16 %v3597, %v3597
        %3652 = vst [vmem:[#allocation2] sm:$0xf] %v3598
        %3653 = vst [vmem:[#allocation2 + $0x4] sm:$0xf] %v3599
        %3654 = vst [vmem:[#allocation2 + $0x8] sm:$0x1] %v3600
        %3655 = vst [vmem:[#allocation2 + $0xc] sm:$0xf] %v3601
        %3656 = vst [vmem:[#allocation2 + $0x10] sm:$0xf] %v3602
        %3657 = vst [vmem:[#allocation2 + $0x14] sm:$0x1] %v3603
        %3658 = vst [vmem:[#allocation2 + $0x18] sm:$0xf] %v3604
        %3659 = vst [vmem:[#allocation2 + $0x1c] sm:$0xf] %v3605
        %3660 = vst [vmem:[#allocation2 + $0x20] sm:$0x1] %v3606
        %3661 = vst [vmem:[#allocation2 + $0x24] sm:$0xf] %v3607
        %3662 = vst [vmem:[#allocation2 + $0x28] sm:$0xf] %v3608
        %3663 = vst [vmem:[#allocation2 + $0x2c] sm:$0x1] %v3609
        %3664 = vst [vmem:[#allocation2 + $0x30] sm:$0xf] %v3610
        %3665 = vst [vmem:[#allocation2 + $0x34] sm:$0xf] %v3611
        %3666 = vst [vmem:[#allocation2 + $0x38] sm:$0x1] %v3612
        %3667 = vst [vmem:[#allocation2 + $0x3c] sm:$0xf] %v3613
        %3668 = vst [vmem:[#allocation2 + $0x40] sm:$0xf] %v3614
        %3669 = vst [vmem:[#allocation2 + $0x44] sm:$0x1] %v3615
        %3670 = vst [vmem:[#allocation2 + $0x48] sm:$0xf] %v3616
        %3671 = vst [vmem:[#allocation2 + $0x4c] sm:$0xf] %v3617
        %3672 = vst [vmem:[#allocation2 + $0x50] sm:$0x1] %v3618
        %3673 = vst [vmem:[#allocation2 + $0x54] sm:$0xf] %v3619
        %3674 = vst [vmem:[#allocation2 + $0x58] sm:$0xf] %v3620
        %3675 = vst [vmem:[#allocation2 + $0x5c] sm:$0x1] %v3621
        %3676 = vst [vmem:[#allocation2 + $0x60] sm:$0xf] %v3622
        %3677 = vst [vmem:[#allocation2 + $0x64] sm:$0xf] %v3623
        %3678 = vst [vmem:[#allocation2 + $0x68] sm:$0x1] %v3624
        %3679 = vst [vmem:[#allocation2 + $0x6c] sm:$0xf] %v3625
        %3680 = vst [vmem:[#allocation2 + $0x70] sm:$0xf] %v3626
        %3681 = vst [vmem:[#allocation2 + $0x74] sm:$0x1] %v3627
        %3682 = vst [vmem:[#allocation2 + $0x78] sm:$0xf] %v3628
        %3683 = vst [vmem:[#allocation2 + $0x7c] sm:$0xf] %v3629
        %3684 = vst [vmem:[#allocation2 + $0x80] sm:$0x1] %v3630
        %3685 = vst [vmem:[#allocation2 + $0x84] sm:$0xf] %v3631
        %3686 = vst [vmem:[#allocation2 + $0x88] sm:$0xf] %v3632
        %3687 = vst [vmem:[#allocation2 + $0x8c] sm:$0x1] %v3633
        %3688 = vst [vmem:[#allocation2 + $0x90] sm:$0xf] %v3634
        %3689 = vst [vmem:[#allocation2 + $0x94] sm:$0xf] %v3635
        %3690 = vst [vmem:[#allocation2 + $0x98] sm:$0x1] %v3636
        %3691 = vst [vmem:[#allocation2 + $0x9c] sm:$0xf] %v3637
        %3692 = vst [vmem:[#allocation2 + $0xa0] sm:$0xf] %v3638
        %3693 = vst [vmem:[#allocation2 + $0xa4] sm:$0x1] %v3639
        %3694 = vst [vmem:[#allocation2 + $0xa8] sm:$0xf] %v3640
        %3695 = vst [vmem:[#allocation2 + $0xac] sm:$0xf] %v3641
        %3696 = vst [vmem:[#allocation2 + $0xb0] sm:$0x1] %v3642
        %3697 = vst [vmem:[#allocation2 + $0xb4] sm:$0xf] %v3643
        %3698 = vst [vmem:[#allocation2 + $0xb8] sm:$0xf] %v3644
        %3699 = vst [vmem:[#allocation2 + $0xbc] sm:$0x1] %v3645
        %3700 = vst [vmem:[#allocation2 + $0xc0] sm:$0xf] %v3646
        %3701 = vst [vmem:[#allocation2 + $0xc4] sm:$0xf] %v3647
        %3702 = vst [vmem:[#allocation2 + $0xc8] sm:$0x1] %v3648
        %3703 = vst [vmem:[#allocation2 + $0xcc] sm:$0xf] %v3649
        %3704 = vst [vmem:[#allocation2 + $0xd0] sm:$0xf] %v3650
        %3705 = vst [vmem:[#allocation2 + $0xd4] sm:$0x1] %v3651
        %p3706 = scmp.eq.s32.totalorder %s256, 0
        // Predicated region
        $region45: #{tpu_custom_call.1} parent=39 // pred_check
          %p3707 = pneg %p3706
        $region46: #{tpu_custom_call.1} parent=39 // pred_check_branch
          %3709 = sbr.rel (%p3707) target = $region48
        $region47: #{tpu_custom_call.1} parent=39 // pred_region
          %3710 = vst [vmem:[#allocation2] sm:$0xf] 0
          %3711 = vst [vmem:[#allocation2 + $0x4] sm:$0xf] 0
          %3712 = vst [vmem:[#allocation2 + $0x8] sm:$0x1] 0
        $region48: #{tpu_custom_call.1} parent=39 // pred_fallthru
          _
        %s3713 = sadd.s32 %s256, 16
        %p3714 = scmp.eq.s32.totalorder %s3713, 16
        // Predicated region
        $region49: #{tpu_custom_call.1} parent=39 // pred_check
          %p3715 = pneg %p3714
        $region50: #{tpu_custom_call.1} parent=39 // pred_check_branch
          %3717 = sbr.rel (%p3715) target = $region52
        $region51: #{tpu_custom_call.1} parent=39 // pred_region
          %s3718 = scalar_lea.vmem [#allocation2], 204
          %3719 = vst [vmem:[%s3718] sm:$0xf] 0
          %3720 = vst [vmem:[%s3718 + $0x4] sm:$0xf] 0
          %3721 = vst [vmem:[%s3718 + $0x8] sm:$0x1] 0
        $region52: #{tpu_custom_call.1} parent=39 // pred_fallthru
          _
        %v3722 = vld [vmem:[#allocation2] sm:$0xf]
        %v3723 = vld [vmem:[#allocation2 + $0x4] sm:$0xf]
        %v3724 = vld [vmem:[#allocation2 + $0x8] sm:$0x1]
        %v3725 = vld [vmem:[#allocation2 + $0xc] sm:$0xf]
        %v3726 = vld [vmem:[#allocation2 + $0x10] sm:$0xf]
        %v3727 = vld [vmem:[#allocation2 + $0x14] sm:$0x1]
        %v3728 = vld [vmem:[#allocation2 + $0x18] sm:$0xf]
        %v3729 = vld [vmem:[#allocation2 + $0x1c] sm:$0xf]
        %v3730 = vld [vmem:[#allocation2 + $0x20] sm:$0x1]
        %v3731 = vld [vmem:[#allocation2 + $0x24] sm:$0xf]
        %v3732 = vld [vmem:[#allocation2 + $0x28] sm:$0xf]
        %v3733 = vld [vmem:[#allocation2 + $0x2c] sm:$0x1]
        %v3734 = vld [vmem:[#allocation2 + $0x30] sm:$0xf]
        %v3735 = vld [vmem:[#allocation2 + $0x34] sm:$0xf]
        %v3736 = vld [vmem:[#allocation2 + $0x38] sm:$0x1]
        %v3737 = vld [vmem:[#allocation2 + $0x3c] sm:$0xf]
        %v3738 = vld [vmem:[#allocation2 + $0x40] sm:$0xf]
        %v3739 = vld [vmem:[#allocation2 + $0x44] sm:$0x1]
        %v3740 = vld [vmem:[#allocation2 + $0x48] sm:$0xf]
        %v3741 = vld [vmem:[#allocation2 + $0x4c] sm:$0xf]
        %v3742 = vld [vmem:[#allocation2 + $0x50] sm:$0x1]
        %v3743 = vld [vmem:[#allocation2 + $0x54] sm:$0xf]
        %v3744 = vld [vmem:[#allocation2 + $0x58] sm:$0xf]
        %v3745 = vld [vmem:[#allocation2 + $0x5c] sm:$0x1]
        %v3746 = vld [vmem:[#allocation2 + $0x60] sm:$0xf]
        %v3747 = vld [vmem:[#allocation2 + $0x64] sm:$0xf]
        %v3748 = vld [vmem:[#allocation2 + $0x68] sm:$0x1]
        %v3749 = vld [vmem:[#allocation2 + $0x6c] sm:$0xf]
        %v3750 = vld [vmem:[#allocation2 + $0x70] sm:$0xf]
        %v3751 = vld [vmem:[#allocation2 + $0x74] sm:$0x1]
        %v3752 = vld [vmem:[#allocation2 + $0x78] sm:$0xf]
        %v3753 = vld [vmem:[#allocation2 + $0x7c] sm:$0xf]
        %v3754 = vld [vmem:[#allocation2 + $0x80] sm:$0x1]
        %v3755 = vld [vmem:[#allocation2 + $0x84] sm:$0xf]
        %v3756 = vld [vmem:[#allocation2 + $0x88] sm:$0xf]
        %v3757 = vld [vmem:[#allocation2 + $0x8c] sm:$0x1]
        %v3758 = vld [vmem:[#allocation2 + $0x90] sm:$0xf]
        %v3759 = vld [vmem:[#allocation2 + $0x94] sm:$0xf]
        %v3760 = vld [vmem:[#allocation2 + $0x98] sm:$0x1]
        %v3761 = vld [vmem:[#allocation2 + $0x9c] sm:$0xf]
        %v3762 = vld [vmem:[#allocation2 + $0xa0] sm:$0xf]
        %v3763 = vld [vmem:[#allocation2 + $0xa4] sm:$0x1]
        %v3764 = vld [vmem:[#allocation2 + $0xa8] sm:$0xf]
        %v3765 = vld [vmem:[#allocation2 + $0xac] sm:$0xf]
        %v3766 = vld [vmem:[#allocation2 + $0xb0] sm:$0x1]
        %v3767 = vld [vmem:[#allocation2 + $0xb4] sm:$0xf]
        %v3768 = vld [vmem:[#allocation2 + $0xb8] sm:$0xf]
        %v3769 = vld [vmem:[#allocation2 + $0xbc] sm:$0x1]
        %v3802 = vunpack.c.l.b16 %v3722
        %v3803 = vunpack.c.l.b16 %v3723
        %v3804 = vunpack.c.l.b16 %v3725
        %v3805 = vunpack.c.l.b16 %v3726
        %v3806 = vunpack.c.l.b16 %v3728
        %v3807 = vunpack.c.l.b16 %v3729
        %v3808 = vunpack.c.l.b16 %v3731
        %v3809 = vunpack.c.l.b16 %v3732
        %v3810 = vunpack.c.l.b16 %v3734
        %v3811 = vunpack.c.l.b16 %v3735
        %v3812 = vunpack.c.l.b16 %v3737
        %v3813 = vunpack.c.l.b16 %v3738
        %v3814 = vunpack.c.l.b16 %v3740
        %v3815 = vunpack.c.l.b16 %v3741
        %v3816 = vunpack.c.l.b16 %v3743
        %v3817 = vunpack.c.l.b16 %v3744
        %v3818 = vunpack.c.l.b16 %v3746
        %v3819 = vunpack.c.l.b16 %v3747
        %v3820 = vunpack.c.l.b16 %v3749
        %v3821 = vunpack.c.l.b16 %v3750
        %v3822 = vunpack.c.l.b16 %v3752
        %v3823 = vunpack.c.l.b16 %v3753
        %v3824 = vunpack.c.l.b16 %v3755
        %v3825 = vunpack.c.l.b16 %v3756
        %v3826 = vunpack.c.l.b16 %v3758
        %v3827 = vunpack.c.l.b16 %v3759
        %v3828 = vunpack.c.l.b16 %v3761
        %v3829 = vunpack.c.l.b16 %v3762
        %v3830 = vunpack.c.l.b16 %v3764
        %v3831 = vunpack.c.l.b16 %v3765
        %v3832 = vunpack.c.l.b16 %v3767
        %v3833 = vunpack.c.l.b16 %v3768
        %v3834 = vpack.c.b16 %v3803, %v3802
        %v3835 = vpack.c.b16 %v3805, %v3804
        %v3836 = vpack.c.b16 %v3807, %v3806
        %v3837 = vpack.c.b16 %v3809, %v3808
        %v3838 = vpack.c.b16 %v3811, %v3810
        %v3839 = vpack.c.b16 %v3813, %v3812
        %v3840 = vpack.c.b16 %v3815, %v3814
        %v3841 = vpack.c.b16 %v3817, %v3816
        %v3842 = vpack.c.b16 %v3819, %v3818
        %v3843 = vpack.c.b16 %v3821, %v3820
        %v3844 = vpack.c.b16 %v3823, %v3822
        %v3845 = vpack.c.b16 %v3825, %v3824
        %v3846 = vpack.c.b16 %v3827, %v3826
        %v3847 = vpack.c.b16 %v3829, %v3828
        %v3848 = vpack.c.b16 %v3831, %v3830
        %v3849 = vpack.c.b16 %v3833, %v3832
        %v3882 = vunpack.c.l.b16 %v3724
        %v3883 = vunpack.c.l.b16 %v3727
        %v3884 = vunpack.c.l.b16 %v3730
        %v3885 = vunpack.c.l.b16 %v3733
        %v3886 = vunpack.c.l.b16 %v3736
        %v3887 = vunpack.c.l.b16 %v3739
        %v3888 = vunpack.c.l.b16 %v3742
        %v3889 = vunpack.c.l.b16 %v3745
        %v3890 = vunpack.c.l.b16 %v3748
        %v3891 = vunpack.c.l.b16 %v3751
        %v3892 = vunpack.c.l.b16 %v3754
        %v3893 = vunpack.c.l.b16 %v3757
        %v3894 = vunpack.c.l.b16 %v3760
        %v3895 = vunpack.c.l.b16 %v3763
        %v3896 = vunpack.c.l.b16 %v3766
        %v3897 = vunpack.c.l.b16 %v3769
        %v3898 = vpack.c.b16 %v3882, %v3882
        %v3899 = vpack.c.b16 %v3883, %v3883
        %v3900 = vpack.c.b16 %v3884, %v3884
        %v3901 = vpack.c.b16 %v3885, %v3885
        %v3902 = vpack.c.b16 %v3886, %v3886
        %v3903 = vpack.c.b16 %v3887, %v3887
        %v3904 = vpack.c.b16 %v3888, %v3888
        %v3905 = vpack.c.b16 %v3889, %v3889
        %v3906 = vpack.c.b16 %v3890, %v3890
        %v3907 = vpack.c.b16 %v3891, %v3891
        %v3908 = vpack.c.b16 %v3892, %v3892
        %v3909 = vpack.c.b16 %v3893, %v3893
        %v3910 = vpack.c.b16 %v3894, %v3894
        %v3911 = vpack.c.b16 %v3895, %v3895
        %v3912 = vpack.c.b16 %v3896, %v3896
        %v3913 = vpack.c.b16 %v3897, %v3897
        %v3915 = vshrl.u32 %v3834, 16
        %v3917 = vshll.u32 %v3834, 16
        %v3919 = vrot.slane %v3917, 1
        %v3920 = vor.u32 %v3915, %v3919
        %v3922 = vshll.u32 %v3898, 16
        %v3924 = vrot.slane %v3922, 1
        %v3925 = vsel %vm476, %v3920, %v3924
        %v3927 = vshrl.u32 %v3835, 16
        %v3929 = vshll.u32 %v3835, 16
        %v3931 = vrot.slane %v3929, 1
        %v3932 = vor.u32 %v3927, %v3931
        %v3934 = vshll.u32 %v3899, 16
        %v3936 = vrot.slane %v3934, 1
        %v3937 = vsel %vm476, %v3932, %v3936
        %v3939 = vshrl.u32 %v3836, 16
        %v3941 = vshll.u32 %v3836, 16
        %v3943 = vrot.slane %v3941, 1
        %v3944 = vor.u32 %v3939, %v3943
        %v3946 = vshll.u32 %v3900, 16
        %v3948 = vrot.slane %v3946, 1
        %v3949 = vsel %vm476, %v3944, %v3948
        %v3951 = vshrl.u32 %v3837, 16
        %v3953 = vshll.u32 %v3837, 16
        %v3955 = vrot.slane %v3953, 1
        %v3956 = vor.u32 %v3951, %v3955
        %v3958 = vshll.u32 %v3901, 16
        %v3960 = vrot.slane %v3958, 1
        %v3961 = vsel %vm476, %v3956, %v3960
        %v3963 = vshrl.u32 %v3838, 16
        %v3965 = vshll.u32 %v3838, 16
        %v3967 = vrot.slane %v3965, 1
        %v3968 = vor.u32 %v3963, %v3967
        %v3970 = vshll.u32 %v3902, 16
        %v3972 = vrot.slane %v3970, 1
        %v3973 = vsel %vm476, %v3968, %v3972
        %v3975 = vshrl.u32 %v3839, 16
        %v3977 = vshll.u32 %v3839, 16
        %v3979 = vrot.slane %v3977, 1
        %v3980 = vor.u32 %v3975, %v3979
        %v3982 = vshll.u32 %v3903, 16
        %v3984 = vrot.slane %v3982, 1
        %v3985 = vsel %vm476, %v3980, %v3984
        %v3987 = vshrl.u32 %v3840, 16
        %v3989 = vshll.u32 %v3840, 16
        %v3991 = vrot.slane %v3989, 1
        %v3992 = vor.u32 %v3987, %v3991
        %v3994 = vshll.u32 %v3904, 16
        %v3996 = vrot.slane %v3994, 1
        %v3997 = vsel %vm476, %v3992, %v3996
        %v3999 = vshrl.u32 %v3841, 16
        %v4001 = vshll.u32 %v3841, 16
        %v4003 = vrot.slane %v4001, 1
        %v4004 = vor.u32 %v3999, %v4003
        %v4006 = vshll.u32 %v3905, 16
        %v4008 = vrot.slane %v4006, 1
        %v4009 = vsel %vm476, %v4004, %v4008
        %v4011 = vshrl.u32 %v3842, 16
        %v4013 = vshll.u32 %v3842, 16
        %v4015 = vrot.slane %v4013, 1
        %v4016 = vor.u32 %v4011, %v4015
        %v4018 = vshll.u32 %v3906, 16
        %v4020 = vrot.slane %v4018, 1
        %v4021 = vsel %vm476, %v4016, %v4020
        %v4023 = vshrl.u32 %v3843, 16
        %v4025 = vshll.u32 %v3843, 16
        %v4027 = vrot.slane %v4025, 1
        %v4028 = vor.u32 %v4023, %v4027
        %v4030 = vshll.u32 %v3907, 16
        %v4032 = vrot.slane %v4030, 1
        %v4033 = vsel %vm476, %v4028, %v4032
        %v4035 = vshrl.u32 %v3844, 16
        %v4037 = vshll.u32 %v3844, 16
        %v4039 = vrot.slane %v4037, 1
        %v4040 = vor.u32 %v4035, %v4039
        %v4042 = vshll.u32 %v3908, 16
        %v4044 = vrot.slane %v4042, 1
        %v4045 = vsel %vm476, %v4040, %v4044
        %v4047 = vshrl.u32 %v3845, 16
        %v4049 = vshll.u32 %v3845, 16
        %v4051 = vrot.slane %v4049, 1
        %v4052 = vor.u32 %v4047, %v4051
        %v4054 = vshll.u32 %v3909, 16
        %v4056 = vrot.slane %v4054, 1
        %v4057 = vsel %vm476, %v4052, %v4056
        %v4059 = vshrl.u32 %v3846, 16
        %v4061 = vshll.u32 %v3846, 16
        %v4063 = vrot.slane %v4061, 1
        %v4064 = vor.u32 %v4059, %v4063
        %v4066 = vshll.u32 %v3910, 16
        %v4068 = vrot.slane %v4066, 1
        %v4069 = vsel %vm476, %v4064, %v4068
        %v4071 = vshrl.u32 %v3847, 16
        %v4073 = vshll.u32 %v3847, 16
        %v4075 = vrot.slane %v4073, 1
        %v4076 = vor.u32 %v4071, %v4075
        %v4078 = vshll.u32 %v3911, 16
        %v4080 = vrot.slane %v4078, 1
        %v4081 = vsel %vm476, %v4076, %v4080
        %v4083 = vshrl.u32 %v3848, 16
        %v4085 = vshll.u32 %v3848, 16
        %v4087 = vrot.slane %v4085, 1
        %v4088 = vor.u32 %v4083, %v4087
        %v4090 = vshll.u32 %v3912, 16
        %v4092 = vrot.slane %v4090, 1
        %v4093 = vsel %vm476, %v4088, %v4092
        %v4095 = vshrl.u32 %v3849, 16
        %v4097 = vshll.u32 %v3849, 16
        %v4099 = vrot.slane %v4097, 1
        %v4100 = vor.u32 %v4095, %v4099
        %v4102 = vshll.u32 %v3913, 16
        %v4104 = vrot.slane %v4102, 1
        %v4105 = vsel %vm476, %v4100, %v4104
        %v4122 = vrot.slane %v3834, 1
        %v4123 = vrot.slane %v3898, 1
        %v4124 = vsel %vm711, %v4122, %v4123
        %v4125 = vrot.slane %v3835, 1
        %v4126 = vrot.slane %v3899, 1
        %v4127 = vsel %vm711, %v4125, %v4126
        %v4128 = vrot.slane %v3836, 1
        %v4129 = vrot.slane %v3900, 1
        %v4130 = vsel %vm711, %v4128, %v4129
        %v4131 = vrot.slane %v3837, 1
        %v4132 = vrot.slane %v3901, 1
        %v4133 = vsel %vm711, %v4131, %v4132
        %v4134 = vrot.slane %v3838, 1
        %v4135 = vrot.slane %v3902, 1
        %v4136 = vsel %vm711, %v4134, %v4135
        %v4137 = vrot.slane %v3839, 1
        %v4138 = vrot.slane %v3903, 1
        %v4139 = vsel %vm711, %v4137, %v4138
        %v4140 = vrot.slane %v3840, 1
        %v4141 = vrot.slane %v3904, 1
        %v4142 = vsel %vm711, %v4140, %v4141
        %v4143 = vrot.slane %v3841, 1
        %v4144 = vrot.slane %v3905, 1
        %v4145 = vsel %vm711, %v4143, %v4144
        %v4146 = vrot.slane %v3842, 1
        %v4147 = vrot.slane %v3906, 1
        %v4148 = vsel %vm711, %v4146, %v4147
        %v4149 = vrot.slane %v3843, 1
        %v4150 = vrot.slane %v3907, 1
        %v4151 = vsel %vm711, %v4149, %v4150
        %v4152 = vrot.slane %v3844, 1
        %v4153 = vrot.slane %v3908, 1
        %v4154 = vsel %vm711, %v4152, %v4153
        %v4155 = vrot.slane %v3845, 1
        %v4156 = vrot.slane %v3909, 1
        %v4157 = vsel %vm711, %v4155, %v4156
        %v4158 = vrot.slane %v3846, 1
        %v4159 = vrot.slane %v3910, 1
        %v4160 = vsel %vm711, %v4158, %v4159
        %v4161 = vrot.slane %v3847, 1
        %v4162 = vrot.slane %v3911, 1
        %v4163 = vsel %vm711, %v4161, %v4162
        %v4164 = vrot.slane %v3848, 1
        %v4165 = vrot.slane %v3912, 1
        %v4166 = vsel %vm711, %v4164, %v4165
        %v4167 = vrot.slane %v3849, 1
        %v4168 = vrot.slane %v3913, 1
        %v4169 = vsel %vm711, %v4167, %v4168
        %v4186 = vld [vmem:[#allocation3] sm:$0xf]
        %v4187 = vld [vmem:[#allocation3 + $0x4] sm:$0xf]
        %v4188 = vld [vmem:[#allocation3 + $0x8] sm:$0xf]
        %v4189 = vld [vmem:[#allocation3 + $0xc] sm:$0xf]
        %v4190 = vld [vmem:[#allocation3 + $0x10] sm:$0xf]
        %v4191 = vld [vmem:[#allocation3 + $0x14] sm:$0xf]
        %v4192 = vld [vmem:[#allocation3 + $0x18] sm:$0xf]
        %v4193 = vld [vmem:[#allocation3 + $0x1c] sm:$0xf]
        %v4194 = vld [vmem:[#allocation3 + $0x20] sm:$0xf]
        %v4195 = vld [vmem:[#allocation3 + $0x24] sm:$0xf]
        %v4196 = vld [vmem:[#allocation3 + $0x28] sm:$0xf]
        %v4197 = vld [vmem:[#allocation3 + $0x2c] sm:$0xf]
        %v4198 = vld [vmem:[#allocation3 + $0x30] sm:$0xf]
        %v4199 = vld [vmem:[#allocation3 + $0x34] sm:$0xf]
        %v4200 = vld [vmem:[#allocation3 + $0x38] sm:$0xf]
        %v4201 = vld [vmem:[#allocation3 + $0x3c] sm:$0xf]
        %v4202 = vld [vmem:[#allocation3 + $0x40] sm:$0xf]
        %v4203 = vld [vmem:[#allocation3 + $0x44] sm:$0xf]
        %v4204 = vld [vmem:[#allocation3 + $0x48] sm:$0xf]
        %v4205 = vld [vmem:[#allocation3 + $0x4c] sm:$0xf]
        %v4206 = vld [vmem:[#allocation3 + $0x50] sm:$0xf]
        %v4207 = vld [vmem:[#allocation3 + $0x54] sm:$0xf]
        %v4208 = vld [vmem:[#allocation3 + $0x58] sm:$0xf]
        %v4209 = vld [vmem:[#allocation3 + $0x5c] sm:$0xf]
        %v4210 = vld [vmem:[#allocation3 + $0x60] sm:$0xf]
        %v4211 = vld [vmem:[#allocation3 + $0x64] sm:$0xf]
        %v4212 = vld [vmem:[#allocation3 + $0x68] sm:$0xf]
        %v4213 = vld [vmem:[#allocation3 + $0x6c] sm:$0xf]
        %v4214 = vld [vmem:[#allocation3 + $0x70] sm:$0xf]
        %v4215 = vld [vmem:[#allocation3 + $0x74] sm:$0xf]
        %v4216 = vld [vmem:[#allocation3 + $0x78] sm:$0xf]
        %v4217 = vld [vmem:[#allocation3 + $0x7c] sm:$0xf]
        %v4218 = vld [vmem:[#allocation3 + $0x80] sm:$0xf]
        %v4219 = vld [vmem:[#allocation3 + $0x84] sm:$0xf]
        %v4220 = vld [vmem:[#allocation3 + $0x88] sm:$0xf]
        %v4221 = vld [vmem:[#allocation3 + $0x8c] sm:$0xf]
        %v4222 = vld [vmem:[#allocation3 + $0x90] sm:$0xf]
        %v4223 = vld [vmem:[#allocation3 + $0x94] sm:$0xf]
        %v4224 = vld [vmem:[#allocation3 + $0x98] sm:$0xf]
        %v4225 = vld [vmem:[#allocation3 + $0x9c] sm:$0xf]
        %v4226 = vld [vmem:[#allocation3 + $0xa0] sm:$0xf]
        %v4227 = vld [vmem:[#allocation3 + $0xa4] sm:$0xf]
        %v4228 = vld [vmem:[#allocation3 + $0xa8] sm:$0xf]
        %v4229 = vld [vmem:[#allocation3 + $0xac] sm:$0xf]
        %v4230 = vld [vmem:[#allocation3 + $0xb0] sm:$0xf]
        %v4231 = vld [vmem:[#allocation3 + $0xb4] sm:$0xf]
        %v4232 = vld [vmem:[#allocation3 + $0xb8] sm:$0xf]
        %v4233 = vld [vmem:[#allocation3 + $0xbc] sm:$0xf]
        %s4234 = scalar_lea.vmem [#allocation2], 12
        %v4235 = vld [vmem:[%s4234] sm:$0xf]
        %v4236 = vld [vmem:[%s4234 + $0x4] sm:$0xf]
        %v4237 = vld [vmem:[%s4234 + $0x8] sm:$0x1]
        %v4238 = vld [vmem:[%s4234 + $0xc] sm:$0xf]
        %v4239 = vld [vmem:[%s4234 + $0x10] sm:$0xf]
        %v4240 = vld [vmem:[%s4234 + $0x14] sm:$0x1]
        %v4241 = vld [vmem:[%s4234 + $0x18] sm:$0xf]
        %v4242 = vld [vmem:[%s4234 + $0x1c] sm:$0xf]
        %v4243 = vld [vmem:[%s4234 + $0x20] sm:$0x1]
        %v4244 = vld [vmem:[%s4234 + $0x24] sm:$0xf]
        %v4245 = vld [vmem:[%s4234 + $0x28] sm:$0xf]
        %v4246 = vld [vmem:[%s4234 + $0x2c] sm:$0x1]
        %v4247 = vld [vmem:[%s4234 + $0x30] sm:$0xf]
        %v4248 = vld [vmem:[%s4234 + $0x34] sm:$0xf]
        %v4249 = vld [vmem:[%s4234 + $0x38] sm:$0x1]
        %v4250 = vld [vmem:[%s4234 + $0x3c] sm:$0xf]
        %v4251 = vld [vmem:[%s4234 + $0x40] sm:$0xf]
        %v4252 = vld [vmem:[%s4234 + $0x44] sm:$0x1]
        %v4253 = vld [vmem:[%s4234 + $0x48] sm:$0xf]
        %v4254 = vld [vmem:[%s4234 + $0x4c] sm:$0xf]
        %v4255 = vld [vmem:[%s4234 + $0x50] sm:$0x1]
        %v4256 = vld [vmem:[%s4234 + $0x54] sm:$0xf]
        %v4257 = vld [vmem:[%s4234 + $0x58] sm:$0xf]
        %v4258 = vld [vmem:[%s4234 + $0x5c] sm:$0x1]
        %v4259 = vld [vmem:[%s4234 + $0x60] sm:$0xf]
        %v4260 = vld [vmem:[%s4234 + $0x64] sm:$0xf]
        %v4261 = vld [vmem:[%s4234 + $0x68] sm:$0x1]
        %v4262 = vld [vmem:[%s4234 + $0x6c] sm:$0xf]
        %v4263 = vld [vmem:[%s4234 + $0x70] sm:$0xf]
        %v4264 = vld [vmem:[%s4234 + $0x74] sm:$0x1]
        %v4265 = vld [vmem:[%s4234 + $0x78] sm:$0xf]
        %v4266 = vld [vmem:[%s4234 + $0x7c] sm:$0xf]
        %v4267 = vld [vmem:[%s4234 + $0x80] sm:$0x1]
        %v4268 = vld [vmem:[%s4234 + $0x84] sm:$0xf]
        %v4269 = vld [vmem:[%s4234 + $0x88] sm:$0xf]
        %v4270 = vld [vmem:[%s4234 + $0x8c] sm:$0x1]
        %v4271 = vld [vmem:[%s4234 + $0x90] sm:$0xf]
        %v4272 = vld [vmem:[%s4234 + $0x94] sm:$0xf]
        %v4273 = vld [vmem:[%s4234 + $0x98] sm:$0x1]
        %v4274 = vld [vmem:[%s4234 + $0x9c] sm:$0xf]
        %v4275 = vld [vmem:[%s4234 + $0xa0] sm:$0xf]
        %v4276 = vld [vmem:[%s4234 + $0xa4] sm:$0x1]
        %v4277 = vld [vmem:[%s4234 + $0xa8] sm:$0xf]
        %v4278 = vld [vmem:[%s4234 + $0xac] sm:$0xf]
        %v4279 = vld [vmem:[%s4234 + $0xb0] sm:$0x1]
        %v4280 = vld [vmem:[%s4234 + $0xb4] sm:$0xf]
        %v4281 = vld [vmem:[%s4234 + $0xb8] sm:$0xf]
        %v4282 = vld [vmem:[%s4234 + $0xbc] sm:$0x1]
        %v4315 = vunpack.c.l.b16 %v4235
        %v4316 = vunpack.c.l.b16 %v4236
        %v4317 = vunpack.c.l.b16 %v4238
        %v4318 = vunpack.c.l.b16 %v4239
        %v4319 = vunpack.c.l.b16 %v4241
        %v4320 = vunpack.c.l.b16 %v4242
        %v4321 = vunpack.c.l.b16 %v4244
        %v4322 = vunpack.c.l.b16 %v4245
        %v4323 = vunpack.c.l.b16 %v4247
        %v4324 = vunpack.c.l.b16 %v4248
        %v4325 = vunpack.c.l.b16 %v4250
        %v4326 = vunpack.c.l.b16 %v4251
        %v4327 = vunpack.c.l.b16 %v4253
        %v4328 = vunpack.c.l.b16 %v4254
        %v4329 = vunpack.c.l.b16 %v4256
        %v4330 = vunpack.c.l.b16 %v4257
        %v4331 = vunpack.c.l.b16 %v4259
        %v4332 = vunpack.c.l.b16 %v4260
        %v4333 = vunpack.c.l.b16 %v4262
        %v4334 = vunpack.c.l.b16 %v4263
        %v4335 = vunpack.c.l.b16 %v4265
        %v4336 = vunpack.c.l.b16 %v4266
        %v4337 = vunpack.c.l.b16 %v4268
        %v4338 = vunpack.c.l.b16 %v4269
        %v4339 = vunpack.c.l.b16 %v4271
        %v4340 = vunpack.c.l.b16 %v4272
        %v4341 = vunpack.c.l.b16 %v4274
        %v4342 = vunpack.c.l.b16 %v4275
        %v4343 = vunpack.c.l.b16 %v4277
        %v4344 = vunpack.c.l.b16 %v4278
        %v4345 = vunpack.c.l.b16 %v4280
        %v4346 = vunpack.c.l.b16 %v4281
        %v4347 = vpack.c.b16 %v4316, %v4315
        %v4348 = vpack.c.b16 %v4318, %v4317
        %v4349 = vpack.c.b16 %v4320, %v4319
        %v4350 = vpack.c.b16 %v4322, %v4321
        %v4351 = vpack.c.b16 %v4324, %v4323
        %v4352 = vpack.c.b16 %v4326, %v4325
        %v4353 = vpack.c.b16 %v4328, %v4327
        %v4354 = vpack.c.b16 %v4330, %v4329
        %v4355 = vpack.c.b16 %v4332, %v4331
        %v4356 = vpack.c.b16 %v4334, %v4333
        %v4357 = vpack.c.b16 %v4336, %v4335
        %v4358 = vpack.c.b16 %v4338, %v4337
        %v4359 = vpack.c.b16 %v4340, %v4339
        %v4360 = vpack.c.b16 %v4342, %v4341
        %v4361 = vpack.c.b16 %v4344, %v4343
        %v4362 = vpack.c.b16 %v4346, %v4345
        %v4395 = vunpack.c.l.b16 %v4237
        %v4396 = vunpack.c.l.b16 %v4240
        %v4397 = vunpack.c.l.b16 %v4243
        %v4398 = vunpack.c.l.b16 %v4246
        %v4399 = vunpack.c.l.b16 %v4249
        %v4400 = vunpack.c.l.b16 %v4252
        %v4401 = vunpack.c.l.b16 %v4255
        %v4402 = vunpack.c.l.b16 %v4258
        %v4403 = vunpack.c.l.b16 %v4261
        %v4404 = vunpack.c.l.b16 %v4264
        %v4405 = vunpack.c.l.b16 %v4267
        %v4406 = vunpack.c.l.b16 %v4270
        %v4407 = vunpack.c.l.b16 %v4273
        %v4408 = vunpack.c.l.b16 %v4276
        %v4409 = vunpack.c.l.b16 %v4279
        %v4410 = vunpack.c.l.b16 %v4282
        %v4411 = vpack.c.b16 %v4395, %v4395
        %v4412 = vpack.c.b16 %v4396, %v4396
        %v4413 = vpack.c.b16 %v4397, %v4397
        %v4414 = vpack.c.b16 %v4398, %v4398
        %v4415 = vpack.c.b16 %v4399, %v4399
        %v4416 = vpack.c.b16 %v4400, %v4400
        %v4417 = vpack.c.b16 %v4401, %v4401
        %v4418 = vpack.c.b16 %v4402, %v4402
        %v4419 = vpack.c.b16 %v4403, %v4403
        %v4420 = vpack.c.b16 %v4404, %v4404
        %v4421 = vpack.c.b16 %v4405, %v4405
        %v4422 = vpack.c.b16 %v4406, %v4406
        %v4423 = vpack.c.b16 %v4407, %v4407
        %v4424 = vpack.c.b16 %v4408, %v4408
        %v4425 = vpack.c.b16 %v4409, %v4409
        %v4426 = vpack.c.b16 %v4410, %v4410
        %v4428 = vshrl.u32 %v4347, 16
        %v4430 = vshll.u32 %v4347, 16
        %v4432 = vrot.slane %v4430, 1
        %v4433 = vor.u32 %v4428, %v4432
        %v4435 = vshll.u32 %v4411, 16
        %v4437 = vrot.slane %v4435, 1
        %v4438 = vsel %vm476, %v4433, %v4437
        %v4440 = vshrl.u32 %v4348, 16
        %v4442 = vshll.u32 %v4348, 16
        %v4444 = vrot.slane %v4442, 1
        %v4445 = vor.u32 %v4440, %v4444
        %v4447 = vshll.u32 %v4412, 16
        %v4449 = vrot.slane %v4447, 1
        %v4450 = vsel %vm476, %v4445, %v4449
        %v4452 = vshrl.u32 %v4349, 16
        %v4454 = vshll.u32 %v4349, 16
        %v4456 = vrot.slane %v4454, 1
        %v4457 = vor.u32 %v4452, %v4456
        %v4459 = vshll.u32 %v4413, 16
        %v4461 = vrot.slane %v4459, 1
        %v4462 = vsel %vm476, %v4457, %v4461
        %v4464 = vshrl.u32 %v4350, 16
        %v4466 = vshll.u32 %v4350, 16
        %v4468 = vrot.slane %v4466, 1
        %v4469 = vor.u32 %v4464, %v4468
        %v4471 = vshll.u32 %v4414, 16
        %v4473 = vrot.slane %v4471, 1
        %v4474 = vsel %vm476, %v4469, %v4473
        %v4476 = vshrl.u32 %v4351, 16
        %v4478 = vshll.u32 %v4351, 16
        %v4480 = vrot.slane %v4478, 1
        %v4481 = vor.u32 %v4476, %v4480
        %v4483 = vshll.u32 %v4415, 16
        %v4485 = vrot.slane %v4483, 1
        %v4486 = vsel %vm476, %v4481, %v4485
        %v4488 = vshrl.u32 %v4352, 16
        %v4490 = vshll.u32 %v4352, 16
        %v4492 = vrot.slane %v4490, 1
        %v4493 = vor.u32 %v4488, %v4492
        %v4495 = vshll.u32 %v4416, 16
        %v4497 = vrot.slane %v4495, 1
        %v4498 = vsel %vm476, %v4493, %v4497
        %v4500 = vshrl.u32 %v4353, 16
        %v4502 = vshll.u32 %v4353, 16
        %v4504 = vrot.slane %v4502, 1
        %v4505 = vor.u32 %v4500, %v4504
        %v4507 = vshll.u32 %v4417, 16
        %v4509 = vrot.slane %v4507, 1
        %v4510 = vsel %vm476, %v4505, %v4509
        %v4512 = vshrl.u32 %v4354, 16
        %v4514 = vshll.u32 %v4354, 16
        %v4516 = vrot.slane %v4514, 1
        %v4517 = vor.u32 %v4512, %v4516
        %v4519 = vshll.u32 %v4418, 16
        %v4521 = vrot.slane %v4519, 1
        %v4522 = vsel %vm476, %v4517, %v4521
        %v4524 = vshrl.u32 %v4355, 16
        %v4526 = vshll.u32 %v4355, 16
        %v4528 = vrot.slane %v4526, 1
        %v4529 = vor.u32 %v4524, %v4528
        %v4531 = vshll.u32 %v4419, 16
        %v4533 = vrot.slane %v4531, 1
        %v4534 = vsel %vm476, %v4529, %v4533
        %v4536 = vshrl.u32 %v4356, 16
        %v4538 = vshll.u32 %v4356, 16
        %v4540 = vrot.slane %v4538, 1
        %v4541 = vor.u32 %v4536, %v4540
        %v4543 = vshll.u32 %v4420, 16
        %v4545 = vrot.slane %v4543, 1
        %v4546 = vsel %vm476, %v4541, %v4545
        %v4548 = vshrl.u32 %v4357, 16
        %v4550 = vshll.u32 %v4357, 16
        %v4552 = vrot.slane %v4550, 1
        %v4553 = vor.u32 %v4548, %v4552
        %v4555 = vshll.u32 %v4421, 16
        %v4557 = vrot.slane %v4555, 1
        %v4558 = vsel %vm476, %v4553, %v4557
        %v4560 = vshrl.u32 %v4358, 16
        %v4562 = vshll.u32 %v4358, 16
        %v4564 = vrot.slane %v4562, 1
        %v4565 = vor.u32 %v4560, %v4564
        %v4567 = vshll.u32 %v4422, 16
        %v4569 = vrot.slane %v4567, 1
        %v4570 = vsel %vm476, %v4565, %v4569
        %v4572 = vshrl.u32 %v4359, 16
        %v4574 = vshll.u32 %v4359, 16
        %v4576 = vrot.slane %v4574, 1
        %v4577 = vor.u32 %v4572, %v4576
        %v4579 = vshll.u32 %v4423, 16
        %v4581 = vrot.slane %v4579, 1
        %v4582 = vsel %vm476, %v4577, %v4581
        %v4584 = vshrl.u32 %v4360, 16
        %v4586 = vshll.u32 %v4360, 16
        %v4588 = vrot.slane %v4586, 1
        %v4589 = vor.u32 %v4584, %v4588
        %v4591 = vshll.u32 %v4424, 16
        %v4593 = vrot.slane %v4591, 1
        %v4594 = vsel %vm476, %v4589, %v4593
        %v4596 = vshrl.u32 %v4361, 16
        %v4598 = vshll.u32 %v4361, 16
        %v4600 = vrot.slane %v4598, 1
        %v4601 = vor.u32 %v4596, %v4600
        %v4603 = vshll.u32 %v4425, 16
        %v4605 = vrot.slane %v4603, 1
        %v4606 = vsel %vm476, %v4601, %v4605
        %v4608 = vshrl.u32 %v4362, 16
        %v4610 = vshll.u32 %v4362, 16
        %v4612 = vrot.slane %v4610, 1
        %v4613 = vor.u32 %v4608, %v4612
        %v4615 = vshll.u32 %v4426, 16
        %v4617 = vrot.slane %v4615, 1
        %v4618 = vsel %vm476, %v4613, %v4617
        %v4635 = vrot.slane %v4347, 1
        %v4636 = vrot.slane %v4411, 1
        %v4637 = vsel %vm711, %v4635, %v4636
        %v4638 = vrot.slane %v4348, 1
        %v4639 = vrot.slane %v4412, 1
        %v4640 = vsel %vm711, %v4638, %v4639
        %v4641 = vrot.slane %v4349, 1
        %v4642 = vrot.slane %v4413, 1
        %v4643 = vsel %vm711, %v4641, %v4642
        %v4644 = vrot.slane %v4350, 1
        %v4645 = vrot.slane %v4414, 1
        %v4646 = vsel %vm711, %v4644, %v4645
        %v4647 = vrot.slane %v4351, 1
        %v4648 = vrot.slane %v4415, 1
        %v4649 = vsel %vm711, %v4647, %v4648
        %v4650 = vrot.slane %v4352, 1
        %v4651 = vrot.slane %v4416, 1
        %v4652 = vsel %vm711, %v4650, %v4651
        %v4653 = vrot.slane %v4353, 1
        %v4654 = vrot.slane %v4417, 1
        %v4655 = vsel %vm711, %v4653, %v4654
        %v4656 = vrot.slane %v4354, 1
        %v4657 = vrot.slane %v4418, 1
        %v4658 = vsel %vm711, %v4656, %v4657
        %v4659 = vrot.slane %v4355, 1
        %v4660 = vrot.slane %v4419, 1
        %v4661 = vsel %vm711, %v4659, %v4660
        %v4662 = vrot.slane %v4356, 1
        %v4663 = vrot.slane %v4420, 1
        %v4664 = vsel %vm711, %v4662, %v4663
        %v4665 = vrot.slane %v4357, 1
        %v4666 = vrot.slane %v4421, 1
        %v4667 = vsel %vm711, %v4665, %v4666
        %v4668 = vrot.slane %v4358, 1
        %v4669 = vrot.slane %v4422, 1
        %v4670 = vsel %vm711, %v4668, %v4669
        %v4671 = vrot.slane %v4359, 1
        %v4672 = vrot.slane %v4423, 1
        %v4673 = vsel %vm711, %v4671, %v4672
        %v4674 = vrot.slane %v4360, 1
        %v4675 = vrot.slane %v4424, 1
        %v4676 = vsel %vm711, %v4674, %v4675
        %v4677 = vrot.slane %v4361, 1
        %v4678 = vrot.slane %v4425, 1
        %v4679 = vsel %vm711, %v4677, %v4678
        %v4680 = vrot.slane %v4362, 1
        %v4681 = vrot.slane %v4426, 1
        %v4682 = vsel %vm711, %v4680, %v4681
        %s4699 = scalar_lea.vmem [#allocation3], 192
        %v4700 = vld [vmem:[%s4699] sm:$0xf]
        %v4701 = vld [vmem:[%s4699 + $0x4] sm:$0xf]
        %v4702 = vld [vmem:[%s4699 + $0x8] sm:$0xf]
        %v4703 = vld [vmem:[%s4699 + $0xc] sm:$0xf]
        %v4704 = vld [vmem:[%s4699 + $0x10] sm:$0xf]
        %v4705 = vld [vmem:[%s4699 + $0x14] sm:$0xf]
        %v4706 = vld [vmem:[%s4699 + $0x18] sm:$0xf]
        %v4707 = vld [vmem:[%s4699 + $0x1c] sm:$0xf]
        %v4708 = vld [vmem:[%s4699 + $0x20] sm:$0xf]
        %v4709 = vld [vmem:[%s4699 + $0x24] sm:$0xf]
        %v4710 = vld [vmem:[%s4699 + $0x28] sm:$0xf]
        %v4711 = vld [vmem:[%s4699 + $0x2c] sm:$0xf]
        %v4712 = vld [vmem:[%s4699 + $0x30] sm:$0xf]
        %v4713 = vld [vmem:[%s4699 + $0x34] sm:$0xf]
        %v4714 = vld [vmem:[%s4699 + $0x38] sm:$0xf]
        %v4715 = vld [vmem:[%s4699 + $0x3c] sm:$0xf]
        %v4716 = vld [vmem:[%s4699 + $0x40] sm:$0xf]
        %v4717 = vld [vmem:[%s4699 + $0x44] sm:$0xf]
        %v4718 = vld [vmem:[%s4699 + $0x48] sm:$0xf]
        %v4719 = vld [vmem:[%s4699 + $0x4c] sm:$0xf]
        %v4720 = vld [vmem:[%s4699 + $0x50] sm:$0xf]
        %v4721 = vld [vmem:[%s4699 + $0x54] sm:$0xf]
        %v4722 = vld [vmem:[%s4699 + $0x58] sm:$0xf]
        %v4723 = vld [vmem:[%s4699 + $0x5c] sm:$0xf]
        %v4724 = vld [vmem:[%s4699 + $0x60] sm:$0xf]
        %v4725 = vld [vmem:[%s4699 + $0x64] sm:$0xf]
        %v4726 = vld [vmem:[%s4699 + $0x68] sm:$0xf]
        %v4727 = vld [vmem:[%s4699 + $0x6c] sm:$0xf]
        %v4728 = vld [vmem:[%s4699 + $0x70] sm:$0xf]
        %v4729 = vld [vmem:[%s4699 + $0x74] sm:$0xf]
        %v4730 = vld [vmem:[%s4699 + $0x78] sm:$0xf]
        %v4731 = vld [vmem:[%s4699 + $0x7c] sm:$0xf]
        %v4732 = vld [vmem:[%s4699 + $0x80] sm:$0xf]
        %v4733 = vld [vmem:[%s4699 + $0x84] sm:$0xf]
        %v4734 = vld [vmem:[%s4699 + $0x88] sm:$0xf]
        %v4735 = vld [vmem:[%s4699 + $0x8c] sm:$0xf]
        %v4736 = vld [vmem:[%s4699 + $0x90] sm:$0xf]
        %v4737 = vld [vmem:[%s4699 + $0x94] sm:$0xf]
        %v4738 = vld [vmem:[%s4699 + $0x98] sm:$0xf]
        %v4739 = vld [vmem:[%s4699 + $0x9c] sm:$0xf]
        %v4740 = vld [vmem:[%s4699 + $0xa0] sm:$0xf]
        %v4741 = vld [vmem:[%s4699 + $0xa4] sm:$0xf]
        %v4742 = vld [vmem:[%s4699 + $0xa8] sm:$0xf]
        %v4743 = vld [vmem:[%s4699 + $0xac] sm:$0xf]
        %v4744 = vld [vmem:[%s4699 + $0xb0] sm:$0xf]
        %v4745 = vld [vmem:[%s4699 + $0xb4] sm:$0xf]
        %v4746 = vld [vmem:[%s4699 + $0xb8] sm:$0xf]
        %v4747 = vld [vmem:[%s4699 + $0xbc] sm:$0xf]
        %v4796 = vunpack.c.l.b16 %v4700
        %v4797 = vunpack.c.l.b16 %v4701
        %v4798 = vunpack.c.l.b16 %v4702
        %v4799 = vunpack.c.l.b16 %v4703
        %v4800 = vunpack.c.l.b16 %v4704
        %v4801 = vunpack.c.l.b16 %v4705
        %v4802 = vunpack.c.l.b16 %v4706
        %v4803 = vunpack.c.l.b16 %v4707
        %v4804 = vunpack.c.l.b16 %v4708
        %v4805 = vunpack.c.l.b16 %v4709
        %v4806 = vunpack.c.l.b16 %v4710
        %v4807 = vunpack.c.l.b16 %v4711
        %v4808 = vunpack.c.l.b16 %v4712
        %v4809 = vunpack.c.l.b16 %v4713
        %v4810 = vunpack.c.l.b16 %v4714
        %v4811 = vunpack.c.l.b16 %v4715
        %v4812 = vunpack.c.l.b16 %v4716
        %v4813 = vunpack.c.l.b16 %v4717
        %v4814 = vunpack.c.l.b16 %v4718
        %v4815 = vunpack.c.l.b16 %v4719
        %v4816 = vunpack.c.l.b16 %v4720
        %v4817 = vunpack.c.l.b16 %v4721
        %v4818 = vunpack.c.l.b16 %v4722
        %v4819 = vunpack.c.l.b16 %v4723
        %v4820 = vunpack.c.l.b16 %v4724
        %v4821 = vunpack.c.l.b16 %v4725
        %v4822 = vunpack.c.l.b16 %v4726
        %v4823 = vunpack.c.l.b16 %v4727
        %v4824 = vunpack.c.l.b16 %v4728
        %v4825 = vunpack.c.l.b16 %v4729
        %v4826 = vunpack.c.l.b16 %v4730
        %v4827 = vunpack.c.l.b16 %v4731
        %v4828 = vunpack.c.l.b16 %v4732
        %v4829 = vunpack.c.l.b16 %v4733
        %v4830 = vunpack.c.l.b16 %v4734
        %v4831 = vunpack.c.l.b16 %v4735
        %v4832 = vunpack.c.l.b16 %v4736
        %v4833 = vunpack.c.l.b16 %v4737
        %v4834 = vunpack.c.l.b16 %v4738
        %v4835 = vunpack.c.l.b16 %v4739
        %v4836 = vunpack.c.l.b16 %v4740
        %v4837 = vunpack.c.l.b16 %v4741
        %v4838 = vunpack.c.l.b16 %v4742
        %v4839 = vunpack.c.l.b16 %v4743
        %v4840 = vunpack.c.l.b16 %v4744
        %v4841 = vunpack.c.l.b16 %v4745
        %v4842 = vunpack.c.l.b16 %v4746
        %v4843 = vunpack.c.l.b16 %v4747
        %v4844 = vpack.c.b16 %v4797, %v4796
        %v4845 = vpack.c.b16 %v4799, %v4798
        %v4846 = vpack.c.b16 %v4801, %v4800
        %v4847 = vpack.c.b16 %v4803, %v4802
        %v4848 = vpack.c.b16 %v4805, %v4804
        %v4849 = vpack.c.b16 %v4807, %v4806
        %v4850 = vpack.c.b16 %v4809, %v4808
        %v4851 = vpack.c.b16 %v4811, %v4810
        %v4852 = vpack.c.b16 %v4813, %v4812
        %v4853 = vpack.c.b16 %v4815, %v4814
        %v4854 = vpack.c.b16 %v4817, %v4816
        %v4855 = vpack.c.b16 %v4819, %v4818
        %v4856 = vpack.c.b16 %v4821, %v4820
        %v4857 = vpack.c.b16 %v4823, %v4822
        %v4858 = vpack.c.b16 %v4825, %v4824
        %v4859 = vpack.c.b16 %v4827, %v4826
        %v4860 = vpack.c.b16 %v4829, %v4828
        %v4861 = vpack.c.b16 %v4831, %v4830
        %v4862 = vpack.c.b16 %v4833, %v4832
        %v4863 = vpack.c.b16 %v4835, %v4834
        %v4864 = vpack.c.b16 %v4837, %v4836
        %v4865 = vpack.c.b16 %v4839, %v4838
        %v4866 = vpack.c.b16 %v4841, %v4840
        %v4867 = vpack.c.b16 %v4843, %v4842
        %4892 = vmatpush.bf16.msra.mxu0 %v4851
        %4893 = vmatpush.bf16.msra.mxu0 %v4850
        %4894 = vmatpush.bf16.msra.mxu0 %v4849
        %4895 = vmatpush.bf16.msra.mxu0 %v4848
        %4896 = vmatpush.bf16.msra.mxu0 %v4847
        %4897 = vmatpush.bf16.msra.mxu0 %v4846
        %4898 = vmatpush.bf16.msra.mxu0 %v4845
        %4899 = vmatpush.bf16.msra.mxu0 %v4844
        %4900 = vmatmul.bf16.gmra.mxu0 %v4347
        %v4901 = vpop.f32.mrf.mxu0
        %v4902 = vadd.f32 0.0, %v4901
        %v4903 = vpop.f32.mrf.mxu0
        %v4904 = vadd.f32 0.0, %v4903
        %4905 = vmatmul.bf16.gmra.mxu0 %v4348
        %v4906 = vpop.f32.mrf.mxu0
        %v4907 = vadd.f32 0.0, %v4906
        %v4908 = vpop.f32.mrf.mxu0
        %v4909 = vadd.f32 0.0, %v4908
        %4910 = vmatmul.bf16.gmra.mxu0 %v4349
        %v4911 = vpop.f32.mrf.mxu0
        %v4912 = vadd.f32 0.0, %v4911
        %v4913 = vpop.f32.mrf.mxu0
        %v4914 = vadd.f32 0.0, %v4913
        %4915 = vmatmul.bf16.gmra.mxu0 %v4350
        %v4916 = vpop.f32.mrf.mxu0
        %v4917 = vadd.f32 0.0, %v4916
        %v4918 = vpop.f32.mrf.mxu0
        %v4919 = vadd.f32 0.0, %v4918
        %4920 = vmatmul.bf16.gmra.mxu0 %v4351
        %v4921 = vpop.f32.mrf.mxu0
        %v4922 = vadd.f32 0.0, %v4921
        %v4923 = vpop.f32.mrf.mxu0
        %v4924 = vadd.f32 0.0, %v4923
        %4925 = vmatmul.bf16.gmra.mxu0 %v4352
        %v4926 = vpop.f32.mrf.mxu0
        %v4927 = vadd.f32 0.0, %v4926
        %v4928 = vpop.f32.mrf.mxu0
        %v4929 = vadd.f32 0.0, %v4928
        %4930 = vmatmul.bf16.gmra.mxu0 %v4353
        %v4931 = vpop.f32.mrf.mxu0
        %v4932 = vadd.f32 0.0, %v4931
        %v4933 = vpop.f32.mrf.mxu0
        %v4934 = vadd.f32 0.0, %v4933
        %4935 = vmatmul.bf16.gmra.mxu0 %v4354
        %v4936 = vpop.f32.mrf.mxu0
        %v4937 = vadd.f32 0.0, %v4936
        %v4938 = vpop.f32.mrf.mxu0
        %v4939 = vadd.f32 0.0, %v4938
        %4940 = vmatmul.bf16.gmra.mxu0 %v4355
        %v4941 = vpop.f32.mrf.mxu0
        %v4942 = vadd.f32 0.0, %v4941
        %v4943 = vpop.f32.mrf.mxu0
        %v4944 = vadd.f32 0.0, %v4943
        %4945 = vmatmul.bf16.gmra.mxu0 %v4356
        %v4946 = vpop.f32.mrf.mxu0
        %v4947 = vadd.f32 0.0, %v4946
        %v4948 = vpop.f32.mrf.mxu0
        %v4949 = vadd.f32 0.0, %v4948
        %4950 = vmatmul.bf16.gmra.mxu0 %v4357
        %v4951 = vpop.f32.mrf.mxu0
        %v4952 = vadd.f32 0.0, %v4951
        %v4953 = vpop.f32.mrf.mxu0
        %v4954 = vadd.f32 0.0, %v4953
        %4955 = vmatmul.bf16.gmra.mxu0 %v4358
        %v4956 = vpop.f32.mrf.mxu0
        %v4957 = vadd.f32 0.0, %v4956
        %v4958 = vpop.f32.mrf.mxu0
        %v4959 = vadd.f32 0.0, %v4958
        %4960 = vmatmul.bf16.gmra.mxu0 %v4359
        %v4961 = vpop.f32.mrf.mxu0
        %v4962 = vadd.f32 0.0, %v4961
        %v4963 = vpop.f32.mrf.mxu0
        %v4964 = vadd.f32 0.0, %v4963
        %4965 = vmatmul.bf16.gmra.mxu0 %v4360
        %v4966 = vpop.f32.mrf.mxu0
        %v4967 = vadd.f32 0.0, %v4966
        %v4968 = vpop.f32.mrf.mxu0
        %v4969 = vadd.f32 0.0, %v4968
        %4970 = vmatmul.bf16.gmra.mxu0 %v4361
        %v4971 = vpop.f32.mrf.mxu0
        %v4972 = vadd.f32 0.0, %v4971
        %v4973 = vpop.f32.mrf.mxu0
        %v4974 = vadd.f32 0.0, %v4973
        %4975 = vmatmul.bf16.gmra.mxu0 %v4362
        %v4976 = vpop.f32.mrf.mxu0
        %v4977 = vadd.f32 0.0, %v4976
        %v4978 = vpop.f32.mrf.mxu0
        %v4979 = vadd.f32 0.0, %v4978
        %4980 = vdwg.mxu0
        %4981 = vmatpush.bf16.msra.mxu0 %v4859
        %4982 = vmatpush.bf16.msra.mxu0 %v4858
        %4983 = vmatpush.bf16.msra.mxu0 %v4857
        %4984 = vmatpush.bf16.msra.mxu0 %v4856
        %4985 = vmatpush.bf16.msra.mxu0 %v4855
        %4986 = vmatpush.bf16.msra.mxu0 %v4854
        %4987 = vmatpush.bf16.msra.mxu0 %v4853
        %4988 = vmatpush.bf16.msra.mxu0 %v4852
        %4989 = vmatmul.bf16.gmra.mxu0 %v4438
        %v4990 = vpop.f32.mrf.mxu0
        %v4991 = vadd.f32 %v4902, %v4990
        %v4992 = vpop.f32.mrf.mxu0
        %v4993 = vadd.f32 %v4904, %v4992
        %4994 = vmatmul.bf16.gmra.mxu0 %v4450
        %v4995 = vpop.f32.mrf.mxu0
        %v4996 = vadd.f32 %v4907, %v4995
        %v4997 = vpop.f32.mrf.mxu0
        %v4998 = vadd.f32 %v4909, %v4997
        %4999 = vmatmul.bf16.gmra.mxu0 %v4462
        %v5000 = vpop.f32.mrf.mxu0
        %v5001 = vadd.f32 %v4912, %v5000
        %v5002 = vpop.f32.mrf.mxu0
        %v5003 = vadd.f32 %v4914, %v5002
        %5004 = vmatmul.bf16.gmra.mxu0 %v4474
        %v5005 = vpop.f32.mrf.mxu0
        %v5006 = vadd.f32 %v4917, %v5005
        %v5007 = vpop.f32.mrf.mxu0
        %v5008 = vadd.f32 %v4919, %v5007
        %5009 = vmatmul.bf16.gmra.mxu0 %v4486
        %v5010 = vpop.f32.mrf.mxu0
        %v5011 = vadd.f32 %v4922, %v5010
        %v5012 = vpop.f32.mrf.mxu0
        %v5013 = vadd.f32 %v4924, %v5012
        %5014 = vmatmul.bf16.gmra.mxu0 %v4498
        %v5015 = vpop.f32.mrf.mxu0
        %v5016 = vadd.f32 %v4927, %v5015
        %v5017 = vpop.f32.mrf.mxu0
        %v5018 = vadd.f32 %v4929, %v5017
        %5019 = vmatmul.bf16.gmra.mxu0 %v4510
        %v5020 = vpop.f32.mrf.mxu0
        %v5021 = vadd.f32 %v4932, %v5020
        %v5022 = vpop.f32.mrf.mxu0
        %v5023 = vadd.f32 %v4934, %v5022
        %5024 = vmatmul.bf16.gmra.mxu0 %v4522
        %v5025 = vpop.f32.mrf.mxu0
        %v5026 = vadd.f32 %v4937, %v5025
        %v5027 = vpop.f32.mrf.mxu0
        %v5028 = vadd.f32 %v4939, %v5027
        %5029 = vmatmul.bf16.gmra.mxu0 %v4534
        %v5030 = vpop.f32.mrf.mxu0
        %v5031 = vadd.f32 %v4942, %v5030
        %v5032 = vpop.f32.mrf.mxu0
        %v5033 = vadd.f32 %v4944, %v5032
        %5034 = vmatmul.bf16.gmra.mxu0 %v4546
        %v5035 = vpop.f32.mrf.mxu0
        %v5036 = vadd.f32 %v4947, %v5035
        %v5037 = vpop.f32.mrf.mxu0
        %v5038 = vadd.f32 %v4949, %v5037
        %5039 = vmatmul.bf16.gmra.mxu0 %v4558
        %v5040 = vpop.f32.mrf.mxu0
        %v5041 = vadd.f32 %v4952, %v5040
        %v5042 = vpop.f32.mrf.mxu0
        %v5043 = vadd.f32 %v4954, %v5042
        %5044 = vmatmul.bf16.gmra.mxu0 %v4570
        %v5045 = vpop.f32.mrf.mxu0
        %v5046 = vadd.f32 %v4957, %v5045
        %v5047 = vpop.f32.mrf.mxu0
        %v5048 = vadd.f32 %v4959, %v5047
        %5049 = vmatmul.bf16.gmra.mxu0 %v4582
        %v5050 = vpop.f32.mrf.mxu0
        %v5051 = vadd.f32 %v4962, %v5050
        %v5052 = vpop.f32.mrf.mxu0
        %v5053 = vadd.f32 %v4964, %v5052
        %5054 = vmatmul.bf16.gmra.mxu0 %v4594
        %v5055 = vpop.f32.mrf.mxu0
        %v5056 = vadd.f32 %v4967, %v5055
        %v5057 = vpop.f32.mrf.mxu0
        %v5058 = vadd.f32 %v4969, %v5057
        %5059 = vmatmul.bf16.gmra.mxu0 %v4606
        %v5060 = vpop.f32.mrf.mxu0
        %v5061 = vadd.f32 %v4972, %v5060
        %v5062 = vpop.f32.mrf.mxu0
        %v5063 = vadd.f32 %v4974, %v5062
        %5064 = vmatmul.bf16.gmra.mxu0 %v4618
        %v5065 = vpop.f32.mrf.mxu0
        %v5066 = vadd.f32 %v4977, %v5065
        %v5067 = vpop.f32.mrf.mxu0
        %v5068 = vadd.f32 %v4979, %v5067
        %5069 = vdwg.mxu0
        %5070 = vmatpush.bf16.msra.mxu0 %v4867
        %5071 = vmatpush.bf16.msra.mxu0 %v4866
        %5072 = vmatpush.bf16.msra.mxu0 %v4865
        %5073 = vmatpush.bf16.msra.mxu0 %v4864
        %5074 = vmatpush.bf16.msra.mxu0 %v4863
        %5075 = vmatpush.bf16.msra.mxu0 %v4862
        %5076 = vmatpush.bf16.msra.mxu0 %v4861
        %5077 = vmatpush.bf16.msra.mxu0 %v4860
        %5078 = vmatmul.bf16.gmra.mxu0 %v4637
        %v5079 = vpop.f32.mrf.mxu0
        %v5080 = vadd.f32 %v4991, %v5079
        %v5081 = vpop.f32.mrf.mxu0
        %v5082 = vadd.f32 %v4993, %v5081
        %5083 = vmatmul.bf16.gmra.mxu0 %v4640
        %v5084 = vpop.f32.mrf.mxu0
        %v5085 = vadd.f32 %v4996, %v5084
        %v5086 = vpop.f32.mrf.mxu0
        %v5087 = vadd.f32 %v4998, %v5086
        %5088 = vmatmul.bf16.gmra.mxu0 %v4643
        %v5089 = vpop.f32.mrf.mxu0
        %v5090 = vadd.f32 %v5001, %v5089
        %v5091 = vpop.f32.mrf.mxu0
        %v5092 = vadd.f32 %v5003, %v5091
        %5093 = vmatmul.bf16.gmra.mxu0 %v4646
        %v5094 = vpop.f32.mrf.mxu0
        %v5095 = vadd.f32 %v5006, %v5094
        %v5096 = vpop.f32.mrf.mxu0
        %v5097 = vadd.f32 %v5008, %v5096
        %5098 = vmatmul.bf16.gmra.mxu0 %v4649
        %v5099 = vpop.f32.mrf.mxu0
        %v5100 = vadd.f32 %v5011, %v5099
        %v5101 = vpop.f32.mrf.mxu0
        %v5102 = vadd.f32 %v5013, %v5101
        %5103 = vmatmul.bf16.gmra.mxu0 %v4652
        %v5104 = vpop.f32.mrf.mxu0
        %v5105 = vadd.f32 %v5016, %v5104
        %v5106 = vpop.f32.mrf.mxu0
        %v5107 = vadd.f32 %v5018, %v5106
        %5108 = vmatmul.bf16.gmra.mxu0 %v4655
        %v5109 = vpop.f32.mrf.mxu0
        %v5110 = vadd.f32 %v5021, %v5109
        %v5111 = vpop.f32.mrf.mxu0
        %v5112 = vadd.f32 %v5023, %v5111
        %5113 = vmatmul.bf16.gmra.mxu0 %v4658
        %v5114 = vpop.f32.mrf.mxu0
        %v5115 = vadd.f32 %v5026, %v5114
        %v5116 = vpop.f32.mrf.mxu0
        %v5117 = vadd.f32 %v5028, %v5116
        %5118 = vmatmul.bf16.gmra.mxu0 %v4661
        %v5119 = vpop.f32.mrf.mxu0
        %v5120 = vadd.f32 %v5031, %v5119
        %v5121 = vpop.f32.mrf.mxu0
        %v5122 = vadd.f32 %v5033, %v5121
        %5123 = vmatmul.bf16.gmra.mxu0 %v4664
        %v5124 = vpop.f32.mrf.mxu0
        %v5125 = vadd.f32 %v5036, %v5124
        %v5126 = vpop.f32.mrf.mxu0
        %v5127 = vadd.f32 %v5038, %v5126
        %5128 = vmatmul.bf16.gmra.mxu0 %v4667
        %v5129 = vpop.f32.mrf.mxu0
        %v5130 = vadd.f32 %v5041, %v5129
        %v5131 = vpop.f32.mrf.mxu0
        %v5132 = vadd.f32 %v5043, %v5131
        %5133 = vmatmul.bf16.gmra.mxu0 %v4670
        %v5134 = vpop.f32.mrf.mxu0
        %v5135 = vadd.f32 %v5046, %v5134
        %v5136 = vpop.f32.mrf.mxu0
        %v5137 = vadd.f32 %v5048, %v5136
        %5138 = vmatmul.bf16.gmra.mxu0 %v4673
        %v5139 = vpop.f32.mrf.mxu0
        %v5140 = vadd.f32 %v5051, %v5139
        %v5141 = vpop.f32.mrf.mxu0
        %v5142 = vadd.f32 %v5053, %v5141
        %5143 = vmatmul.bf16.gmra.mxu0 %v4676
        %v5144 = vpop.f32.mrf.mxu0
        %v5145 = vadd.f32 %v5056, %v5144
        %v5146 = vpop.f32.mrf.mxu0
        %v5147 = vadd.f32 %v5058, %v5146
        %5148 = vmatmul.bf16.gmra.mxu0 %v4679
        %v5149 = vpop.f32.mrf.mxu0
        %v5150 = vadd.f32 %v5061, %v5149
        %v5151 = vpop.f32.mrf.mxu0
        %v5152 = vadd.f32 %v5063, %v5151
        %5153 = vmatmul.bf16.gmra.mxu0 %v4682
        %v5154 = vpop.f32.mrf.mxu0
        %v5155 = vadd.f32 %v5066, %v5154
        %v5156 = vpop.f32.mrf.mxu0
        %v5157 = vadd.f32 %v5068, %v5156
        %5158 = vdwg.mxu0
        %v5207 = vunpack.c.l.b16 %v4186
        %v5208 = vunpack.c.l.b16 %v4187
        %v5209 = vunpack.c.l.b16 %v4188
        %v5210 = vunpack.c.l.b16 %v4189
        %v5211 = vunpack.c.l.b16 %v4190
        %v5212 = vunpack.c.l.b16 %v4191
        %v5213 = vunpack.c.l.b16 %v4192
        %v5214 = vunpack.c.l.b16 %v4193
        %v5215 = vunpack.c.l.b16 %v4194
        %v5216 = vunpack.c.l.b16 %v4195
        %v5217 = vunpack.c.l.b16 %v4196
        %v5218 = vunpack.c.l.b16 %v4197
        %v5219 = vunpack.c.l.b16 %v4198
        %v5220 = vunpack.c.l.b16 %v4199
        %v5221 = vunpack.c.l.b16 %v4200
        %v5222 = vunpack.c.l.b16 %v4201
        %v5223 = vunpack.c.l.b16 %v4202
        %v5224 = vunpack.c.l.b16 %v4203
        %v5225 = vunpack.c.l.b16 %v4204
        %v5226 = vunpack.c.l.b16 %v4205
        %v5227 = vunpack.c.l.b16 %v4206
        %v5228 = vunpack.c.l.b16 %v4207
        %v5229 = vunpack.c.l.b16 %v4208
        %v5230 = vunpack.c.l.b16 %v4209
        %v5231 = vunpack.c.l.b16 %v4210
        %v5232 = vunpack.c.l.b16 %v4211
        %v5233 = vunpack.c.l.b16 %v4212
        %v5234 = vunpack.c.l.b16 %v4213
        %v5235 = vunpack.c.l.b16 %v4214
        %v5236 = vunpack.c.l.b16 %v4215
        %v5237 = vunpack.c.l.b16 %v4216
        %v5238 = vunpack.c.l.b16 %v4217
        %v5239 = vunpack.c.l.b16 %v4218
        %v5240 = vunpack.c.l.b16 %v4219
        %v5241 = vunpack.c.l.b16 %v4220
        %v5242 = vunpack.c.l.b16 %v4221
        %v5243 = vunpack.c.l.b16 %v4222
        %v5244 = vunpack.c.l.b16 %v4223
        %v5245 = vunpack.c.l.b16 %v4224
        %v5246 = vunpack.c.l.b16 %v4225
        %v5247 = vunpack.c.l.b16 %v4226
        %v5248 = vunpack.c.l.b16 %v4227
        %v5249 = vunpack.c.l.b16 %v4228
        %v5250 = vunpack.c.l.b16 %v4229
        %v5251 = vunpack.c.l.b16 %v4230
        %v5252 = vunpack.c.l.b16 %v4231
        %v5253 = vunpack.c.l.b16 %v4232
        %v5254 = vunpack.c.l.b16 %v4233
        %v5255 = vpack.c.b16 %v5208, %v5207
        %v5256 = vpack.c.b16 %v5210, %v5209
        %v5257 = vpack.c.b16 %v5212, %v5211
        %v5258 = vpack.c.b16 %v5214, %v5213
        %v5259 = vpack.c.b16 %v5216, %v5215
        %v5260 = vpack.c.b16 %v5218, %v5217
        %v5261 = vpack.c.b16 %v5220, %v5219
        %v5262 = vpack.c.b16 %v5222, %v5221
        %v5263 = vpack.c.b16 %v5224, %v5223
        %v5264 = vpack.c.b16 %v5226, %v5225
        %v5265 = vpack.c.b16 %v5228, %v5227
        %v5266 = vpack.c.b16 %v5230, %v5229
        %v5267 = vpack.c.b16 %v5232, %v5231
        %v5268 = vpack.c.b16 %v5234, %v5233
        %v5269 = vpack.c.b16 %v5236, %v5235
        %v5270 = vpack.c.b16 %v5238, %v5237
        %v5271 = vpack.c.b16 %v5240, %v5239
        %v5272 = vpack.c.b16 %v5242, %v5241
        %v5273 = vpack.c.b16 %v5244, %v5243
        %v5274 = vpack.c.b16 %v5246, %v5245
        %v5275 = vpack.c.b16 %v5248, %v5247
        %v5276 = vpack.c.b16 %v5250, %v5249
        %v5277 = vpack.c.b16 %v5252, %v5251
        %v5278 = vpack.c.b16 %v5254, %v5253
        %5303 = vmatpush.bf16.msra.mxu0 %v5262
        %5304 = vmatpush.bf16.msra.mxu0 %v5261
        %5305 = vmatpush.bf16.msra.mxu0 %v5260
        %5306 = vmatpush.bf16.msra.mxu0 %v5259
        %5307 = vmatpush.bf16.msra.mxu0 %v5258
        %5308 = vmatpush.bf16.msra.mxu0 %v5257
        %5309 = vmatpush.bf16.msra.mxu0 %v5256
        %5310 = vmatpush.bf16.msra.mxu0 %v5255
        %5311 = vmatmul.bf16.gmra.mxu0 %v3834
        %v5312 = vpop.f32.mrf.mxu0
        %v5313 = vadd.f32 %v5080, %v5312
        %v5314 = vpop.f32.mrf.mxu0
        %v5315 = vadd.f32 %v5082, %v5314
        %5316 = vmatmul.bf16.gmra.mxu0 %v3835
        %v5317 = vpop.f32.mrf.mxu0
        %v5318 = vadd.f32 %v5085, %v5317
        %v5319 = vpop.f32.mrf.mxu0
        %v5320 = vadd.f32 %v5087, %v5319
        %5321 = vmatmul.bf16.gmra.mxu0 %v3836
        %v5322 = vpop.f32.mrf.mxu0
        %v5323 = vadd.f32 %v5090, %v5322
        %v5324 = vpop.f32.mrf.mxu0
        %v5325 = vadd.f32 %v5092, %v5324
        %5326 = vmatmul.bf16.gmra.mxu0 %v3837
        %v5327 = vpop.f32.mrf.mxu0
        %v5328 = vadd.f32 %v5095, %v5327
        %v5329 = vpop.f32.mrf.mxu0
        %v5330 = vadd.f32 %v5097, %v5329
        %5331 = vmatmul.bf16.gmra.mxu0 %v3838
        %v5332 = vpop.f32.mrf.mxu0
        %v5333 = vadd.f32 %v5100, %v5332
        %v5334 = vpop.f32.mrf.mxu0
        %v5335 = vadd.f32 %v5102, %v5334
        %5336 = vmatmul.bf16.gmra.mxu0 %v3839
        %v5337 = vpop.f32.mrf.mxu0
        %v5338 = vadd.f32 %v5105, %v5337
        %v5339 = vpop.f32.mrf.mxu0
        %v5340 = vadd.f32 %v5107, %v5339
        %5341 = vmatmul.bf16.gmra.mxu0 %v3840
        %v5342 = vpop.f32.mrf.mxu0
        %v5343 = vadd.f32 %v5110, %v5342
        %v5344 = vpop.f32.mrf.mxu0
        %v5345 = vadd.f32 %v5112, %v5344
        %5346 = vmatmul.bf16.gmra.mxu0 %v3841
        %v5347 = vpop.f32.mrf.mxu0
        %v5348 = vadd.f32 %v5115, %v5347
        %v5349 = vpop.f32.mrf.mxu0
        %v5350 = vadd.f32 %v5117, %v5349
        %5351 = vmatmul.bf16.gmra.mxu0 %v3842
        %v5352 = vpop.f32.mrf.mxu0
        %v5353 = vadd.f32 %v5120, %v5352
        %v5354 = vpop.f32.mrf.mxu0
        %v5355 = vadd.f32 %v5122, %v5354
        %5356 = vmatmul.bf16.gmra.mxu0 %v3843
        %v5357 = vpop.f32.mrf.mxu0
        %v5358 = vadd.f32 %v5125, %v5357
        %v5359 = vpop.f32.mrf.mxu0
        %v5360 = vadd.f32 %v5127, %v5359
        %5361 = vmatmul.bf16.gmra.mxu0 %v3844
        %v5362 = vpop.f32.mrf.mxu0
        %v5363 = vadd.f32 %v5130, %v5362
        %v5364 = vpop.f32.mrf.mxu0
        %v5365 = vadd.f32 %v5132, %v5364
        %5366 = vmatmul.bf16.gmra.mxu0 %v3845
        %v5367 = vpop.f32.mrf.mxu0
        %v5368 = vadd.f32 %v5135, %v5367
        %v5369 = vpop.f32.mrf.mxu0
        %v5370 = vadd.f32 %v5137, %v5369
        %5371 = vmatmul.bf16.gmra.mxu0 %v3846
        %v5372 = vpop.f32.mrf.mxu0
        %v5373 = vadd.f32 %v5140, %v5372
        %v5374 = vpop.f32.mrf.mxu0
        %v5375 = vadd.f32 %v5142, %v5374
        %5376 = vmatmul.bf16.gmra.mxu0 %v3847
        %v5377 = vpop.f32.mrf.mxu0
        %v5378 = vadd.f32 %v5145, %v5377
        %v5379 = vpop.f32.mrf.mxu0
        %v5380 = vadd.f32 %v5147, %v5379
        %5381 = vmatmul.bf16.gmra.mxu0 %v3848
        %v5382 = vpop.f32.mrf.mxu0
        %v5383 = vadd.f32 %v5150, %v5382
        %v5384 = vpop.f32.mrf.mxu0
        %v5385 = vadd.f32 %v5152, %v5384
        %5386 = vmatmul.bf16.gmra.mxu0 %v3849
        %v5387 = vpop.f32.mrf.mxu0
        %v5388 = vadd.f32 %v5155, %v5387
        %v5389 = vpop.f32.mrf.mxu0
        %v5390 = vadd.f32 %v5157, %v5389
        %5391 = vdwg.mxu0
        %5392 = vmatpush.bf16.msra.mxu0 %v5270
        %5393 = vmatpush.bf16.msra.mxu0 %v5269
        %5394 = vmatpush.bf16.msra.mxu0 %v5268
        %5395 = vmatpush.bf16.msra.mxu0 %v5267
        %5396 = vmatpush.bf16.msra.mxu0 %v5266
        %5397 = vmatpush.bf16.msra.mxu0 %v5265
        %5398 = vmatpush.bf16.msra.mxu0 %v5264
        %5399 = vmatpush.bf16.msra.mxu0 %v5263
        %5400 = vmatmul.bf16.gmra.mxu0 %v3925
        %v5401 = vpop.f32.mrf.mxu0
        %v5402 = vadd.f32 %v5313, %v5401
        %v5403 = vpop.f32.mrf.mxu0
        %v5404 = vadd.f32 %v5315, %v5403
        %5405 = vmatmul.bf16.gmra.mxu0 %v3937
        %v5406 = vpop.f32.mrf.mxu0
        %v5407 = vadd.f32 %v5318, %v5406
        %v5408 = vpop.f32.mrf.mxu0
        %v5409 = vadd.f32 %v5320, %v5408
        %5410 = vmatmul.bf16.gmra.mxu0 %v3949
        %v5411 = vpop.f32.mrf.mxu0
        %v5412 = vadd.f32 %v5323, %v5411
        %v5413 = vpop.f32.mrf.mxu0
        %v5414 = vadd.f32 %v5325, %v5413
        %5415 = vmatmul.bf16.gmra.mxu0 %v3961
        %v5416 = vpop.f32.mrf.mxu0
        %v5417 = vadd.f32 %v5328, %v5416
        %v5418 = vpop.f32.mrf.mxu0
        %v5419 = vadd.f32 %v5330, %v5418
        %5420 = vmatmul.bf16.gmra.mxu0 %v3973
        %v5421 = vpop.f32.mrf.mxu0
        %v5422 = vadd.f32 %v5333, %v5421
        %v5423 = vpop.f32.mrf.mxu0
        %v5424 = vadd.f32 %v5335, %v5423
        %5425 = vmatmul.bf16.gmra.mxu0 %v3985
        %v5426 = vpop.f32.mrf.mxu0
        %v5427 = vadd.f32 %v5338, %v5426
        %v5428 = vpop.f32.mrf.mxu0
        %v5429 = vadd.f32 %v5340, %v5428
        %5430 = vmatmul.bf16.gmra.mxu0 %v3997
        %v5431 = vpop.f32.mrf.mxu0
        %v5432 = vadd.f32 %v5343, %v5431
        %v5433 = vpop.f32.mrf.mxu0
        %v5434 = vadd.f32 %v5345, %v5433
        %5435 = vmatmul.bf16.gmra.mxu0 %v4009
        %v5436 = vpop.f32.mrf.mxu0
        %v5437 = vadd.f32 %v5348, %v5436
        %v5438 = vpop.f32.mrf.mxu0
        %v5439 = vadd.f32 %v5350, %v5438
        %5440 = vmatmul.bf16.gmra.mxu0 %v4021
        %v5441 = vpop.f32.mrf.mxu0
        %v5442 = vadd.f32 %v5353, %v5441
        %v5443 = vpop.f32.mrf.mxu0
        %v5444 = vadd.f32 %v5355, %v5443
        %5445 = vmatmul.bf16.gmra.mxu0 %v4033
        %v5446 = vpop.f32.mrf.mxu0
        %v5447 = vadd.f32 %v5358, %v5446
        %v5448 = vpop.f32.mrf.mxu0
        %v5449 = vadd.f32 %v5360, %v5448
        %5450 = vmatmul.bf16.gmra.mxu0 %v4045
        %v5451 = vpop.f32.mrf.mxu0
        %v5452 = vadd.f32 %v5363, %v5451
        %v5453 = vpop.f32.mrf.mxu0
        %v5454 = vadd.f32 %v5365, %v5453
        %5455 = vmatmul.bf16.gmra.mxu0 %v4057
        %v5456 = vpop.f32.mrf.mxu0
        %v5457 = vadd.f32 %v5368, %v5456
        %v5458 = vpop.f32.mrf.mxu0
        %v5459 = vadd.f32 %v5370, %v5458
        %5460 = vmatmul.bf16.gmra.mxu0 %v4069
        %v5461 = vpop.f32.mrf.mxu0
        %v5462 = vadd.f32 %v5373, %v5461
        %v5463 = vpop.f32.mrf.mxu0
        %v5464 = vadd.f32 %v5375, %v5463
        %5465 = vmatmul.bf16.gmra.mxu0 %v4081
        %v5466 = vpop.f32.mrf.mxu0
        %v5467 = vadd.f32 %v5378, %v5466
        %v5468 = vpop.f32.mrf.mxu0
        %v5469 = vadd.f32 %v5380, %v5468
        %5470 = vmatmul.bf16.gmra.mxu0 %v4093
        %v5471 = vpop.f32.mrf.mxu0
        %v5472 = vadd.f32 %v5383, %v5471
        %v5473 = vpop.f32.mrf.mxu0
        %v5474 = vadd.f32 %v5385, %v5473
        %5475 = vmatmul.bf16.gmra.mxu0 %v4105
        %v5476 = vpop.f32.mrf.mxu0
        %v5477 = vadd.f32 %v5388, %v5476
        %v5478 = vpop.f32.mrf.mxu0
        %v5479 = vadd.f32 %v5390, %v5478
        %5480 = vdwg.mxu0
        %5481 = vmatpush.bf16.msra.mxu0 %v5278
        %5482 = vmatpush.bf16.msra.mxu0 %v5277
        %5483 = vmatpush.bf16.msra.mxu0 %v5276
        %5484 = vmatpush.bf16.msra.mxu0 %v5275
        %5485 = vmatpush.bf16.msra.mxu0 %v5274
        %5486 = vmatpush.bf16.msra.mxu0 %v5273
        %5487 = vmatpush.bf16.msra.mxu0 %v5272
        %5488 = vmatpush.bf16.msra.mxu0 %v5271
        %5489 = vmatmul.bf16.gmra.mxu0 %v4124
        %v5490 = vpop.f32.mrf.mxu0
        %v5491 = vadd.f32 %v5402, %v5490
        %v5492 = vpop.f32.mrf.mxu0
        %v5493 = vadd.f32 %v5404, %v5492
        %5494 = vmatmul.bf16.gmra.mxu0 %v4127
        %v5495 = vpop.f32.mrf.mxu0
        %v5496 = vadd.f32 %v5407, %v5495
        %v5497 = vpop.f32.mrf.mxu0
        %v5498 = vadd.f32 %v5409, %v5497
        %5499 = vmatmul.bf16.gmra.mxu0 %v4130
        %v5500 = vpop.f32.mrf.mxu0
        %v5501 = vadd.f32 %v5412, %v5500
        %v5502 = vpop.f32.mrf.mxu0
        %v5503 = vadd.f32 %v5414, %v5502
        %5504 = vmatmul.bf16.gmra.mxu0 %v4133
        %v5505 = vpop.f32.mrf.mxu0
        %v5506 = vadd.f32 %v5417, %v5505
        %v5507 = vpop.f32.mrf.mxu0
        %v5508 = vadd.f32 %v5419, %v5507
        %5509 = vmatmul.bf16.gmra.mxu0 %v4136
        %v5510 = vpop.f32.mrf.mxu0
        %v5511 = vadd.f32 %v5422, %v5510
        %v5512 = vpop.f32.mrf.mxu0
        %v5513 = vadd.f32 %v5424, %v5512
        %5514 = vmatmul.bf16.gmra.mxu0 %v4139
        %v5515 = vpop.f32.mrf.mxu0
        %v5516 = vadd.f32 %v5427, %v5515
        %v5517 = vpop.f32.mrf.mxu0
        %v5518 = vadd.f32 %v5429, %v5517
        %5519 = vmatmul.bf16.gmra.mxu0 %v4142
        %v5520 = vpop.f32.mrf.mxu0
        %v5521 = vadd.f32 %v5432, %v5520
        %v5522 = vpop.f32.mrf.mxu0
        %v5523 = vadd.f32 %v5434, %v5522
        %5524 = vmatmul.bf16.gmra.mxu0 %v4145
        %v5525 = vpop.f32.mrf.mxu0
        %v5526 = vadd.f32 %v5437, %v5525
        %v5527 = vpop.f32.mrf.mxu0
        %v5528 = vadd.f32 %v5439, %v5527
        %5529 = vmatmul.bf16.gmra.mxu0 %v4148
        %v5530 = vpop.f32.mrf.mxu0
        %v5531 = vadd.f32 %v5442, %v5530
        %v5532 = vpop.f32.mrf.mxu0
        %v5533 = vadd.f32 %v5444, %v5532
        %5534 = vmatmul.bf16.gmra.mxu0 %v4151
        %v5535 = vpop.f32.mrf.mxu0
        %v5536 = vadd.f32 %v5447, %v5535
        %v5537 = vpop.f32.mrf.mxu0
        %v5538 = vadd.f32 %v5449, %v5537
        %5539 = vmatmul.bf16.gmra.mxu0 %v4154
        %v5540 = vpop.f32.mrf.mxu0
        %v5541 = vadd.f32 %v5452, %v5540
        %v5542 = vpop.f32.mrf.mxu0
        %v5543 = vadd.f32 %v5454, %v5542
        %5544 = vmatmul.bf16.gmra.mxu0 %v4157
        %v5545 = vpop.f32.mrf.mxu0
        %v5546 = vadd.f32 %v5457, %v5545
        %v5547 = vpop.f32.mrf.mxu0
        %v5548 = vadd.f32 %v5459, %v5547
        %5549 = vmatmul.bf16.gmra.mxu0 %v4160
        %v5550 = vpop.f32.mrf.mxu0
        %v5551 = vadd.f32 %v5462, %v5550
        %v5552 = vpop.f32.mrf.mxu0
        %v5553 = vadd.f32 %v5464, %v5552
        %5554 = vmatmul.bf16.gmra.mxu0 %v4163
        %v5555 = vpop.f32.mrf.mxu0
        %v5556 = vadd.f32 %v5467, %v5555
        %v5557 = vpop.f32.mrf.mxu0
        %v5558 = vadd.f32 %v5469, %v5557
        %5559 = vmatmul.bf16.gmra.mxu0 %v4166
        %v5560 = vpop.f32.mrf.mxu0
        %v5561 = vadd.f32 %v5472, %v5560
        %v5562 = vpop.f32.mrf.mxu0
        %v5563 = vadd.f32 %v5474, %v5562
        %5564 = vmatmul.bf16.gmra.mxu0 %v4169
        %v5565 = vpop.f32.mrf.mxu0
        %v5566 = vadd.f32 %v5477, %v5565
        %v5567 = vpop.f32.mrf.mxu0
        %v5568 = vadd.f32 %v5479, %v5567
        %5569 = vdwg.mxu0
        %s5570 = scalar_lea.vmem [#allocation2], 24
        %v5571 = vld [vmem:[%s5570] sm:$0xf]
        %v5572 = vld [vmem:[%s5570 + $0x4] sm:$0xf]
        %v5573 = vld [vmem:[%s5570 + $0x8] sm:$0x1]
        %v5574 = vld [vmem:[%s5570 + $0xc] sm:$0xf]
        %v5575 = vld [vmem:[%s5570 + $0x10] sm:$0xf]
        %v5576 = vld [vmem:[%s5570 + $0x14] sm:$0x1]
        %v5577 = vld [vmem:[%s5570 + $0x18] sm:$0xf]
        %v5578 = vld [vmem:[%s5570 + $0x1c] sm:$0xf]
        %v5579 = vld [vmem:[%s5570 + $0x20] sm:$0x1]
        %v5580 = vld [vmem:[%s5570 + $0x24] sm:$0xf]
        %v5581 = vld [vmem:[%s5570 + $0x28] sm:$0xf]
        %v5582 = vld [vmem:[%s5570 + $0x2c] sm:$0x1]
        %v5583 = vld [vmem:[%s5570 + $0x30] sm:$0xf]
        %v5584 = vld [vmem:[%s5570 + $0x34] sm:$0xf]
        %v5585 = vld [vmem:[%s5570 + $0x38] sm:$0x1]
        %v5586 = vld [vmem:[%s5570 + $0x3c] sm:$0xf]
        %v5587 = vld [vmem:[%s5570 + $0x40] sm:$0xf]
        %v5588 = vld [vmem:[%s5570 + $0x44] sm:$0x1]
        %v5589 = vld [vmem:[%s5570 + $0x48] sm:$0xf]
        %v5590 = vld [vmem:[%s5570 + $0x4c] sm:$0xf]
        %v5591 = vld [vmem:[%s5570 + $0x50] sm:$0x1]
        %v5592 = vld [vmem:[%s5570 + $0x54] sm:$0xf]
        %v5593 = vld [vmem:[%s5570 + $0x58] sm:$0xf]
        %v5594 = vld [vmem:[%s5570 + $0x5c] sm:$0x1]
        %v5595 = vld [vmem:[%s5570 + $0x60] sm:$0xf]
        %v5596 = vld [vmem:[%s5570 + $0x64] sm:$0xf]
        %v5597 = vld [vmem:[%s5570 + $0x68] sm:$0x1]
        %v5598 = vld [vmem:[%s5570 + $0x6c] sm:$0xf]
        %v5599 = vld [vmem:[%s5570 + $0x70] sm:$0xf]
        %v5600 = vld [vmem:[%s5570 + $0x74] sm:$0x1]
        %v5601 = vld [vmem:[%s5570 + $0x78] sm:$0xf]
        %v5602 = vld [vmem:[%s5570 + $0x7c] sm:$0xf]
        %v5603 = vld [vmem:[%s5570 + $0x80] sm:$0x1]
        %v5604 = vld [vmem:[%s5570 + $0x84] sm:$0xf]
        %v5605 = vld [vmem:[%s5570 + $0x88] sm:$0xf]
        %v5606 = vld [vmem:[%s5570 + $0x8c] sm:$0x1]
        %v5607 = vld [vmem:[%s5570 + $0x90] sm:$0xf]
        %v5608 = vld [vmem:[%s5570 + $0x94] sm:$0xf]
        %v5609 = vld [vmem:[%s5570 + $0x98] sm:$0x1]
        %v5610 = vld [vmem:[%s5570 + $0x9c] sm:$0xf]
        %v5611 = vld [vmem:[%s5570 + $0xa0] sm:$0xf]
        %v5612 = vld [vmem:[%s5570 + $0xa4] sm:$0x1]
        %v5613 = vld [vmem:[%s5570 + $0xa8] sm:$0xf]
        %v5614 = vld [vmem:[%s5570 + $0xac] sm:$0xf]
        %v5615 = vld [vmem:[%s5570 + $0xb0] sm:$0x1]
        %v5616 = vld [vmem:[%s5570 + $0xb4] sm:$0xf]
        %v5617 = vld [vmem:[%s5570 + $0xb8] sm:$0xf]
        %v5618 = vld [vmem:[%s5570 + $0xbc] sm:$0x1]
        %v5651 = vunpack.c.l.b16 %v5571
        %v5652 = vunpack.c.l.b16 %v5572
        %v5653 = vunpack.c.l.b16 %v5574
        %v5654 = vunpack.c.l.b16 %v5575
        %v5655 = vunpack.c.l.b16 %v5577
        %v5656 = vunpack.c.l.b16 %v5578
        %v5657 = vunpack.c.l.b16 %v5580
        %v5658 = vunpack.c.l.b16 %v5581
        %v5659 = vunpack.c.l.b16 %v5583
        %v5660 = vunpack.c.l.b16 %v5584
        %v5661 = vunpack.c.l.b16 %v5586
        %v5662 = vunpack.c.l.b16 %v5587
        %v5663 = vunpack.c.l.b16 %v5589
        %v5664 = vunpack.c.l.b16 %v5590
        %v5665 = vunpack.c.l.b16 %v5592
        %v5666 = vunpack.c.l.b16 %v5593
        %v5667 = vunpack.c.l.b16 %v5595
        %v5668 = vunpack.c.l.b16 %v5596
        %v5669 = vunpack.c.l.b16 %v5598
        %v5670 = vunpack.c.l.b16 %v5599
        %v5671 = vunpack.c.l.b16 %v5601
        %v5672 = vunpack.c.l.b16 %v5602
        %v5673 = vunpack.c.l.b16 %v5604
        %v5674 = vunpack.c.l.b16 %v5605
        %v5675 = vunpack.c.l.b16 %v5607
        %v5676 = vunpack.c.l.b16 %v5608
        %v5677 = vunpack.c.l.b16 %v5610
        %v5678 = vunpack.c.l.b16 %v5611
        %v5679 = vunpack.c.l.b16 %v5613
        %v5680 = vunpack.c.l.b16 %v5614
        %v5681 = vunpack.c.l.b16 %v5616
        %v5682 = vunpack.c.l.b16 %v5617
        %v5683 = vpack.c.b16 %v5652, %v5651
        %v5684 = vpack.c.b16 %v5654, %v5653
        %v5685 = vpack.c.b16 %v5656, %v5655
        %v5686 = vpack.c.b16 %v5658, %v5657
        %v5687 = vpack.c.b16 %v5660, %v5659
        %v5688 = vpack.c.b16 %v5662, %v5661
        %v5689 = vpack.c.b16 %v5664, %v5663
        %v5690 = vpack.c.b16 %v5666, %v5665
        %v5691 = vpack.c.b16 %v5668, %v5667
        %v5692 = vpack.c.b16 %v5670, %v5669
        %v5693 = vpack.c.b16 %v5672, %v5671
        %v5694 = vpack.c.b16 %v5674, %v5673
        %v5695 = vpack.c.b16 %v5676, %v5675
        %v5696 = vpack.c.b16 %v5678, %v5677
        %v5697 = vpack.c.b16 %v5680, %v5679
        %v5698 = vpack.c.b16 %v5682, %v5681
        %v5731 = vunpack.c.l.b16 %v5573
        %v5732 = vunpack.c.l.b16 %v5576
        %v5733 = vunpack.c.l.b16 %v5579
        %v5734 = vunpack.c.l.b16 %v5582
        %v5735 = vunpack.c.l.b16 %v5585
        %v5736 = vunpack.c.l.b16 %v5588
        %v5737 = vunpack.c.l.b16 %v5591
        %v5738 = vunpack.c.l.b16 %v5594
        %v5739 = vunpack.c.l.b16 %v5597
        %v5740 = vunpack.c.l.b16 %v5600
        %v5741 = vunpack.c.l.b16 %v5603
        %v5742 = vunpack.c.l.b16 %v5606
        %v5743 = vunpack.c.l.b16 %v5609
        %v5744 = vunpack.c.l.b16 %v5612
        %v5745 = vunpack.c.l.b16 %v5615
        %v5746 = vunpack.c.l.b16 %v5618
        %v5747 = vpack.c.b16 %v5731, %v5731
        %v5748 = vpack.c.b16 %v5732, %v5732
        %v5749 = vpack.c.b16 %v5733, %v5733
        %v5750 = vpack.c.b16 %v5734, %v5734
        %v5751 = vpack.c.b16 %v5735, %v5735
        %v5752 = vpack.c.b16 %v5736, %v5736
        %v5753 = vpack.c.b16 %v5737, %v5737
        %v5754 = vpack.c.b16 %v5738, %v5738
        %v5755 = vpack.c.b16 %v5739, %v5739
        %v5756 = vpack.c.b16 %v5740, %v5740
        %v5757 = vpack.c.b16 %v5741, %v5741
        %v5758 = vpack.c.b16 %v5742, %v5742
        %v5759 = vpack.c.b16 %v5743, %v5743
        %v5760 = vpack.c.b16 %v5744, %v5744
        %v5761 = vpack.c.b16 %v5745, %v5745
        %v5762 = vpack.c.b16 %v5746, %v5746
        %v5764 = vshrl.u32 %v5683, 16
        %v5766 = vshll.u32 %v5683, 16
        %v5768 = vrot.slane %v5766, 1
        %v5769 = vor.u32 %v5764, %v5768
        %v5771 = vshll.u32 %v5747, 16
        %v5773 = vrot.slane %v5771, 1
        %v5774 = vsel %vm476, %v5769, %v5773
        %v5776 = vshrl.u32 %v5684, 16
        %v5778 = vshll.u32 %v5684, 16
        %v5780 = vrot.slane %v5778, 1
        %v5781 = vor.u32 %v5776, %v5780
        %v5783 = vshll.u32 %v5748, 16
        %v5785 = vrot.slane %v5783, 1
        %v5786 = vsel %vm476, %v5781, %v5785
        %v5788 = vshrl.u32 %v5685, 16
        %v5790 = vshll.u32 %v5685, 16
        %v5792 = vrot.slane %v5790, 1
        %v5793 = vor.u32 %v5788, %v5792
        %v5795 = vshll.u32 %v5749, 16
        %v5797 = vrot.slane %v5795, 1
        %v5798 = vsel %vm476, %v5793, %v5797
        %v5800 = vshrl.u32 %v5686, 16
        %v5802 = vshll.u32 %v5686, 16
        %v5804 = vrot.slane %v5802, 1
        %v5805 = vor.u32 %v5800, %v5804
        %v5807 = vshll.u32 %v5750, 16
        %v5809 = vrot.slane %v5807, 1
        %v5810 = vsel %vm476, %v5805, %v5809
        %v5812 = vshrl.u32 %v5687, 16
        %v5814 = vshll.u32 %v5687, 16
        %v5816 = vrot.slane %v5814, 1
        %v5817 = vor.u32 %v5812, %v5816
        %v5819 = vshll.u32 %v5751, 16
        %v5821 = vrot.slane %v5819, 1
        %v5822 = vsel %vm476, %v5817, %v5821
        %v5824 = vshrl.u32 %v5688, 16
        %v5826 = vshll.u32 %v5688, 16
        %v5828 = vrot.slane %v5826, 1
        %v5829 = vor.u32 %v5824, %v5828
        %v5831 = vshll.u32 %v5752, 16
        %v5833 = vrot.slane %v5831, 1
        %v5834 = vsel %vm476, %v5829, %v5833
        %v5836 = vshrl.u32 %v5689, 16
        %v5838 = vshll.u32 %v5689, 16
        %v5840 = vrot.slane %v5838, 1
        %v5841 = vor.u32 %v5836, %v5840
        %v5843 = vshll.u32 %v5753, 16
        %v5845 = vrot.slane %v5843, 1
        %v5846 = vsel %vm476, %v5841, %v5845
        %v5848 = vshrl.u32 %v5690, 16
        %v5850 = vshll.u32 %v5690, 16
        %v5852 = vrot.slane %v5850, 1
        %v5853 = vor.u32 %v5848, %v5852
        %v5855 = vshll.u32 %v5754, 16
        %v5857 = vrot.slane %v5855, 1
        %v5858 = vsel %vm476, %v5853, %v5857
        %v5860 = vshrl.u32 %v5691, 16
        %v5862 = vshll.u32 %v5691, 16
        %v5864 = vrot.slane %v5862, 1
        %v5865 = vor.u32 %v5860, %v5864
        %v5867 = vshll.u32 %v5755, 16
        %v5869 = vrot.slane %v5867, 1
        %v5870 = vsel %vm476, %v5865, %v5869
        %v5872 = vshrl.u32 %v5692, 16
        %v5874 = vshll.u32 %v5692, 16
        %v5876 = vrot.slane %v5874, 1
        %v5877 = vor.u32 %v5872, %v5876
        %v5879 = vshll.u32 %v5756, 16
        %v5881 = vrot.slane %v5879, 1
        %v5882 = vsel %vm476, %v5877, %v5881
        %v5884 = vshrl.u32 %v5693, 16
        %v5886 = vshll.u32 %v5693, 16
        %v5888 = vrot.slane %v5886, 1
        %v5889 = vor.u32 %v5884, %v5888
        %v5891 = vshll.u32 %v5757, 16
        %v5893 = vrot.slane %v5891, 1
        %v5894 = vsel %vm476, %v5889, %v5893
        %v5896 = vshrl.u32 %v5694, 16
        %v5898 = vshll.u32 %v5694, 16
        %v5900 = vrot.slane %v5898, 1
        %v5901 = vor.u32 %v5896, %v5900
        %v5903 = vshll.u32 %v5758, 16
        %v5905 = vrot.slane %v5903, 1
        %v5906 = vsel %vm476, %v5901, %v5905
        %v5908 = vshrl.u32 %v5695, 16
        %v5910 = vshll.u32 %v5695, 16
        %v5912 = vrot.slane %v5910, 1
        %v5913 = vor.u32 %v5908, %v5912
        %v5915 = vshll.u32 %v5759, 16
        %v5917 = vrot.slane %v5915, 1
        %v5918 = vsel %vm476, %v5913, %v5917
        %v5920 = vshrl.u32 %v5696, 16
        %v5922 = vshll.u32 %v5696, 16
        %v5924 = vrot.slane %v5922, 1
        %v5925 = vor.u32 %v5920, %v5924
        %v5927 = vshll.u32 %v5760, 16
        %v5929 = vrot.slane %v5927, 1
        %v5930 = vsel %vm476, %v5925, %v5929
        %v5932 = vshrl.u32 %v5697, 16
        %v5934 = vshll.u32 %v5697, 16
        %v5936 = vrot.slane %v5934, 1
        %v5937 = vor.u32 %v5932, %v5936
        %v5939 = vshll.u32 %v5761, 16
        %v5941 = vrot.slane %v5939, 1
        %v5942 = vsel %vm476, %v5937, %v5941
        %v5944 = vshrl.u32 %v5698, 16
        %v5946 = vshll.u32 %v5698, 16
        %v5948 = vrot.slane %v5946, 1
        %v5949 = vor.u32 %v5944, %v5948
        %v5951 = vshll.u32 %v5762, 16
        %v5953 = vrot.slane %v5951, 1
        %v5954 = vsel %vm476, %v5949, %v5953
        %v5971 = vrot.slane %v5683, 1
        %v5972 = vrot.slane %v5747, 1
        %v5973 = vsel %vm711, %v5971, %v5972
        %v5974 = vrot.slane %v5684, 1
        %v5975 = vrot.slane %v5748, 1
        %v5976 = vsel %vm711, %v5974, %v5975
        %v5977 = vrot.slane %v5685, 1
        %v5978 = vrot.slane %v5749, 1
        %v5979 = vsel %vm711, %v5977, %v5978
        %v5980 = vrot.slane %v5686, 1
        %v5981 = vrot.slane %v5750, 1
        %v5982 = vsel %vm711, %v5980, %v5981
        %v5983 = vrot.slane %v5687, 1
        %v5984 = vrot.slane %v5751, 1
        %v5985 = vsel %vm711, %v5983, %v5984
        %v5986 = vrot.slane %v5688, 1
        %v5987 = vrot.slane %v5752, 1
        %v5988 = vsel %vm711, %v5986, %v5987
        %v5989 = vrot.slane %v5689, 1
        %v5990 = vrot.slane %v5753, 1
        %v5991 = vsel %vm711, %v5989, %v5990
        %v5992 = vrot.slane %v5690, 1
        %v5993 = vrot.slane %v5754, 1
        %v5994 = vsel %vm711, %v5992, %v5993
        %v5995 = vrot.slane %v5691, 1
        %v5996 = vrot.slane %v5755, 1
        %v5997 = vsel %vm711, %v5995, %v5996
        %v5998 = vrot.slane %v5692, 1
        %v5999 = vrot.slane %v5756, 1
        %v6000 = vsel %vm711, %v5998, %v5999
        %v6001 = vrot.slane %v5693, 1
        %v6002 = vrot.slane %v5757, 1
        %v6003 = vsel %vm711, %v6001, %v6002
        %v6004 = vrot.slane %v5694, 1
        %v6005 = vrot.slane %v5758, 1
        %v6006 = vsel %vm711, %v6004, %v6005
        %v6007 = vrot.slane %v5695, 1
        %v6008 = vrot.slane %v5759, 1
        %v6009 = vsel %vm711, %v6007, %v6008
        %v6010 = vrot.slane %v5696, 1
        %v6011 = vrot.slane %v5760, 1
        %v6012 = vsel %vm711, %v6010, %v6011
        %v6013 = vrot.slane %v5697, 1
        %v6014 = vrot.slane %v5761, 1
        %v6015 = vsel %vm711, %v6013, %v6014
        %v6016 = vrot.slane %v5698, 1
        %v6017 = vrot.slane %v5762, 1
        %v6018 = vsel %vm711, %v6016, %v6017
        %s6035 = scalar_lea.vmem [#allocation3], 384
        %v6036 = vld [vmem:[%s6035] sm:$0xf]
        %v6037 = vld [vmem:[%s6035 + $0x4] sm:$0xf]
        %v6038 = vld [vmem:[%s6035 + $0x8] sm:$0xf]
        %v6039 = vld [vmem:[%s6035 + $0xc] sm:$0xf]
        %v6040 = vld [vmem:[%s6035 + $0x10] sm:$0xf]
        %v6041 = vld [vmem:[%s6035 + $0x14] sm:$0xf]
        %v6042 = vld [vmem:[%s6035 + $0x18] sm:$0xf]
        %v6043 = vld [vmem:[%s6035 + $0x1c] sm:$0xf]
        %v6044 = vld [vmem:[%s6035 + $0x20] sm:$0xf]
        %v6045 = vld [vmem:[%s6035 + $0x24] sm:$0xf]
        %v6046 = vld [vmem:[%s6035 + $0x28] sm:$0xf]
        %v6047 = vld [vmem:[%s6035 + $0x2c] sm:$0xf]
        %v6048 = vld [vmem:[%s6035 + $0x30] sm:$0xf]
        %v6049 = vld [vmem:[%s6035 + $0x34] sm:$0xf]
        %v6050 = vld [vmem:[%s6035 + $0x38] sm:$0xf]
        %v6051 = vld [vmem:[%s6035 + $0x3c] sm:$0xf]
        %v6052 = vld [vmem:[%s6035 + $0x40] sm:$0xf]
        %v6053 = vld [vmem:[%s6035 + $0x44] sm:$0xf]
        %v6054 = vld [vmem:[%s6035 + $0x48] sm:$0xf]
        %v6055 = vld [vmem:[%s6035 + $0x4c] sm:$0xf]
        %v6056 = vld [vmem:[%s6035 + $0x50] sm:$0xf]
        %v6057 = vld [vmem:[%s6035 + $0x54] sm:$0xf]
        %v6058 = vld [vmem:[%s6035 + $0x58] sm:$0xf]
        %v6059 = vld [vmem:[%s6035 + $0x5c] sm:$0xf]
        %v6060 = vld [vmem:[%s6035 + $0x60] sm:$0xf]
        %v6061 = vld [vmem:[%s6035 + $0x64] sm:$0xf]
        %v6062 = vld [vmem:[%s6035 + $0x68] sm:$0xf]
        %v6063 = vld [vmem:[%s6035 + $0x6c] sm:$0xf]
        %v6064 = vld [vmem:[%s6035 + $0x70] sm:$0xf]
        %v6065 = vld [vmem:[%s6035 + $0x74] sm:$0xf]
        %v6066 = vld [vmem:[%s6035 + $0x78] sm:$0xf]
        %v6067 = vld [vmem:[%s6035 + $0x7c] sm:$0xf]
        %v6068 = vld [vmem:[%s6035 + $0x80] sm:$0xf]
        %v6069 = vld [vmem:[%s6035 + $0x84] sm:$0xf]
        %v6070 = vld [vmem:[%s6035 + $0x88] sm:$0xf]
        %v6071 = vld [vmem:[%s6035 + $0x8c] sm:$0xf]
        %v6072 = vld [vmem:[%s6035 + $0x90] sm:$0xf]
        %v6073 = vld [vmem:[%s6035 + $0x94] sm:$0xf]
        %v6074 = vld [vmem:[%s6035 + $0x98] sm:$0xf]
        %v6075 = vld [vmem:[%s6035 + $0x9c] sm:$0xf]
        %v6076 = vld [vmem:[%s6035 + $0xa0] sm:$0xf]
        %v6077 = vld [vmem:[%s6035 + $0xa4] sm:$0xf]
        %v6078 = vld [vmem:[%s6035 + $0xa8] sm:$0xf]
        %v6079 = vld [vmem:[%s6035 + $0xac] sm:$0xf]
        %v6080 = vld [vmem:[%s6035 + $0xb0] sm:$0xf]
        %v6081 = vld [vmem:[%s6035 + $0xb4] sm:$0xf]
        %v6082 = vld [vmem:[%s6035 + $0xb8] sm:$0xf]
        %v6083 = vld [vmem:[%s6035 + $0xbc] sm:$0xf]
        %v6132 = vunpack.c.l.b16 %v6036
        %v6133 = vunpack.c.l.b16 %v6037
        %v6134 = vunpack.c.l.b16 %v6038
        %v6135 = vunpack.c.l.b16 %v6039
        %v6136 = vunpack.c.l.b16 %v6040
        %v6137 = vunpack.c.l.b16 %v6041
        %v6138 = vunpack.c.l.b16 %v6042
        %v6139 = vunpack.c.l.b16 %v6043
        %v6140 = vunpack.c.l.b16 %v6044
        %v6141 = vunpack.c.l.b16 %v6045
        %v6142 = vunpack.c.l.b16 %v6046
        %v6143 = vunpack.c.l.b16 %v6047
        %v6144 = vunpack.c.l.b16 %v6048
        %v6145 = vunpack.c.l.b16 %v6049
        %v6146 = vunpack.c.l.b16 %v6050
        %v6147 = vunpack.c.l.b16 %v6051
        %v6148 = vunpack.c.l.b16 %v6052
        %v6149 = vunpack.c.l.b16 %v6053
        %v6150 = vunpack.c.l.b16 %v6054
        %v6151 = vunpack.c.l.b16 %v6055
        %v6152 = vunpack.c.l.b16 %v6056
        %v6153 = vunpack.c.l.b16 %v6057
        %v6154 = vunpack.c.l.b16 %v6058
        %v6155 = vunpack.c.l.b16 %v6059
        %v6156 = vunpack.c.l.b16 %v6060
        %v6157 = vunpack.c.l.b16 %v6061
        %v6158 = vunpack.c.l.b16 %v6062
        %v6159 = vunpack.c.l.b16 %v6063
        %v6160 = vunpack.c.l.b16 %v6064
        %v6161 = vunpack.c.l.b16 %v6065
        %v6162 = vunpack.c.l.b16 %v6066
        %v6163 = vunpack.c.l.b16 %v6067
        %v6164 = vunpack.c.l.b16 %v6068
        %v6165 = vunpack.c.l.b16 %v6069
        %v6166 = vunpack.c.l.b16 %v6070
        %v6167 = vunpack.c.l.b16 %v6071
        %v6168 = vunpack.c.l.b16 %v6072
        %v6169 = vunpack.c.l.b16 %v6073
        %v6170 = vunpack.c.l.b16 %v6074
        %v6171 = vunpack.c.l.b16 %v6075
        %v6172 = vunpack.c.l.b16 %v6076
        %v6173 = vunpack.c.l.b16 %v6077
        %v6174 = vunpack.c.l.b16 %v6078
        %v6175 = vunpack.c.l.b16 %v6079
        %v6176 = vunpack.c.l.b16 %v6080
        %v6177 = vunpack.c.l.b16 %v6081
        %v6178 = vunpack.c.l.b16 %v6082
        %v6179 = vunpack.c.l.b16 %v6083
        %v6180 = vpack.c.b16 %v6133, %v6132
        %v6181 = vpack.c.b16 %v6135, %v6134
        %v6182 = vpack.c.b16 %v6137, %v6136
        %v6183 = vpack.c.b16 %v6139, %v6138
        %v6184 = vpack.c.b16 %v6141, %v6140
        %v6185 = vpack.c.b16 %v6143, %v6142
        %v6186 = vpack.c.b16 %v6145, %v6144
        %v6187 = vpack.c.b16 %v6147, %v6146
        %v6188 = vpack.c.b16 %v6149, %v6148
        %v6189 = vpack.c.b16 %v6151, %v6150
        %v6190 = vpack.c.b16 %v6153, %v6152
        %v6191 = vpack.c.b16 %v6155, %v6154
        %v6192 = vpack.c.b16 %v6157, %v6156
        %v6193 = vpack.c.b16 %v6159, %v6158
        %v6194 = vpack.c.b16 %v6161, %v6160
        %v6195 = vpack.c.b16 %v6163, %v6162
        %v6196 = vpack.c.b16 %v6165, %v6164
        %v6197 = vpack.c.b16 %v6167, %v6166
        %v6198 = vpack.c.b16 %v6169, %v6168
        %v6199 = vpack.c.b16 %v6171, %v6170
        %v6200 = vpack.c.b16 %v6173, %v6172
        %v6201 = vpack.c.b16 %v6175, %v6174
        %v6202 = vpack.c.b16 %v6177, %v6176
        %v6203 = vpack.c.b16 %v6179, %v6178
        %6228 = vmatpush.bf16.msra.mxu0 %v6187
        %6229 = vmatpush.bf16.msra.mxu0 %v6186
        %6230 = vmatpush.bf16.msra.mxu0 %v6185
        %6231 = vmatpush.bf16.msra.mxu0 %v6184
        %6232 = vmatpush.bf16.msra.mxu0 %v6183
        %6233 = vmatpush.bf16.msra.mxu0 %v6182
        %6234 = vmatpush.bf16.msra.mxu0 %v6181
        %6235 = vmatpush.bf16.msra.mxu0 %v6180
        %6236 = vmatmul.bf16.gmra.mxu0 %v5683
        %v6237 = vpop.f32.mrf.mxu0
        %v6238 = vadd.f32 0.0, %v6237
        %v6239 = vpop.f32.mrf.mxu0
        %v6240 = vadd.f32 0.0, %v6239
        %6241 = vmatmul.bf16.gmra.mxu0 %v5684
        %v6242 = vpop.f32.mrf.mxu0
        %v6243 = vadd.f32 0.0, %v6242
        %v6244 = vpop.f32.mrf.mxu0
        %v6245 = vadd.f32 0.0, %v6244
        %6246 = vmatmul.bf16.gmra.mxu0 %v5685
        %v6247 = vpop.f32.mrf.mxu0
        %v6248 = vadd.f32 0.0, %v6247
        %v6249 = vpop.f32.mrf.mxu0
        %v6250 = vadd.f32 0.0, %v6249
        %6251 = vmatmul.bf16.gmra.mxu0 %v5686
        %v6252 = vpop.f32.mrf.mxu0
        %v6253 = vadd.f32 0.0, %v6252
        %v6254 = vpop.f32.mrf.mxu0
        %v6255 = vadd.f32 0.0, %v6254
        %6256 = vmatmul.bf16.gmra.mxu0 %v5687
        %v6257 = vpop.f32.mrf.mxu0
        %v6258 = vadd.f32 0.0, %v6257
        %v6259 = vpop.f32.mrf.mxu0
        %v6260 = vadd.f32 0.0, %v6259
        %6261 = vmatmul.bf16.gmra.mxu0 %v5688
        %v6262 = vpop.f32.mrf.mxu0
        %v6263 = vadd.f32 0.0, %v6262
        %v6264 = vpop.f32.mrf.mxu0
        %v6265 = vadd.f32 0.0, %v6264
        %6266 = vmatmul.bf16.gmra.mxu0 %v5689
        %v6267 = vpop.f32.mrf.mxu0
        %v6268 = vadd.f32 0.0, %v6267
        %v6269 = vpop.f32.mrf.mxu0
        %v6270 = vadd.f32 0.0, %v6269
        %6271 = vmatmul.bf16.gmra.mxu0 %v5690
        %v6272 = vpop.f32.mrf.mxu0
        %v6273 = vadd.f32 0.0, %v6272
        %v6274 = vpop.f32.mrf.mxu0
        %v6275 = vadd.f32 0.0, %v6274
        %6276 = vmatmul.bf16.gmra.mxu0 %v5691
        %v6277 = vpop.f32.mrf.mxu0
        %v6278 = vadd.f32 0.0, %v6277
        %v6279 = vpop.f32.mrf.mxu0
        %v6280 = vadd.f32 0.0, %v6279
        %6281 = vmatmul.bf16.gmra.mxu0 %v5692
        %v6282 = vpop.f32.mrf.mxu0
        %v6283 = vadd.f32 0.0, %v6282
        %v6284 = vpop.f32.mrf.mxu0
        %v6285 = vadd.f32 0.0, %v6284
        %6286 = vmatmul.bf16.gmra.mxu0 %v5693
        %v6287 = vpop.f32.mrf.mxu0
        %v6288 = vadd.f32 0.0, %v6287
        %v6289 = vpop.f32.mrf.mxu0
        %v6290 = vadd.f32 0.0, %v6289
        %6291 = vmatmul.bf16.gmra.mxu0 %v5694
        %v6292 = vpop.f32.mrf.mxu0
        %v6293 = vadd.f32 0.0, %v6292
        %v6294 = vpop.f32.mrf.mxu0
        %v6295 = vadd.f32 0.0, %v6294
        %6296 = vmatmul.bf16.gmra.mxu0 %v5695
        %v6297 = vpop.f32.mrf.mxu0
        %v6298 = vadd.f32 0.0, %v6297
        %v6299 = vpop.f32.mrf.mxu0
        %v6300 = vadd.f32 0.0, %v6299
        %6301 = vmatmul.bf16.gmra.mxu0 %v5696
        %v6302 = vpop.f32.mrf.mxu0
        %v6303 = vadd.f32 0.0, %v6302
        %v6304 = vpop.f32.mrf.mxu0
        %v6305 = vadd.f32 0.0, %v6304
        %6306 = vmatmul.bf16.gmra.mxu0 %v5697
        %v6307 = vpop.f32.mrf.mxu0
        %v6308 = vadd.f32 0.0, %v6307
        %v6309 = vpop.f32.mrf.mxu0
        %v6310 = vadd.f32 0.0, %v6309
        %6311 = vmatmul.bf16.gmra.mxu0 %v5698
        %v6312 = vpop.f32.mrf.mxu0
        %v6313 = vadd.f32 0.0, %v6312
        %v6314 = vpop.f32.mrf.mxu0
        %v6315 = vadd.f32 0.0, %v6314
        %6316 = vdwg.mxu0
        %6317 = vmatpush.bf16.msra.mxu0 %v6195
        %6318 = vmatpush.bf16.msra.mxu0 %v6194
        %6319 = vmatpush.bf16.msra.mxu0 %v6193
        %6320 = vmatpush.bf16.msra.mxu0 %v6192
        %6321 = vmatpush.bf16.msra.mxu0 %v6191
        %6322 = vmatpush.bf16.msra.mxu0 %v6190
        %6323 = vmatpush.bf16.msra.mxu0 %v6189
        %6324 = vmatpush.bf16.msra.mxu0 %v6188
        %6325 = vmatmul.bf16.gmra.mxu0 %v5774
        %v6326 = vpop.f32.mrf.mxu0
        %v6327 = vadd.f32 %v6238, %v6326
        %v6328 = vpop.f32.mrf.mxu0
        %v6329 = vadd.f32 %v6240, %v6328
        %6330 = vmatmul.bf16.gmra.mxu0 %v5786
        %v6331 = vpop.f32.mrf.mxu0
        %v6332 = vadd.f32 %v6243, %v6331
        %v6333 = vpop.f32.mrf.mxu0
        %v6334 = vadd.f32 %v6245, %v6333
        %6335 = vmatmul.bf16.gmra.mxu0 %v5798
        %v6336 = vpop.f32.mrf.mxu0
        %v6337 = vadd.f32 %v6248, %v6336
        %v6338 = vpop.f32.mrf.mxu0
        %v6339 = vadd.f32 %v6250, %v6338
        %6340 = vmatmul.bf16.gmra.mxu0 %v5810
        %v6341 = vpop.f32.mrf.mxu0
        %v6342 = vadd.f32 %v6253, %v6341
        %v6343 = vpop.f32.mrf.mxu0
        %v6344 = vadd.f32 %v6255, %v6343
        %6345 = vmatmul.bf16.gmra.mxu0 %v5822
        %v6346 = vpop.f32.mrf.mxu0
        %v6347 = vadd.f32 %v6258, %v6346
        %v6348 = vpop.f32.mrf.mxu0
        %v6349 = vadd.f32 %v6260, %v6348
        %6350 = vmatmul.bf16.gmra.mxu0 %v5834
        %v6351 = vpop.f32.mrf.mxu0
        %v6352 = vadd.f32 %v6263, %v6351
        %v6353 = vpop.f32.mrf.mxu0
        %v6354 = vadd.f32 %v6265, %v6353
        %6355 = vmatmul.bf16.gmra.mxu0 %v5846
        %v6356 = vpop.f32.mrf.mxu0
        %v6357 = vadd.f32 %v6268, %v6356
        %v6358 = vpop.f32.mrf.mxu0
        %v6359 = vadd.f32 %v6270, %v6358
        %6360 = vmatmul.bf16.gmra.mxu0 %v5858
        %v6361 = vpop.f32.mrf.mxu0
        %v6362 = vadd.f32 %v6273, %v6361
        %v6363 = vpop.f32.mrf.mxu0
        %v6364 = vadd.f32 %v6275, %v6363
        %6365 = vmatmul.bf16.gmra.mxu0 %v5870
        %v6366 = vpop.f32.mrf.mxu0
        %v6367 = vadd.f32 %v6278, %v6366
        %v6368 = vpop.f32.mrf.mxu0
        %v6369 = vadd.f32 %v6280, %v6368
        %6370 = vmatmul.bf16.gmra.mxu0 %v5882
        %v6371 = vpop.f32.mrf.mxu0
        %v6372 = vadd.f32 %v6283, %v6371
        %v6373 = vpop.f32.mrf.mxu0
        %v6374 = vadd.f32 %v6285, %v6373
        %6375 = vmatmul.bf16.gmra.mxu0 %v5894
        %v6376 = vpop.f32.mrf.mxu0
        %v6377 = vadd.f32 %v6288, %v6376
        %v6378 = vpop.f32.mrf.mxu0
        %v6379 = vadd.f32 %v6290, %v6378
        %6380 = vmatmul.bf16.gmra.mxu0 %v5906
        %v6381 = vpop.f32.mrf.mxu0
        %v6382 = vadd.f32 %v6293, %v6381
        %v6383 = vpop.f32.mrf.mxu0
        %v6384 = vadd.f32 %v6295, %v6383
        %6385 = vmatmul.bf16.gmra.mxu0 %v5918
        %v6386 = vpop.f32.mrf.mxu0
        %v6387 = vadd.f32 %v6298, %v6386
        %v6388 = vpop.f32.mrf.mxu0
        %v6389 = vadd.f32 %v6300, %v6388
        %6390 = vmatmul.bf16.gmra.mxu0 %v5930
        %v6391 = vpop.f32.mrf.mxu0
        %v6392 = vadd.f32 %v6303, %v6391
        %v6393 = vpop.f32.mrf.mxu0
        %v6394 = vadd.f32 %v6305, %v6393
        %6395 = vmatmul.bf16.gmra.mxu0 %v5942
        %v6396 = vpop.f32.mrf.mxu0
        %v6397 = vadd.f32 %v6308, %v6396
        %v6398 = vpop.f32.mrf.mxu0
        %v6399 = vadd.f32 %v6310, %v6398
        %6400 = vmatmul.bf16.gmra.mxu0 %v5954
        %v6401 = vpop.f32.mrf.mxu0
        %v6402 = vadd.f32 %v6313, %v6401
        %v6403 = vpop.f32.mrf.mxu0
        %v6404 = vadd.f32 %v6315, %v6403
        %6405 = vdwg.mxu0
        %6406 = vmatpush.bf16.msra.mxu0 %v6203
        %6407 = vmatpush.bf16.msra.mxu0 %v6202
        %6408 = vmatpush.bf16.msra.mxu0 %v6201
        %6409 = vmatpush.bf16.msra.mxu0 %v6200
        %6410 = vmatpush.bf16.msra.mxu0 %v6199
        %6411 = vmatpush.bf16.msra.mxu0 %v6198
        %6412 = vmatpush.bf16.msra.mxu0 %v6197
        %6413 = vmatpush.bf16.msra.mxu0 %v6196
        %6414 = vmatmul.bf16.gmra.mxu0 %v5973
        %v6415 = vpop.f32.mrf.mxu0
        %v6416 = vadd.f32 %v6327, %v6415
        %v6417 = vpop.f32.mrf.mxu0
        %v6418 = vadd.f32 %v6329, %v6417
        %6419 = vmatmul.bf16.gmra.mxu0 %v5976
        %v6420 = vpop.f32.mrf.mxu0
        %v6421 = vadd.f32 %v6332, %v6420
        %v6422 = vpop.f32.mrf.mxu0
        %v6423 = vadd.f32 %v6334, %v6422
        %6424 = vmatmul.bf16.gmra.mxu0 %v5979
        %v6425 = vpop.f32.mrf.mxu0
        %v6426 = vadd.f32 %v6337, %v6425
        %v6427 = vpop.f32.mrf.mxu0
        %v6428 = vadd.f32 %v6339, %v6427
        %6429 = vmatmul.bf16.gmra.mxu0 %v5982
        %v6430 = vpop.f32.mrf.mxu0
        %v6431 = vadd.f32 %v6342, %v6430
        %v6432 = vpop.f32.mrf.mxu0
        %v6433 = vadd.f32 %v6344, %v6432
        %6434 = vmatmul.bf16.gmra.mxu0 %v5985
        %v6435 = vpop.f32.mrf.mxu0
        %v6436 = vadd.f32 %v6347, %v6435
        %v6437 = vpop.f32.mrf.mxu0
        %v6438 = vadd.f32 %v6349, %v6437
        %6439 = vmatmul.bf16.gmra.mxu0 %v5988
        %v6440 = vpop.f32.mrf.mxu0
        %v6441 = vadd.f32 %v6352, %v6440
        %v6442 = vpop.f32.mrf.mxu0
        %v6443 = vadd.f32 %v6354, %v6442
        %6444 = vmatmul.bf16.gmra.mxu0 %v5991
        %v6445 = vpop.f32.mrf.mxu0
        %v6446 = vadd.f32 %v6357, %v6445
        %v6447 = vpop.f32.mrf.mxu0
        %v6448 = vadd.f32 %v6359, %v6447
        %6449 = vmatmul.bf16.gmra.mxu0 %v5994
        %v6450 = vpop.f32.mrf.mxu0
        %v6451 = vadd.f32 %v6362, %v6450
        %v6452 = vpop.f32.mrf.mxu0
        %v6453 = vadd.f32 %v6364, %v6452
        %6454 = vmatmul.bf16.gmra.mxu0 %v5997
        %v6455 = vpop.f32.mrf.mxu0
        %v6456 = vadd.f32 %v6367, %v6455
        %v6457 = vpop.f32.mrf.mxu0
        %v6458 = vadd.f32 %v6369, %v6457
        %6459 = vmatmul.bf16.gmra.mxu0 %v6000
        %v6460 = vpop.f32.mrf.mxu0
        %v6461 = vadd.f32 %v6372, %v6460
        %v6462 = vpop.f32.mrf.mxu0
        %v6463 = vadd.f32 %v6374, %v6462
        %6464 = vmatmul.bf16.gmra.mxu0 %v6003
        %v6465 = vpop.f32.mrf.mxu0
        %v6466 = vadd.f32 %v6377, %v6465
        %v6467 = vpop.f32.mrf.mxu0
        %v6468 = vadd.f32 %v6379, %v6467
        %6469 = vmatmul.bf16.gmra.mxu0 %v6006
        %v6470 = vpop.f32.mrf.mxu0
        %v6471 = vadd.f32 %v6382, %v6470
        %v6472 = vpop.f32.mrf.mxu0
        %v6473 = vadd.f32 %v6384, %v6472
        %6474 = vmatmul.bf16.gmra.mxu0 %v6009
        %v6475 = vpop.f32.mrf.mxu0
        %v6476 = vadd.f32 %v6387, %v6475
        %v6477 = vpop.f32.mrf.mxu0
        %v6478 = vadd.f32 %v6389, %v6477
        %6479 = vmatmul.bf16.gmra.mxu0 %v6012
        %v6480 = vpop.f32.mrf.mxu0
        %v6481 = vadd.f32 %v6392, %v6480
        %v6482 = vpop.f32.mrf.mxu0
        %v6483 = vadd.f32 %v6394, %v6482
        %6484 = vmatmul.bf16.gmra.mxu0 %v6015
        %v6485 = vpop.f32.mrf.mxu0
        %v6486 = vadd.f32 %v6397, %v6485
        %v6487 = vpop.f32.mrf.mxu0
        %v6488 = vadd.f32 %v6399, %v6487
        %6489 = vmatmul.bf16.gmra.mxu0 %v6018
        %v6490 = vpop.f32.mrf.mxu0
        %v6491 = vadd.f32 %v6402, %v6490
        %v6492 = vpop.f32.mrf.mxu0
        %v6493 = vadd.f32 %v6404, %v6492
        %6494 = vdwg.mxu0
        %v6495 = vadd.f32 %v5491, %v6416
        %v6496 = vadd.f32 %v5493, %v6418
        %v6497 = vadd.f32 %v5496, %v6421
        %v6498 = vadd.f32 %v5498, %v6423
        %v6499 = vadd.f32 %v5501, %v6426
        %v6500 = vadd.f32 %v5503, %v6428
        %v6501 = vadd.f32 %v5506, %v6431
        %v6502 = vadd.f32 %v5508, %v6433
        %v6503 = vadd.f32 %v5511, %v6436
        %v6504 = vadd.f32 %v5513, %v6438
        %v6505 = vadd.f32 %v5516, %v6441
        %v6506 = vadd.f32 %v5518, %v6443
        %v6507 = vadd.f32 %v5521, %v6446
        %v6508 = vadd.f32 %v5523, %v6448
        %v6509 = vadd.f32 %v5526, %v6451
        %v6510 = vadd.f32 %v5528, %v6453
        %v6511 = vadd.f32 %v5531, %v6456
        %v6512 = vadd.f32 %v5533, %v6458
        %v6513 = vadd.f32 %v5536, %v6461
        %v6514 = vadd.f32 %v5538, %v6463
        %v6515 = vadd.f32 %v5541, %v6466
        %v6516 = vadd.f32 %v5543, %v6468
        %v6517 = vadd.f32 %v5546, %v6471
        %v6518 = vadd.f32 %v5548, %v6473
        %v6519 = vadd.f32 %v5551, %v6476
        %v6520 = vadd.f32 %v5553, %v6478
        %v6521 = vadd.f32 %v5556, %v6481
        %v6522 = vadd.f32 %v5558, %v6483
        %v6523 = vadd.f32 %v5561, %v6486
        %v6524 = vadd.f32 %v5563, %v6488
        %v6525 = vadd.f32 %v5566, %v6491
        %v6526 = vadd.f32 %v5568, %v6493
        %v6527 = vld [vmem:[%s2292] sm:$0xf]
        %v6528 = vld [vmem:[%s2292 + $0x4] sm:$0xf]
        %v6529 = vld [vmem:[%s2292 + $0x8] sm:$0x1]
        %v6530 = vld [vmem:[%s2292 + $0xc] sm:$0xf]
        %v6531 = vld [vmem:[%s2292 + $0x10] sm:$0xf]
        %v6532 = vld [vmem:[%s2292 + $0x14] sm:$0x1]
        %v6533 = vld [vmem:[%s2292 + $0x18] sm:$0xf]
        %v6534 = vld [vmem:[%s2292 + $0x1c] sm:$0xf]
        %v6535 = vld [vmem:[%s2292 + $0x20] sm:$0x1]
        %v6536 = vld [vmem:[%s2292 + $0x24] sm:$0xf]
        %v6537 = vld [vmem:[%s2292 + $0x28] sm:$0xf]
        %v6538 = vld [vmem:[%s2292 + $0x2c] sm:$0x1]
        %v6539 = vld [vmem:[%s2292 + $0x30] sm:$0xf]
        %v6540 = vld [vmem:[%s2292 + $0x34] sm:$0xf]
        %v6541 = vld [vmem:[%s2292 + $0x38] sm:$0x1]
        %v6542 = vld [vmem:[%s2292 + $0x3c] sm:$0xf]
        %v6543 = vld [vmem:[%s2292 + $0x40] sm:$0xf]
        %v6544 = vld [vmem:[%s2292 + $0x44] sm:$0x1]
        %v6545 = vld [vmem:[%s2292 + $0x48] sm:$0xf]
        %v6546 = vld [vmem:[%s2292 + $0x4c] sm:$0xf]
        %v6547 = vld [vmem:[%s2292 + $0x50] sm:$0x1]
        %v6548 = vld [vmem:[%s2292 + $0x54] sm:$0xf]
        %v6549 = vld [vmem:[%s2292 + $0x58] sm:$0xf]
        %v6550 = vld [vmem:[%s2292 + $0x5c] sm:$0x1]
        %v6551 = vld [vmem:[%s2292 + $0x60] sm:$0xf]
        %v6552 = vld [vmem:[%s2292 + $0x64] sm:$0xf]
        %v6553 = vld [vmem:[%s2292 + $0x68] sm:$0x1]
        %v6554 = vld [vmem:[%s2292 + $0x6c] sm:$0xf]
        %v6555 = vld [vmem:[%s2292 + $0x70] sm:$0xf]
        %v6556 = vld [vmem:[%s2292 + $0x74] sm:$0x1]
        %v6557 = vld [vmem:[%s2292 + $0x78] sm:$0xf]
        %v6558 = vld [vmem:[%s2292 + $0x7c] sm:$0xf]
        %v6559 = vld [vmem:[%s2292 + $0x80] sm:$0x1]
        %v6560 = vld [vmem:[%s2292 + $0x84] sm:$0xf]
        %v6561 = vld [vmem:[%s2292 + $0x88] sm:$0xf]
        %v6562 = vld [vmem:[%s2292 + $0x8c] sm:$0x1]
        %v6563 = vld [vmem:[%s2292 + $0x90] sm:$0xf]
        %v6564 = vld [vmem:[%s2292 + $0x94] sm:$0xf]
        %v6565 = vld [vmem:[%s2292 + $0x98] sm:$0x1]
        %v6566 = vld [vmem:[%s2292 + $0x9c] sm:$0xf]
        %v6567 = vld [vmem:[%s2292 + $0xa0] sm:$0xf]
        %v6568 = vld [vmem:[%s2292 + $0xa4] sm:$0x1]
        %v6569 = vld [vmem:[%s2292 + $0xa8] sm:$0xf]
        %v6570 = vld [vmem:[%s2292 + $0xac] sm:$0xf]
        %v6571 = vld [vmem:[%s2292 + $0xb0] sm:$0x1]
        %v6572 = vld [vmem:[%s2292 + $0xb4] sm:$0xf]
        %v6573 = vld [vmem:[%s2292 + $0xb8] sm:$0xf]
        %v6574 = vld [vmem:[%s2292 + $0xbc] sm:$0x1]
        %v6575 = vunpack.c.l.bf16 %v6527
        %v6576 = vunpack.c.l.bf16 %v6528
        %v6577 = vunpack.c.l.bf16 %v6529
        %v6578 = vunpack.c.l.bf16 %v6530
        %v6579 = vunpack.c.l.bf16 %v6531
        %v6580 = vunpack.c.l.bf16 %v6532
        %v6581 = vunpack.c.l.bf16 %v6533
        %v6582 = vunpack.c.l.bf16 %v6534
        %v6583 = vunpack.c.l.bf16 %v6535
        %v6584 = vunpack.c.l.bf16 %v6536
        %v6585 = vunpack.c.l.bf16 %v6537
        %v6586 = vunpack.c.l.bf16 %v6538
        %v6587 = vunpack.c.l.bf16 %v6539
        %v6588 = vunpack.c.l.bf16 %v6540
        %v6589 = vunpack.c.l.bf16 %v6541
        %v6590 = vunpack.c.l.bf16 %v6542
        %v6591 = vunpack.c.l.bf16 %v6543
        %v6592 = vunpack.c.l.bf16 %v6544
        %v6593 = vunpack.c.l.bf16 %v6545
        %v6594 = vunpack.c.l.bf16 %v6546
        %v6595 = vunpack.c.l.bf16 %v6547
        %v6596 = vunpack.c.l.bf16 %v6548
        %v6597 = vunpack.c.l.bf16 %v6549
        %v6598 = vunpack.c.l.bf16 %v6550
        %v6599 = vunpack.c.l.bf16 %v6551
        %v6600 = vunpack.c.l.bf16 %v6552
        %v6601 = vunpack.c.l.bf16 %v6553
        %v6602 = vunpack.c.l.bf16 %v6554
        %v6603 = vunpack.c.l.bf16 %v6555
        %v6604 = vunpack.c.l.bf16 %v6556
        %v6605 = vunpack.c.l.bf16 %v6557
        %v6606 = vunpack.c.l.bf16 %v6558
        %v6607 = vunpack.c.l.bf16 %v6559
        %v6608 = vunpack.c.l.bf16 %v6560
        %v6609 = vunpack.c.l.bf16 %v6561
        %v6610 = vunpack.c.l.bf16 %v6562
        %v6611 = vunpack.c.l.bf16 %v6563
        %v6612 = vunpack.c.l.bf16 %v6564
        %v6613 = vunpack.c.l.bf16 %v6565
        %v6614 = vunpack.c.l.bf16 %v6566
        %v6615 = vunpack.c.l.bf16 %v6567
        %v6616 = vunpack.c.l.bf16 %v6568
        %v6617 = vunpack.c.l.bf16 %v6569
        %v6618 = vunpack.c.l.bf16 %v6570
        %v6619 = vunpack.c.l.bf16 %v6571
        %v6620 = vunpack.c.l.bf16 %v6572
        %v6621 = vunpack.c.l.bf16 %v6573
        %v6622 = vunpack.c.l.bf16 %v6574
        %v6623 = vld [vmem:[%s4] sm:$0x1]
        %v6625 = vperm.slane %v6623, 0
        %v6627 = vadd.f32 %v6495, %v6625
        %v6628 = vadd.f32 %v6496, %v6625
        %v6629 = vadd.f32 %v6497, %v6625
        %v6630 = vadd.f32 %v6498, %v6625
        %v6631 = vadd.f32 %v6499, %v6625
        %v6632 = vadd.f32 %v6500, %v6625
        %v6633 = vadd.f32 %v6501, %v6625
        %v6634 = vadd.f32 %v6502, %v6625
        %v6635 = vadd.f32 %v6503, %v6625
        %v6636 = vadd.f32 %v6504, %v6625
        %v6637 = vadd.f32 %v6505, %v6625
        %v6638 = vadd.f32 %v6506, %v6625
        %v6639 = vadd.f32 %v6507, %v6625
        %v6640 = vadd.f32 %v6508, %v6625
        %v6641 = vadd.f32 %v6509, %v6625
        %v6642 = vadd.f32 %v6510, %v6625
        %v6643 = vadd.f32 %v6511, %v6625
        %v6644 = vadd.f32 %v6512, %v6625
        %v6645 = vadd.f32 %v6513, %v6625
        %v6646 = vadd.f32 %v6514, %v6625
        %v6647 = vadd.f32 %v6515, %v6625
        %v6648 = vadd.f32 %v6516, %v6625
        %v6649 = vadd.f32 %v6517, %v6625
        %v6650 = vadd.f32 %v6518, %v6625
        %v6651 = vadd.f32 %v6519, %v6625
        %v6652 = vadd.f32 %v6520, %v6625
        %v6653 = vadd.f32 %v6521, %v6625
        %v6654 = vadd.f32 %v6522, %v6625
        %v6655 = vadd.f32 %v6523, %v6625
        %v6656 = vadd.f32 %v6524, %v6625
        %v6657 = vadd.f32 %v6525, %v6625
        %v6658 = vadd.f32 %v6526, %v6625
        %vm6707 = vcmask 1046528
        %v6708 = vrot.slane %v6575, 1
        %v6709 = vrot.slane %v6576, 1
        %v6710 = vsel %vm6707, %v6708, %v6709
        %v6711 = vrot.slane %v6577, 1
        %v6712 = vsel %vm6707, %v6709, %v6711
        %v6713 = vrot.slane %v6578, 1
        %v6714 = vrot.slane %v6579, 1
        %v6715 = vsel %vm6707, %v6713, %v6714
        %v6716 = vrot.slane %v6580, 1
        %v6717 = vsel %vm6707, %v6714, %v6716
        %v6718 = vrot.slane %v6581, 1
        %v6719 = vrot.slane %v6582, 1
        %v6720 = vsel %vm6707, %v6718, %v6719
        %v6721 = vrot.slane %v6583, 1
        %v6722 = vsel %vm6707, %v6719, %v6721
        %v6723 = vrot.slane %v6584, 1
        %v6724 = vrot.slane %v6585, 1
        %v6725 = vsel %vm6707, %v6723, %v6724
        %v6726 = vrot.slane %v6586, 1
        %v6727 = vsel %vm6707, %v6724, %v6726
        %v6728 = vrot.slane %v6587, 1
        %v6729 = vrot.slane %v6588, 1
        %v6730 = vsel %vm6707, %v6728, %v6729
        %v6731 = vrot.slane %v6589, 1
        %v6732 = vsel %vm6707, %v6729, %v6731
        %v6733 = vrot.slane %v6590, 1
        %v6734 = vrot.slane %v6591, 1
        %v6735 = vsel %vm6707, %v6733, %v6734
        %v6736 = vrot.slane %v6592, 1
        %v6737 = vsel %vm6707, %v6734, %v6736
        %v6738 = vrot.slane %v6593, 1
        %v6739 = vrot.slane %v6594, 1
        %v6740 = vsel %vm6707, %v6738, %v6739
        %v6741 = vrot.slane %v6595, 1
        %v6742 = vsel %vm6707, %v6739, %v6741
        %v6743 = vrot.slane %v6596, 1
        %v6744 = vrot.slane %v6597, 1
        %v6745 = vsel %vm6707, %v6743, %v6744
        %v6746 = vrot.slane %v6598, 1
        %v6747 = vsel %vm6707, %v6744, %v6746
        %v6748 = vrot.slane %v6599, 1
        %v6749 = vrot.slane %v6600, 1
        %v6750 = vsel %vm6707, %v6748, %v6749
        %v6751 = vrot.slane %v6601, 1
        %v6752 = vsel %vm6707, %v6749, %v6751
        %v6753 = vrot.slane %v6602, 1
        %v6754 = vrot.slane %v6603, 1
        %v6755 = vsel %vm6707, %v6753, %v6754
        %v6756 = vrot.slane %v6604, 1
        %v6757 = vsel %vm6707, %v6754, %v6756
        %v6758 = vrot.slane %v6605, 1
        %v6759 = vrot.slane %v6606, 1
        %v6760 = vsel %vm6707, %v6758, %v6759
        %v6761 = vrot.slane %v6607, 1
        %v6762 = vsel %vm6707, %v6759, %v6761
        %v6763 = vrot.slane %v6608, 1
        %v6764 = vrot.slane %v6609, 1
        %v6765 = vsel %vm6707, %v6763, %v6764
        %v6766 = vrot.slane %v6610, 1
        %v6767 = vsel %vm6707, %v6764, %v6766
        %v6768 = vrot.slane %v6611, 1
        %v6769 = vrot.slane %v6612, 1
        %v6770 = vsel %vm6707, %v6768, %v6769
        %v6771 = vrot.slane %v6613, 1
        %v6772 = vsel %vm6707, %v6769, %v6771
        %v6773 = vrot.slane %v6614, 1
        %v6774 = vrot.slane %v6615, 1
        %v6775 = vsel %vm6707, %v6773, %v6774
        %v6776 = vrot.slane %v6616, 1
        %v6777 = vsel %vm6707, %v6774, %v6776
        %v6778 = vrot.slane %v6617, 1
        %v6779 = vrot.slane %v6618, 1
        %v6780 = vsel %vm6707, %v6778, %v6779
        %v6781 = vrot.slane %v6619, 1
        %v6782 = vsel %vm6707, %v6779, %v6781
        %v6783 = vrot.slane %v6620, 1
        %v6784 = vrot.slane %v6621, 1
        %v6785 = vsel %vm6707, %v6783, %v6784
        %v6786 = vrot.slane %v6622, 1
        %v6787 = vsel %vm6707, %v6784, %v6786
        %v6820 = vadd.f32 %v6627, %v6710
        %v6821 = vadd.f32 %v6628, %v6712
        %v6822 = vadd.f32 %v6629, %v6715
        %v6823 = vadd.f32 %v6630, %v6717
        %v6824 = vadd.f32 %v6631, %v6720
        %v6825 = vadd.f32 %v6632, %v6722
        %v6826 = vadd.f32 %v6633, %v6725
        %v6827 = vadd.f32 %v6634, %v6727
        %v6828 = vadd.f32 %v6635, %v6730
        %v6829 = vadd.f32 %v6636, %v6732
        %v6830 = vadd.f32 %v6637, %v6735
        %v6831 = vadd.f32 %v6638, %v6737
        %v6832 = vadd.f32 %v6639, %v6740
        %v6833 = vadd.f32 %v6640, %v6742
        %v6834 = vadd.f32 %v6641, %v6745
        %v6835 = vadd.f32 %v6642, %v6747
        %v6836 = vadd.f32 %v6643, %v6750
        %v6837 = vadd.f32 %v6644, %v6752
        %v6838 = vadd.f32 %v6645, %v6755
        %v6839 = vadd.f32 %v6646, %v6757
        %v6840 = vadd.f32 %v6647, %v6760
        %v6841 = vadd.f32 %v6648, %v6762
        %v6842 = vadd.f32 %v6649, %v6765
        %v6843 = vadd.f32 %v6650, %v6767
        %v6844 = vadd.f32 %v6651, %v6770
        %v6845 = vadd.f32 %v6652, %v6772
        %v6846 = vadd.f32 %v6653, %v6775
        %v6847 = vadd.f32 %v6654, %v6777
        %v6848 = vadd.f32 %v6655, %v6780
        %v6849 = vadd.f32 %v6656, %v6782
        %v6850 = vadd.f32 %v6657, %v6785
        %v6851 = vadd.f32 %v6658, %v6787
        %v6852 = vmax.f32 %v6820, 0.0
        %v6853 = vmax.f32 %v6821, 0.0
        %v6854 = vmax.f32 %v6822, 0.0
        %v6855 = vmax.f32 %v6823, 0.0
        %v6856 = vmax.f32 %v6824, 0.0
        %v6857 = vmax.f32 %v6825, 0.0
        %v6858 = vmax.f32 %v6826, 0.0
        %v6859 = vmax.f32 %v6827, 0.0
        %v6860 = vmax.f32 %v6828, 0.0
        %v6861 = vmax.f32 %v6829, 0.0
        %v6862 = vmax.f32 %v6830, 0.0
        %v6863 = vmax.f32 %v6831, 0.0
        %v6864 = vmax.f32 %v6832, 0.0
        %v6865 = vmax.f32 %v6833, 0.0
        %v6866 = vmax.f32 %v6834, 0.0
        %v6867 = vmax.f32 %v6835, 0.0
        %v6868 = vmax.f32 %v6836, 0.0
        %v6869 = vmax.f32 %v6837, 0.0
        %v6870 = vmax.f32 %v6838, 0.0
        %v6871 = vmax.f32 %v6839, 0.0
        %v6872 = vmax.f32 %v6840, 0.0
        %v6873 = vmax.f32 %v6841, 0.0
        %v6874 = vmax.f32 %v6842, 0.0
        %v6875 = vmax.f32 %v6843, 0.0
        %v6876 = vmax.f32 %v6844, 0.0
        %v6877 = vmax.f32 %v6845, 0.0
        %v6878 = vmax.f32 %v6846, 0.0
        %v6879 = vmax.f32 %v6847, 0.0
        %v6880 = vmax.f32 %v6848, 0.0
        %v6881 = vmax.f32 %v6849, 0.0
        %v6882 = vmax.f32 %v6850, 0.0
        %v6883 = vmax.f32 %v6851, 0.0
        %v6884 = vpack.c.bf16 %v6852, %v6852
        %v6885 = vpack.c.bf16 %v6853, %v6853
        %v6886 = vpack.c.bf16 %v6854, %v6854
        %v6887 = vpack.c.bf16 %v6855, %v6855
        %v6888 = vpack.c.bf16 %v6856, %v6856
        %v6889 = vpack.c.bf16 %v6857, %v6857
        %v6890 = vpack.c.bf16 %v6858, %v6858
        %v6891 = vpack.c.bf16 %v6859, %v6859
        %v6892 = vpack.c.bf16 %v6860, %v6860
        %v6893 = vpack.c.bf16 %v6861, %v6861
        %v6894 = vpack.c.bf16 %v6862, %v6862
        %v6895 = vpack.c.bf16 %v6863, %v6863
        %v6896 = vpack.c.bf16 %v6864, %v6864
        %v6897 = vpack.c.bf16 %v6865, %v6865
        %v6898 = vpack.c.bf16 %v6866, %v6866
        %v6899 = vpack.c.bf16 %v6867, %v6867
        %v6900 = vpack.c.bf16 %v6868, %v6868
        %v6901 = vpack.c.bf16 %v6869, %v6869
        %v6902 = vpack.c.bf16 %v6870, %v6870
        %v6903 = vpack.c.bf16 %v6871, %v6871
        %v6904 = vpack.c.bf16 %v6872, %v6872
        %v6905 = vpack.c.bf16 %v6873, %v6873
        %v6906 = vpack.c.bf16 %v6874, %v6874
        %v6907 = vpack.c.bf16 %v6875, %v6875
        %v6908 = vpack.c.bf16 %v6876, %v6876
        %v6909 = vpack.c.bf16 %v6877, %v6877
        %v6910 = vpack.c.bf16 %v6878, %v6878
        %v6911 = vpack.c.bf16 %v6879, %v6879
        %v6912 = vpack.c.bf16 %v6880, %v6880
        %v6913 = vpack.c.bf16 %v6881, %v6881
        %v6914 = vpack.c.bf16 %v6882, %v6882
        %v6915 = vpack.c.bf16 %v6883, %v6883
        %6916 = vst [vmem:[%s248] sm:$0xf] %v6884
        %6917 = vst [vmem:[%s248 + $0x4] sm:$0xf] %v6885
        %6918 = vst [vmem:[%s248 + $0x8] sm:$0xf] %v6886
        %6919 = vst [vmem:[%s248 + $0xc] sm:$0xf] %v6887
        %6920 = vst [vmem:[%s248 + $0x10] sm:$0xf] %v6888
        %6921 = vst [vmem:[%s248 + $0x14] sm:$0xf] %v6889
        %6922 = vst [vmem:[%s248 + $0x18] sm:$0xf] %v6890
        %6923 = vst [vmem:[%s248 + $0x1c] sm:$0xf] %v6891
        %6924 = vst [vmem:[%s248 + $0x20] sm:$0xf] %v6892
        %6925 = vst [vmem:[%s248 + $0x24] sm:$0xf] %v6893
        %6926 = vst [vmem:[%s248 + $0x28] sm:$0xf] %v6894
        %6927 = vst [vmem:[%s248 + $0x2c] sm:$0xf] %v6895
        %6928 = vst [vmem:[%s248 + $0x30] sm:$0xf] %v6896
        %6929 = vst [vmem:[%s248 + $0x34] sm:$0xf] %v6897
        %6930 = vst [vmem:[%s248 + $0x38] sm:$0xf] %v6898
        %6931 = vst [vmem:[%s248 + $0x3c] sm:$0xf] %v6899
        %6932 = vst [vmem:[%s248 + $0x40] sm:$0xf] %v6900
        %6933 = vst [vmem:[%s248 + $0x44] sm:$0xf] %v6901
        %6934 = vst [vmem:[%s248 + $0x48] sm:$0xf] %v6902
        %6935 = vst [vmem:[%s248 + $0x4c] sm:$0xf] %v6903
        %6936 = vst [vmem:[%s248 + $0x50] sm:$0xf] %v6904
        %6937 = vst [vmem:[%s248 + $0x54] sm:$0xf] %v6905
        %6938 = vst [vmem:[%s248 + $0x58] sm:$0xf] %v6906
        %6939 = vst [vmem:[%s248 + $0x5c] sm:$0xf] %v6907
        %6940 = vst [vmem:[%s248 + $0x60] sm:$0xf] %v6908
        %6941 = vst [vmem:[%s248 + $0x64] sm:$0xf] %v6909
        %6942 = vst [vmem:[%s248 + $0x68] sm:$0xf] %v6910
        %6943 = vst [vmem:[%s248 + $0x6c] sm:$0xf] %v6911
        %6944 = vst [vmem:[%s248 + $0x70] sm:$0xf] %v6912
        %6945 = vst [vmem:[%s248 + $0x74] sm:$0xf] %v6913
        %6946 = vst [vmem:[%s248 + $0x78] sm:$0xf] %v6914
        %6947 = vst [vmem:[%s248 + $0x7c] sm:$0xf] %v6915
        %s6948 = sand.u32 %s152, 1
        %s6949 = scalar_lea.sflag [#allocation5], %s6948
        %s6950 = sand.u32 %s152, 1
        %s6951 = smul.addr %s6950, 128
        %s6952 = scalar_lea.vmem [#allocation6], %s6951
        // Predicated region
        $region53: #{tpu_custom_call.1} parent=39 // pred_check
          %p6953 = pneg %p162
        $region54: #{tpu_custom_call.1} parent=39 // pred_check_branch
          %6955 = sbr.rel (%p6953) target = $region56
        $region55: #{tpu_custom_call.1} parent=39 // pred_region
          %s6956 = smul.u32 16, %s25
          %6958 = vsyncadd %s6949, 0
          %s6959 = smul.addr %s6956, 2
          %s6960 = smul.addr %s24, 32
          %s6961 = sadd.s32 %s6959, %s6960
          %s6962 = smul.addr %s6961, 4
          %s6963 = scalar_lea.hbm %s5, %s6962
          %s6964 = sshll.u32 %s6952, 4
          %s6965 = int_to_ptr.vmem [resolvable:$true] %s6964
          %s6966 = sshll.u32 %s6963, 4
          %s6967 = int_to_ptr.hbm [resolvable:$true] %s6966
          %6972 = dma.vmem_to_hbm [thread:$0]  %s6965, 2048, %s6967, %s6949, 64, 64, 4
        $region56: #{tpu_custom_call.1} parent=39 // pred_fallthru
          _
      $region40: #{tpu_custom_call.1} parent=5 // pred_fallthru
        _
      %p6973 = scmp.le.s32.totalorder 2, %s15
      // Predicated region
      $region57: #{tpu_custom_call.1} parent=5 // pred_check
        %p6974 = pneg %p6973
      $region58: #{tpu_custom_call.1} parent=5 // pred_check_branch
        %6976 = sbr.rel (%p6974) target = $region60
      $region59: #{tpu_custom_call.1} parent=5 // pred_region
        %s6977 = ssub.s32 %s15, 2
        // Predicated region
        $region61: #{tpu_custom_call.1} parent=59 // pred_check
          %p6978 = pneg %p168
        $region62: #{tpu_custom_call.1} parent=59 // pred_check_branch
          %6980 = sbr.rel (%p6978) target = $region64
        $region63: #{tpu_custom_call.1} parent=59 // pred_region
          %s6981 = sand.u32 %s153, 1
          %s6982 = scalar_lea.sflag [#allocation5], %s6981
          %s6983 = sand.u32 %s153, 1
          %s6984 = smul.addr %s6983, 128
          %s6985 = scalar_lea.vmem [#allocation6], %s6984
          %6987 = dma.done %s6982, 2048
        $region64: #{tpu_custom_call.1} parent=59 // pred_fallthru
          _
      $region60: #{tpu_custom_call.1} parent=5 // pred_fallthru
        _
    $region6: #{tpu_custom_call.1} parent=1 // loop_footer
      %s19 = sadd.s32 1, %s15
    $region7: #{tpu_custom_call.1} parent=1 // loop_footer_branch
      %14 = sbr.rel target = $region3
    $region8: #{tpu_custom_call.1} parent=1 // loop_exit
      _
    %6988 = vsyncpa [#allocation4], 1
    %s6989 = scalar_lea.sflag [#allocation4], 1
    %6990 = vsyncpa %s6989, 1
    %6991 = vsyncpa [#allocation5], 1
    %s6992 = scalar_lea.sflag [#allocation5], 1
    %6993 = vsyncpa %s6992, 1

</llo_original>
